<compile_context>
chip_gen: v7x
topology: tpu7x:2x2x1
jax: 0.10.0
libtpu: 0.0.40
codegen_flags: <defaults>
</compile_context>

<pallas_src>
import functools

import jax
import jax.numpy as jnp
from jax.experimental import pallas as pl
from jax.experimental.pallas import tpu as pltpu

STATE_SIZE = 17
ACTION_SIZE = 6
IN_SIZE = STATE_SIZE + ACTION_SIZE   # 23
HIDDEN_SIZE = 400
HPAD = 512                           # lane-aligned per-tower segment in fused layer 1
OUT_PAD = 128                        # lane-dense output slab: v1 -> lane 0, v2 -> lane 1


def _round_up(n, m):
    return ((n + m - 1) // m) * m


def critic_kernel(x_ref, u_ref,
                  w1x_ref, w1u_ref, b1_ref,
                  w2a_ref, b2a_ref, w2b_ref, b2b_ref,
                  wva_ref, wvb_ref, bv_ref,
                  o_ref):
    cdt = w1x_ref.dtype  # compute dtype (bf16 default, f32 optional)

    # Inputs stream in as f32; cast in-kernel (cheaper than an extra XLA pass).
    # TODO(synk): if states/actions are unnormalized/large-magnitude, keep this
    # layer-1 input in f32 (weights_dtype=jnp.float32) to avoid bf16 input loss.
    xv = x_ref[...].astype(cdt)   # (TB, 17)
    uv = u_ref[...].astype(cdt)   # (TB, 6)

    # ---- Fused layer 1 for BOTH towers, packed along N into (TB, 2*HPAD).
    # Tower A occupies cols [0:400), tower B cols [512:912); padding cols are 0.
    pre1 = (jnp.dot(xv, w1x_ref[...], preferred_element_type=jnp.float32)
            + jnp.dot(uv, w1u_ref[...], preferred_element_type=jnp.float32))
    h1 = jnp.tanh(pre1.astype(cdt) + b1_ref[...])          # bias+tanh in cdt

    hA = h1[:, 0:HIDDEN_SIZE]                # (TB, 400), lane-aligned start 0
    hB = h1[:, HPAD:HPAD + HIDDEN_SIZE]      # (TB, 400), lane-aligned start 512

    # ---- Layer 2 per tower: Linear(400->400) + tanh (f32 accumulate).
    h2A = jnp.tanh(
        jnp.dot(hA, w2a_ref[...], preferred_element_type=jnp.float32).astype(cdt)
        + b2a_ref[...])
    h2B = jnp.tanh(
        jnp.dot(hB, w2b_ref[...], preferred_element_type=jnp.float32).astype(cdt)
        + b2b_ref[...])

    # ---- Value heads. wva populates only lane 0, wvb only lane 1, so summing
    # packs (v1, v2) into one lane-dense (TB, 128) slab. No final tanh.
    q = (jnp.dot(h2A, wva_ref[...], preferred_element_type=jnp.float32)
         + jnp.dot(h2B, wvb_ref[...], preferred_element_type=jnp.float32)
         + bv_ref[...])
    o_ref[...] = q.astype(o_ref.dtype)


def _choose_tile(B, block_b, sub):
    """Batch tile: sublane-aligned; >=2 grid steps for B>256 (v7x megacore)."""
    if B <= 256:
        return _round_up(B, sub)
    return min(block_b, _round_up(pl.cdiv(B, 2), 256))


@functools.partial(jax.jit, static_argnames=("block_b", "weights_dtype"))
def critic_forward(x, u, params, *, block_b=1024, weights_dtype=jnp.bfloat16):
    """x: (B, 17), u: (B, 6)  ->  (v1, v2), each (B, 1) float32."""
    w1a, b1a, w2a, b2a, wv1, bv1, w1b, b1b, w2b, b2b, wv2, bv2 = params
    B = x.shape[0]
    cdt = weights_dtype
    out_dtype = jnp.bfloat16 if cdt == jnp.bfloat16 else jnp.float32

    # ---- Pack layer-1 weights of both towers along N (2*HPAD = 1024 lanes),
    # split along K into the state part (17 rows) and action part (6 rows) so
    # the kernel never needs a concatenated [x, u] stream.
    def pack_l1(rows):
        p = jnp.zeros((rows.stop - rows.start, 2 * HPAD), jnp.float32)
        p = p.at[:, 0:HIDDEN_SIZE].set(w1a[rows, :])
        p = p.at[:, HPAD:HPAD + HIDDEN_SIZE].set(w1b[rows, :])
        return p

    w1x = pack_l1(slice(0, STATE_SIZE))                      # (17, 1024)
    w1u = pack_l1(slice(STATE_SIZE, IN_SIZE))                # (6, 1024)
    b1p = (jnp.zeros((1, 2 * HPAD), jnp.float32)
           .at[:, 0:HIDDEN_SIZE].set(b1a)
           .at[:, HPAD:HPAD + HIDDEN_SIZE].set(b1b))

    # Pad the two 1-wide value heads into lane-dense (400, 128) slabs.
    wva = jnp.zeros((HIDDEN_SIZE, OUT_PAD), jnp.float32).at[:, 0].set(wv1[:, 0])
    wvb = jnp.zeros((HIDDEN_SIZE, OUT_PAD), jnp.float32).at[:, 1].set(wv2[:, 0])
    bv = (jnp.zeros((1, OUT_PAD), jnp.float32)
          .at[0, 0].set(bv1[0, 0])
          .at[0, 1].set(bv2[0, 0]))

    cast = lambda a: a.astype(cdt)
    w1x_, w1u_, b1p_ = cast(w1x), cast(w1u), cast(b1p)
    w2a_, b2a_ = cast(w2a), cast(b2a)
    w2b_, b2b_ = cast(w2b), cast(b2b)
    wva_, wvb_ = cast(wva), cast(wvb)

    # ---- Tiling: sublane tile 16 for bf16, 8 for f32; weights stay resident.
    sub = 16 if cdt == jnp.bfloat16 else 8
    tb = _choose_tile(B, block_b, sub)
    nb = pl.cdiv(B, tb)

    x_spec = pl.BlockSpec((tb, STATE_SIZE), lambda i: (i, 0))
    u_spec = pl.BlockSpec((tb, ACTION_SIZE), lambda i: (i, 0))
    out_spec = pl.BlockSpec((tb, OUT_PAD), lambda i: (i, 0))
    full = lambda a: pl.BlockSpec(a.shape, lambda i: (0, 0))

    w_bytes = jnp.dtype(cdt).itemsize
    out_bytes = jnp.dtype(out_dtype).itemsize
    weight_arrs = (w1x_, w1u_, b1p_, w2a_, b2a_, w2b_, b2b_, wva_, wvb_)
    cost = pl.CostEstimate(
        flops=2 * B * (IN_SIZE * 2 * HPAD
                       + 2 * HIDDEN_SIZE * HIDDEN_SIZE
                       + 2 * HIDDEN_SIZE * OUT_PAD),
        transcendentals=B * (2 * HPAD + 2 * HIDDEN_SIZE),
        bytes_accessed=(B * (IN_SIZE * 4 + OUT_PAD * out_bytes)
                        + sum(int(a.size) * w_bytes for a in weight_arrs)
                        + int(bv.size) * 4),
    )

    out = pl.pallas_call(
        critic_kernel,
        out_shape=jax.ShapeDtypeStruct((B, OUT_PAD), out_dtype),
        grid=(nb,),
        in_specs=[
            x_spec, u_spec,
            full(w1x_), full(w1u_), full(b1p_),
            full(w2a_), full(b2a_), full(w2b_), full(b2b_),
            full(wva_), full(wvb_), full(bv),
        ],
        out_specs=out_spec,
        compiler_params=pltpu.CompilerParams(
            dimension_semantics=("parallel",),   # shard batch tiles across v7x TCs
            vmem_limit_bytes=32 << 20,
        ),
        cost_estimate=cost,
    )(x, u, w1x_, w1u_, b1p_, w2a_, b2a_, w2b_, b2b_, wva_, wvb_, bv)

    v1 = out[:, 0:1].astype(jnp.float32)
    v2 = out[:, 1:2].astype(jnp.float32)
    return v1, v2


def init_params(key):
    """Mimics PyTorch Linear default init; weights stored as (in, out)."""
    def linear_init(key, fan_in, fan_out):
        kw, kb = jax.random.split(key)
        bound = fan_in ** -0.5
        w = jax.random.uniform(kw, (fan_in, fan_out), jnp.float32, -bound, bound)
        b = jax.random.uniform(kb, (1, fan_out), jnp.float32, -bound, bound)
        return w, b

    keys = jax.random.split(key, 6)
    w1a, b1a = linear_init(keys[0], IN_SIZE, HIDDEN_SIZE)
    w2a, b2a = linear_init(keys[1], HIDDEN_SIZE, HIDDEN_SIZE)
    wv1, bv1 = linear_init(keys[2], HIDDEN_SIZE, 1)
    w1b, b1b = linear_init(keys[3], IN_SIZE, HIDDEN_SIZE)
    w2b, b2b = linear_init(keys[4], HIDDEN_SIZE, HIDDEN_SIZE)
    wv2, bv2 = linear_init(keys[5], HIDDEN_SIZE, 1)
    return (w1a, b1a, w2a, b2a, wv1, bv1, w1b, b1b, w2b, b2b, wv2, bv2)


def critic_ref(x, u, params):
    """Pure-JAX reference matching the PyTorch Critic.forward."""
    w1a, b1a, w2a, b2a, wv1, bv1, w1b, b1b, w2b, b2b, wv2, bv2 = params
    xu = jnp.concatenate([x, u], axis=1)
    h1 = jnp.tanh(xu @ w1a + b1a)
    h1 = jnp.tanh(h1 @ w2a + b2a)
    v1 = h1 @ wv1 + bv1
    h2 = jnp.tanh(xu @ w1b + b1b)
    h2 = jnp.tanh(h2 @ w2b + b2b)
    v2 = h2 @ wv2 + bv2
    return v1, v2


if __name__ == "__main__":
    key = jax.random.PRNGKey(0)
    kp, kx, ku = jax.random.split(key, 3)

    params = init_params(kp)
    batch = 64
    x = jax.random.normal(kx, (batch, STATE_SIZE), jnp.float32)
    u = jax.random.normal(ku, (batch, ACTION_SIZE), jnp.float32)

    r1, r2 = critic_ref(x, u, params)

    # Default path: bf16 weights/activations, f32 MXU accumulation.
    v1, v2 = critic_forward(x, u, params)
    v1, v2 = jax.block_until_ready((v1, v2))
    assert v1.shape == (batch, 1) and v2.shape == (batch, 1)
    assert jnp.allclose(v1, r1, atol=1e-1, rtol=1e-1), "Q1 bf16 mismatch vs reference"
    assert jnp.allclose(v2, r2, atol=1e-1, rtol=1e-1), "Q2 bf16 mismatch vs reference"

    # f32 path (tight tolerance; also the fallback for unnormalized inputs).
    v1f, v2f = critic_forward(x, u, params, weights_dtype=jnp.float32)
    v1f, v2f = jax.block_until_ready((v1f, v2f))
    assert jnp.allclose(v1f, r1, atol=1e-4, rtol=1e-4), "Q1 f32 mismatch vs reference"
    assert jnp.allclose(v2f, r2, atol=1e-4, rtol=1e-4), "Q2 f32 mismatch vs reference"

    print("KERNEL_OK")
</pallas_src>

<mosaic_0001>
module attributes {stable_mosaic.version = 11 : i64} {
  func.func @critic_kernel(%arg0: i32, %arg1: memref<64x17xf32, #tpu.memory_space<vmem>>, %arg2: memref<64x6xf32, #tpu.memory_space<vmem>>, %arg3: memref<17x1024xbf16, #tpu.memory_space<vmem>>, %arg4: memref<6x1024xbf16, #tpu.memory_space<vmem>>, %arg5: memref<1x1024xbf16, #tpu.memory_space<vmem>>, %arg6: memref<400x400xbf16, #tpu.memory_space<vmem>>, %arg7: memref<1x400xbf16, #tpu.memory_space<vmem>>, %arg8: memref<400x400xbf16, #tpu.memory_space<vmem>>, %arg9: memref<1x400xbf16, #tpu.memory_space<vmem>>, %arg10: memref<400x128xbf16, #tpu.memory_space<vmem>>, %arg11: memref<400x128xbf16, #tpu.memory_space<vmem>>, %arg12: memref<1x128xf32, #tpu.memory_space<vmem>>, %arg13: memref<64x128xbf16, #tpu.memory_space<vmem>>) attributes {dimension_semantics = [#tpu.dimension_semantics<parallel>], iteration_bounds = array<i64: 1>, scalar_prefetch = 0 : i64, scratch_operands = 0 : i64, tpu.core_type = #tpu.core_type<tc>, window_params = [{transform_indices = @transform_0, window_bounds = array<i64: 64, 17>}, {transform_indices = @transform_1, window_bounds = array<i64: 64, 6>}, {pipeline_mode = #tpu.pipeline_mode<synchronous>, transform_indices = @transform_2, window_bounds = array<i64: 17, 1024>}, {pipeline_mode = #tpu.pipeline_mode<synchronous>, transform_indices = @transform_3, window_bounds = array<i64: 6, 1024>}, {pipeline_mode = #tpu.pipeline_mode<synchronous>, transform_indices = @transform_4, window_bounds = array<i64: 1, 1024>}, {pipeline_mode = #tpu.pipeline_mode<synchronous>, transform_indices = @transform_5, window_bounds = array<i64: 400, 400>}, {pipeline_mode = #tpu.pipeline_mode<synchronous>, transform_indices = @transform_6, window_bounds = array<i64: 1, 400>}, {pipeline_mode = #tpu.pipeline_mode<synchronous>, transform_indices = @transform_7, window_bounds = array<i64: 400, 400>}, {pipeline_mode = #tpu.pipeline_mode<synchronous>, transform_indices = @transform_8, window_bounds = array<i64: 1, 400>}, {pipeline_mode = #tpu.pipeline_mode<synchronous>, transform_indices = @transform_9, window_bounds = array<i64: 400, 128>}, {pipeline_mode = #tpu.pipeline_mode<synchronous>, transform_indices = @transform_10, window_bounds = array<i64: 400, 128>}, {pipeline_mode = #tpu.pipeline_mode<synchronous>, transform_indices = @transform_11, window_bounds = array<i64: 1, 128>}, {transform_indices = @transform_12, window_bounds = array<i64: 64, 128>}]} {
    %c0 = arith.constant 0 : index
    %c0_0 = arith.constant 0 : index
    %0 = vector.load %arg1[%c0, %c0_0] : memref<64x17xf32, #tpu.memory_space<vmem>>, vector<64x17xf32>
    %1 = arith.truncf %0 : vector<64x17xf32> to vector<64x17xbf16>
    %c0_1 = arith.constant 0 : index
    %c0_2 = arith.constant 0 : index
    %2 = vector.load %arg2[%c0_1, %c0_2] : memref<64x6xf32, #tpu.memory_space<vmem>>, vector<64x6xf32>
    %3 = arith.truncf %2 : vector<64x6xf32> to vector<64x6xbf16>
    %c0_3 = arith.constant 0 : index
    %c0_4 = arith.constant 0 : index
    %4 = vector.load %arg3[%c0_3, %c0_4] : memref<17x1024xbf16, #tpu.memory_space<vmem>>, vector<17x1024xbf16>
    %cst = arith.constant dense<0.000000e+00> : vector<64x1024xf32>
    %5 = tpu.matmul %1, %4, %cst {dimension_numbers = #tpu.dot_dimension_numbers<[1], [0], [0], [1], [0, 0, 1, 1], [], []>} : vector<64x17xbf16>, vector<17x1024xbf16>, vector<64x1024xf32> -> vector<64x1024xf32>
    %c0_5 = arith.constant 0 : index
    %c0_6 = arith.constant 0 : index
    %6 = vector.load %arg4[%c0_5, %c0_6] : memref<6x1024xbf16, #tpu.memory_space<vmem>>, vector<6x1024xbf16>
    %cst_7 = arith.constant dense<0.000000e+00> : vector<64x1024xf32>
    %7 = tpu.matmul %3, %6, %cst_7 {dimension_numbers = #tpu.dot_dimension_numbers<[1], [0], [0], [1], [0, 0, 1, 1], [], []>} : vector<64x6xbf16>, vector<6x1024xbf16>, vector<64x1024xf32> -> vector<64x1024xf32>
    %8 = arith.addf %5, %7 : vector<64x1024xf32>
    %9 = arith.truncf %8 : vector<64x1024xf32> to vector<64x1024xbf16>
    %c0_8 = arith.constant 0 : index
    %c0_9 = arith.constant 0 : index
    %10 = vector.load %arg5[%c0_8, %c0_9] : memref<1x1024xbf16, #tpu.memory_space<vmem>>, vector<1x1024xbf16>
    %11 = vector.broadcast %10 : vector<1x1024xbf16> to vector<64x1024xbf16>
    %12 = arith.addf %9, %11 : vector<64x1024xbf16>
    %13 = math.tanh %12 : vector<64x1024xbf16>
    %14 = vector.extract_strided_slice %13 {offsets = [0, 0], sizes = [64, 400], strides = [1, 1]} : vector<64x1024xbf16> to vector<64x400xbf16>
    %15 = vector.extract_strided_slice %13 {offsets = [0, 512], sizes = [64, 400], strides = [1, 1]} : vector<64x1024xbf16> to vector<64x400xbf16>
    %c0_10 = arith.constant 0 : index
    %c0_11 = arith.constant 0 : index
    %16 = vector.load %arg6[%c0_10, %c0_11] : memref<400x400xbf16, #tpu.memory_space<vmem>>, vector<400x400xbf16>
    %cst_12 = arith.constant dense<0.000000e+00> : vector<64x400xf32>
    %17 = tpu.matmul %14, %16, %cst_12 {dimension_numbers = #tpu.dot_dimension_numbers<[1], [0], [0], [1], [0, 0, 1, 1], [], []>} : vector<64x400xbf16>, vector<400x400xbf16>, vector<64x400xf32> -> vector<64x400xf32>
    %18 = arith.truncf %17 : vector<64x400xf32> to vector<64x400xbf16>
    %c0_13 = arith.constant 0 : index
    %c0_14 = arith.constant 0 : index
    %19 = vector.load %arg7[%c0_13, %c0_14] : memref<1x400xbf16, #tpu.memory_space<vmem>>, vector<1x400xbf16>
    %20 = vector.broadcast %19 : vector<1x400xbf16> to vector<64x400xbf16>
    %21 = arith.addf %18, %20 : vector<64x400xbf16>
    %22 = math.tanh %21 : vector<64x400xbf16>
    %c0_15 = arith.constant 0 : index
    %c0_16 = arith.constant 0 : index
    %23 = vector.load %arg8[%c0_15, %c0_16] : memref<400x400xbf16, #tpu.memory_space<vmem>>, vector<400x400xbf16>
    %cst_17 = arith.constant dense<0.000000e+00> : vector<64x400xf32>
    %24 = tpu.matmul %15, %23, %cst_17 {dimension_numbers = #tpu.dot_dimension_numbers<[1], [0], [0], [1], [0, 0, 1, 1], [], []>} : vector<64x400xbf16>, vector<400x400xbf16>, vector<64x400xf32> -> vector<64x400xf32>
    %25 = arith.truncf %24 : vector<64x400xf32> to vector<64x400xbf16>
    %c0_18 = arith.constant 0 : index
    %c0_19 = arith.constant 0 : index
    %26 = vector.load %arg9[%c0_18, %c0_19] : memref<1x400xbf16, #tpu.memory_space<vmem>>, vector<1x400xbf16>
    %27 = vector.broadcast %26 : vector<1x400xbf16> to vector<64x400xbf16>
    %28 = arith.addf %25, %27 : vector<64x400xbf16>
    %29 = math.tanh %28 : vector<64x400xbf16>
    %c0_20 = arith.constant 0 : index
    %c0_21 = arith.constant 0 : index
    %30 = vector.load %arg10[%c0_20, %c0_21] : memref<400x128xbf16, #tpu.memory_space<vmem>>, vector<400x128xbf16>
    %cst_22 = arith.constant dense<0.000000e+00> : vector<64x128xf32>
    %31 = tpu.matmul %22, %30, %cst_22 {dimension_numbers = #tpu.dot_dimension_numbers<[1], [0], [0], [1], [0, 0, 1, 1], [], []>} : vector<64x400xbf16>, vector<400x128xbf16>, vector<64x128xf32> -> vector<64x128xf32>
    %c0_23 = arith.constant 0 : index
    %c0_24 = arith.constant 0 : index
    %32 = vector.load %arg11[%c0_23, %c0_24] : memref<400x128xbf16, #tpu.memory_space<vmem>>, vector<400x128xbf16>
    %cst_25 = arith.constant dense<0.000000e+00> : vector<64x128xf32>
    %33 = tpu.matmul %29, %32, %cst_25 {dimension_numbers = #tpu.dot_dimension_numbers<[1], [0], [0], [1], [0, 0, 1, 1], [], []>} : vector<64x400xbf16>, vector<400x128xbf16>, vector<64x128xf32> -> vector<64x128xf32>
    %34 = arith.addf %31, %33 : vector<64x128xf32>
    %c0_26 = arith.constant 0 : index
    %c0_27 = arith.constant 0 : index
    %35 = vector.load %arg12[%c0_26, %c0_27] : memref<1x128xf32, #tpu.memory_space<vmem>>, vector<1x128xf32>
    %36 = vector.broadcast %35 : vector<1x128xf32> to vector<64x128xf32>
    %37 = arith.addf %34, %36 : vector<64x128xf32>
    %38 = arith.truncf %37 : vector<64x128xf32> to vector<64x128xbf16>
    %c0_28 = arith.constant 0 : index
    %c0_29 = arith.constant 0 : index
    %39 = vector.load %arg13[%c0_28, %c0_29] : memref<64x128xbf16, #tpu.memory_space<vmem>>, vector<64x128xbf16>
    tpu.vector_store %arg13[%c0_28, %c0_29], %38 {strides = array<i32>} : memref<64x128xbf16, #tpu.memory_space<vmem>>, vector<64x128xbf16>,
    return
  }
  func.func @transform_0(%arg0: i32) -> (i32, i32) {
    %c0_i32 = arith.constant 0 : i32
    %c0_i32_0 = arith.constant 0 : i32
    return %arg0, %c0_i32 : i32, i32
  }
  func.func @transform_1(%arg0: i32) -> (i32, i32) {
    %c0_i32 = arith.constant 0 : i32
    %c0_i32_0 = arith.constant 0 : i32
    return %arg0, %c0_i32 : i32, i32
  }
  func.func @transform_2(%arg0: i32) -> (i32, i32) {
    %c0_i32 = arith.constant 0 : i32
    %c0_i32_0 = arith.constant 0 : i32
    %c0_i32_1 = arith.constant 0 : i32
    return %c0_i32, %c0_i32_0 : i32, i32
  }
  func.func @transform_3(%arg0: i32) -> (i32, i32) {
    %c0_i32 = arith.constant 0 : i32
    %c0_i32_0 = arith.constant 0 : i32
    %c0_i32_1 = arith.constant 0 : i32
    return %c0_i32, %c0_i32_0 : i32, i32
  }
  func.func @transform_4(%arg0: i32) -> (i32, i32) {
    %c0_i32 = arith.constant 0 : i32
    %c0_i32_0 = arith.constant 0 : i32
    %c0_i32_1 = arith.constant 0 : i32
    return %c0_i32, %c0_i32_0 : i32, i32
  }
  func.func @transform_5(%arg0: i32) -> (i32, i32) {
    %c0_i32 = arith.constant 0 : i32
    %c0_i32_0 = arith.constant 0 : i32
    %c0_i32_1 = arith.constant 0 : i32
    return %c0_i32, %c0_i32_0 : i32, i32
  }
  func.func @transform_6(%arg0: i32) -> (i32, i32) {
    %c0_i32 = arith.constant 0 : i32
    %c0_i32_0 = arith.constant 0 : i32
    %c0_i32_1 = arith.constant 0 : i32
    return %c0_i32, %c0_i32_0 : i32, i32
  }
  func.func @transform_7(%arg0: i32) -> (i32, i32) {
    %c0_i32 = arith.constant 0 : i32
    %c0_i32_0 = arith.constant 0 : i32
    %c0_i32_1 = arith.constant 0 : i32
    return %c0_i32, %c0_i32_0 : i32, i32
  }
  func.func @transform_8(%arg0: i32) -> (i32, i32) {
    %c0_i32 = arith.constant 0 : i32
    %c0_i32_0 = arith.constant 0 : i32
    %c0_i32_1 = arith.constant 0 : i32
    return %c0_i32, %c0_i32_0 : i32, i32
  }
  func.func @transform_9(%arg0: i32) -> (i32, i32) {
    %c0_i32 = arith.constant 0 : i32
    %c0_i32_0 = arith.constant 0 : i32
    %c0_i32_1 = arith.constant 0 : i32
    return %c0_i32, %c0_i32_0 : i32, i32
  }
  func.func @transform_10(%arg0: i32) -> (i32, i32) {
    %c0_i32 = arith.constant 0 : i32
    %c0_i32_0 = arith.constant 0 : i32
    %c0_i32_1 = arith.constant 0 : i32
    return %c0_i32, %c0_i32_0 : i32, i32
  }
  func.func @transform_11(%arg0: i32) -> (i32, i32) {
    %c0_i32 = arith.constant 0 : i32
    %c0_i32_0 = arith.constant 0 : i32
    %c0_i32_1 = arith.constant 0 : i32
    return %c0_i32, %c0_i32_0 : i32, i32
  }
  func.func @transform_12(%arg0: i32) -> (i32, i32) {
    %c0_i32 = arith.constant 0 : i32
    %c0_i32_0 = arith.constant 0 : i32
    return %arg0, %c0_i32 : i32, i32
  }
}

</mosaic_0001>

<llo_original>
// kernel: critic_forward.1
$region0: #{critic_forward.1}
  #allocation0 [shape = 'u32[]', space=smem, size = 0x4, offset = 0x4, fixed_abs, tag = 'smem constant byte address 0x4 - core index']
  #allocation1 [shape = 'u32[144,128]{1,0:T(1,128)}', space=vmem, size = 0x12000, scoped, tag = 'internal scratch']
  %s0 = inlined_call_operand.vmem [shape: f32[64,17], index: 0, kind: input, shape index: {}]
  %s1 = inlined_call_operand.vmem [shape: f32[64,6], index: 1, kind: input, shape index: {}]
  %s2 = inlined_call_operand.vmem [shape: bf16[17,1024], index: 2, kind: input, shape index: {}]
  %s3 = inlined_call_operand.vmem [shape: bf16[6,1024], index: 3, kind: input, shape index: {}]
  %s4 = inlined_call_operand.vmem [shape: bf16[1,1024], index: 4, kind: input, shape index: {}]
  %s5 = inlined_call_operand.vmem [shape: bf16[400,400], index: 5, kind: input, shape index: {}]
  %s6 = inlined_call_operand.vmem [shape: bf16[1,400], index: 6, kind: input, shape index: {}]
  %s7 = inlined_call_operand.vmem [shape: bf16[400,400], index: 7, kind: input, shape index: {}]
  %s8 = inlined_call_operand.vmem [shape: bf16[1,400], index: 8, kind: input, shape index: {}]
  %s9 = inlined_call_operand.vmem [shape: bf16[400,128], index: 9, kind: input, shape index: {}]
  %s10 = inlined_call_operand.vmem [shape: bf16[400,128], index: 10, kind: input, shape index: {}]
  %s11 = inlined_call_operand.vmem [shape: f32[1,128], index: 11, kind: input, shape index: {}]
  %s12 = inlined_call_operand.vmem [shape: bf16[64,128], index: 12, kind: output, shape index: {}]
  %s13 = sld [smem:[#allocation0]]
  $region58: #{critic_forward.1} parent=0
    _
  %s15 = ssub.s32 1, %s13
  %s16 = scalar_select 0, %s15, %s13
  // Predicated region
  $region2: #{critic_forward.1} parent=0 // pred_check
    _
  $region3: #{critic_forward.1} parent=0 // pred_check_branch
    %18 = sbr.rel (0) target = $region5
  $region4: #{critic_forward.1} parent=0 // pred_region
    _
  $region5: #{critic_forward.1} parent=0 // pred_fallthru
    _
  // Predicated region
  $region6: #{critic_forward.1} parent=0 // pred_check
    _
  $region7: #{critic_forward.1} parent=0 // pred_check_branch
    %20 = sbr.rel (0) target = $region9
  $region8: #{critic_forward.1} parent=0 // pred_region
    _
  $region9: #{critic_forward.1} parent=0 // pred_fallthru
    _
  // Predicated region
  $region10: #{critic_forward.1} parent=0 // pred_check
    _
  $region11: #{critic_forward.1} parent=0 // pred_check_branch
    %22 = sbr.rel (0) target = $region13
  $region12: #{critic_forward.1} parent=0 // pred_region
    _
  $region13: #{critic_forward.1} parent=0 // pred_fallthru
    _
  // Predicated region
  $region14: #{critic_forward.1} parent=0 // pred_check
    _
  $region15: #{critic_forward.1} parent=0 // pred_check_branch
    %24 = sbr.rel (0) target = $region17
  $region16: #{critic_forward.1} parent=0 // pred_region
    _
  $region17: #{critic_forward.1} parent=0 // pred_fallthru
    _
  // Predicated region
  $region18: #{critic_forward.1} parent=0 // pred_check
    _
  $region19: #{critic_forward.1} parent=0 // pred_check_branch
    %26 = sbr.rel (0) target = $region21
  $region20: #{critic_forward.1} parent=0 // pred_region
    _
  $region21: #{critic_forward.1} parent=0 // pred_fallthru
    _
  // Predicated region
  $region22: #{critic_forward.1} parent=0 // pred_check
    _
  $region23: #{critic_forward.1} parent=0 // pred_check_branch
    %28 = sbr.rel (0) target = $region25
  $region24: #{critic_forward.1} parent=0 // pred_region
    _
  $region25: #{critic_forward.1} parent=0 // pred_fallthru
    _
  // Predicated region
  $region26: #{critic_forward.1} parent=0 // pred_check
    _
  $region27: #{critic_forward.1} parent=0 // pred_check_branch
    %30 = sbr.rel (0) target = $region29
  $region28: #{critic_forward.1} parent=0 // pred_region
    _
  $region29: #{critic_forward.1} parent=0 // pred_fallthru
    _
  // Predicated region
  $region30: #{critic_forward.1} parent=0 // pred_check
    _
  $region31: #{critic_forward.1} parent=0 // pred_check_branch
    %32 = sbr.rel (0) target = $region33
  $region32: #{critic_forward.1} parent=0 // pred_region
    _
  $region33: #{critic_forward.1} parent=0 // pred_fallthru
    _
  // Predicated region
  $region34: #{critic_forward.1} parent=0 // pred_check
    _
  $region35: #{critic_forward.1} parent=0 // pred_check_branch
    %34 = sbr.rel (0) target = $region37
  $region36: #{critic_forward.1} parent=0 // pred_region
    _
  $region37: #{critic_forward.1} parent=0 // pred_fallthru
    _
  // Predicated region
  $region38: #{critic_forward.1} parent=0 // pred_check
    _
  $region39: #{critic_forward.1} parent=0 // pred_check_branch
    %36 = sbr.rel (0) target = $region41
  $region40: #{critic_forward.1} parent=0 // pred_region
    _
  $region41: #{critic_forward.1} parent=0 // pred_fallthru
    _
  // Predicated region
  $region42: #{critic_forward.1} parent=0 // pred_check
    _
  $region43: #{critic_forward.1} parent=0 // pred_check_branch
    %38 = sbr.rel (0) target = $region45
  $region44: #{critic_forward.1} parent=0 // pred_region
    _
  $region45: #{critic_forward.1} parent=0 // pred_fallthru
    _
  // Predicated region
  $region46: #{critic_forward.1} parent=0 // pred_check
    _
  $region47: #{critic_forward.1} parent=0 // pred_check_branch
    %40 = sbr.rel (0) target = $region49
  $region48: #{critic_forward.1} parent=0 // pred_region
    _
  $region49: #{critic_forward.1} parent=0 // pred_fallthru
    _
  %v42 = vld [vmem:[%s0] sm:$0xff]
  %v43 = vld [vmem:[%s0 + $0x8] sm:$0xff]
  %v44 = vld [vmem:[%s0 + $0x10] sm:$0xff]
  %v45 = vld [vmem:[%s0 + $0x18] sm:$0xff]
  %v46 = vld [vmem:[%s0 + $0x20] sm:$0xff]
  %v47 = vld [vmem:[%s0 + $0x28] sm:$0xff]
  %v48 = vld [vmem:[%s0 + $0x30] sm:$0xff]
  %v49 = vld [vmem:[%s0 + $0x38] sm:$0xff]
  %v50 = vpack.c.bf16 %v43, %v42
  %v51 = vpack.c.bf16 %v45, %v44
  %v52 = vpack.c.bf16 %v47, %v46
  %v53 = vpack.c.bf16 %v49, %v48
  %v54 = vld [vmem:[%s1] sm:$0xff]
  %v55 = vld [vmem:[%s1 + $0x8] sm:$0xff]
  %v56 = vld [vmem:[%s1 + $0x10] sm:$0xff]
  %v57 = vld [vmem:[%s1 + $0x18] sm:$0xff]
  %v58 = vld [vmem:[%s1 + $0x20] sm:$0xff]
  %v59 = vld [vmem:[%s1 + $0x28] sm:$0xff]
  %v60 = vld [vmem:[%s1 + $0x30] sm:$0xff]
  %v61 = vld [vmem:[%s1 + $0x38] sm:$0xff]
  %v62 = vpack.c.bf16 %v55, %v54
  %v63 = vpack.c.bf16 %v57, %v56
  %v64 = vpack.c.bf16 %v59, %v58
  %v65 = vpack.c.bf16 %v61, %v60
  %v66 = vld [vmem:[%s2] sm:$0xff]
  %v67 = vld [vmem:[%s2 + $0x8] sm:$0xff]
  %v68 = vld [vmem:[%s2 + $0x10] sm:$0xff]
  %v69 = vld [vmem:[%s2 + $0x18] sm:$0xff]
  %v70 = vld [vmem:[%s2 + $0x20] sm:$0xff]
  %v71 = vld [vmem:[%s2 + $0x28] sm:$0xff]
  %v72 = vld [vmem:[%s2 + $0x30] sm:$0xff]
  %v73 = vld [vmem:[%s2 + $0x38] sm:$0xff]
  %v74 = vld [vmem:[%s2 + $0x40] sm:$0x11]
  %v75 = vld [vmem:[%s2 + $0x48] sm:$0x11]
  %v76 = vld [vmem:[%s2 + $0x50] sm:$0x11]
  %v77 = vld [vmem:[%s2 + $0x58] sm:$0x11]
  %v78 = vld [vmem:[%s3] sm:$0x77]
  %v79 = vld [vmem:[%s3 + $0x8] sm:$0x77]
  %v80 = vld [vmem:[%s3 + $0x10] sm:$0x77]
  %v81 = vld [vmem:[%s3 + $0x18] sm:$0x77]
  %v86 = vunpack.c.l.b16 %v78
  %v87 = vunpack.c.h.b16 %v78
  %v88 = vunpack.c.l.b16 %v79
  %v89 = vunpack.c.h.b16 %v79
  %v90 = vunpack.c.l.b16 %v80
  %v91 = vunpack.c.h.b16 %v80
  %v92 = vunpack.c.l.b16 %v81
  %v93 = vunpack.c.h.b16 %v81
  %v94 = vpack.c.b16 %v86, %v86
  %v95 = vpack.c.b16 %v87, %v87
  %v96 = vpack.c.b16 %v88, %v88
  %v97 = vpack.c.b16 %v89, %v89
  %v98 = vpack.c.b16 %v90, %v90
  %v99 = vpack.c.b16 %v91, %v91
  %v100 = vpack.c.b16 %v92, %v92
  %v101 = vpack.c.b16 %v93, %v93
  %vm102 = vcmask 48128
  %v104 = vsel %vm102, %v62, 0
  %v107 = vsel %vm102, %v63, 0
  %v110 = vsel %vm102, %v64, 0
  %v113 = vsel %vm102, %v65, 0
  %vm115 = vcmask 1042432
  %v117 = vsel %vm115, %v94, 0
  %v120 = vsel %vm115, %v95, 0
  %v123 = vsel %vm115, %v96, 0
  %v126 = vsel %vm115, %v97, 0
  %v129 = vsel %vm115, %v98, 0
  %v132 = vsel %vm115, %v99, 0
  %v135 = vsel %vm115, %v100, 0
  %v138 = vsel %vm115, %v101, 0
  %140 = vmatprep.subr.bf16.mxu0 %v120
  %141 = vmatpush1.bf16.msra.mxu0 %v117
  %142 = vmatprep.subr.bf16.mxu0 0
  %143 = vmatpush1.bf16.msra.mxu0 0
  %144 = vmatprep.subr.bf16.mxu0 0
  %145 = vmatpush1.bf16.msra.mxu0 0
  %146 = vmatprep.subr.bf16.mxu0 0
  %147 = vmatpush1.bf16.msra.mxu0 0
  %148 = vmatprep.subr.bf16.mxu0 0
  %149 = vmatpush1.bf16.msra.mxu0 0
  %150 = vmatprep.subr.bf16.mxu0 0
  %151 = vmatpush1.bf16.msra.mxu0 0
  %152 = vmatprep.subr.bf16.mxu0 0
  %153 = vmatpush1.bf16.msra.mxu0 0
  %154 = vmatprep.subr.bf16.mxu0 0
  %155 = vmatpush1.bf16.msra.mxu0 0
  %156 = vmatprep.subr.bf16.mxu0 0
  %157 = vmatpush1.bf16.msra.mxu0 0
  %158 = vmatprep.subr.bf16.mxu0 0
  %159 = vmatpush1.bf16.msra.mxu0 0
  %160 = vmatprep.subr.bf16.mxu0 0
  %161 = vmatpush1.bf16.msra.mxu0 0
  %162 = vmatprep.subr.bf16.mxu0 0
  %163 = vmatpush1.bf16.msra.mxu0 0
  %164 = vmatprep.subr.bf16.mxu0 0
  %165 = vmatpush1.bf16.msra.mxu0 0
  %166 = vmatprep.subr.bf16.mxu0 0
  %167 = vmatpush1.bf16.msra.mxu0 0
  %168 = vmatprep.subr.bf16.mxu0 0
  %169 = vmatpush1.bf16.msra.mxu0 0
  %170 = vmatprep.subr.bf16.mxu0 0
  %171 = vmatpush1.bf16.msra.mxu0 0
  %172 = vmatprep.mubr.bf16.mxu0 0
  %173 = vmatmul.mubr.bf16.gmra.mrb[0].mxu0 %v104
  %v174 = vpop.f32.mrb[0].mxu0
  %v175 = vadd.f32 0.0, %v174
  %v176 = vpop.f32.mrb[0].mxu0
  %v177 = vadd.f32 0.0, %v176
  %v178 = vpop.f32.mrb[0].mxu0
  %v179 = vadd.f32 0.0, %v178
  %v180 = vpop.f32.mrb[0].mxu0
  %v181 = vadd.f32 0.0, %v180
  %182 = vmatprep.mubr.bf16.mxu0 0
  %183 = vmatmul.mubr.bf16.gmra.mrb[0].mxu0 %v107
  %v184 = vpop.f32.mrb[0].mxu0
  %v185 = vadd.f32 0.0, %v184
  %v186 = vpop.f32.mrb[0].mxu0
  %v187 = vadd.f32 0.0, %v186
  %v188 = vpop.f32.mrb[0].mxu0
  %v189 = vadd.f32 0.0, %v188
  %v190 = vpop.f32.mrb[0].mxu0
  %v191 = vadd.f32 0.0, %v190
  %192 = vmatprep.mubr.bf16.mxu0 0
  %193 = vmatmul.mubr.bf16.gmra.mrb[0].mxu0 %v110
  %v194 = vpop.f32.mrb[0].mxu0
  %v195 = vadd.f32 0.0, %v194
  %v196 = vpop.f32.mrb[0].mxu0
  %v197 = vadd.f32 0.0, %v196
  %v198 = vpop.f32.mrb[0].mxu0
  %v199 = vadd.f32 0.0, %v198
  %v200 = vpop.f32.mrb[0].mxu0
  %v201 = vadd.f32 0.0, %v200
  %202 = vmatprep.mubr.bf16.mxu0 0
  %203 = vmatmul.mubr.bf16.gmra.mrb[0].mxu0 %v113
  %v204 = vpop.f32.mrb[0].mxu0
  %v205 = vadd.f32 0.0, %v204
  %v206 = vpop.f32.mrb[0].mxu0
  %v207 = vadd.f32 0.0, %v206
  %v208 = vpop.f32.mrb[0].mxu0
  %v209 = vadd.f32 0.0, %v208
  %v210 = vpop.f32.mrb[0].mxu0
  %v211 = vadd.f32 0.0, %v210
  %212 = vdwg.mxu0
  %213 = vmatprep.subr.bf16.mxu0 %v126
  %214 = vmatpush1.bf16.msra.mxu0 %v123
  %215 = vmatprep.subr.bf16.mxu0 0
  %216 = vmatpush1.bf16.msra.mxu0 0
  %217 = vmatprep.subr.bf16.mxu0 0
  %218 = vmatpush1.bf16.msra.mxu0 0
  %219 = vmatprep.subr.bf16.mxu0 0
  %220 = vmatpush1.bf16.msra.mxu0 0
  %221 = vmatprep.subr.bf16.mxu0 0
  %222 = vmatpush1.bf16.msra.mxu0 0
  %223 = vmatprep.subr.bf16.mxu0 0
  %224 = vmatpush1.bf16.msra.mxu0 0
  %225 = vmatprep.subr.bf16.mxu0 0
  %226 = vmatpush1.bf16.msra.mxu0 0
  %227 = vmatprep.subr.bf16.mxu0 0
  %228 = vmatpush1.bf16.msra.mxu0 0
  %229 = vmatprep.subr.bf16.mxu0 0
  %230 = vmatpush1.bf16.msra.mxu0 0
  %231 = vmatprep.subr.bf16.mxu0 0
  %232 = vmatpush1.bf16.msra.mxu0 0
  %233 = vmatprep.subr.bf16.mxu0 0
  %234 = vmatpush1.bf16.msra.mxu0 0
  %235 = vmatprep.subr.bf16.mxu0 0
  %236 = vmatpush1.bf16.msra.mxu0 0
  %237 = vmatprep.subr.bf16.mxu0 0
  %238 = vmatpush1.bf16.msra.mxu0 0
  %239 = vmatprep.subr.bf16.mxu0 0
  %240 = vmatpush1.bf16.msra.mxu0 0
  %241 = vmatprep.subr.bf16.mxu0 0
  %242 = vmatpush1.bf16.msra.mxu0 0
  %243 = vmatprep.subr.bf16.mxu0 0
  %244 = vmatpush1.bf16.msra.mxu0 0
  %245 = vmatprep.mubr.bf16.mxu0 0
  %246 = vmatmul.mubr.bf16.gmra.mrb[0].mxu0 %v104
  %v247 = vpop.f32.mrb[0].mxu0
  %v248 = vadd.f32 0.0, %v247
  %v249 = vpop.f32.mrb[0].mxu0
  %v250 = vadd.f32 0.0, %v249
  %v251 = vpop.f32.mrb[0].mxu0
  %v252 = vadd.f32 0.0, %v251
  %v253 = vpop.f32.mrb[0].mxu0
  %v254 = vadd.f32 0.0, %v253
  %255 = vmatprep.mubr.bf16.mxu0 0
  %256 = vmatmul.mubr.bf16.gmra.mrb[0].mxu0 %v107
  %v257 = vpop.f32.mrb[0].mxu0
  %v258 = vadd.f32 0.0, %v257
  %v259 = vpop.f32.mrb[0].mxu0
  %v260 = vadd.f32 0.0, %v259
  %v261 = vpop.f32.mrb[0].mxu0
  %v262 = vadd.f32 0.0, %v261
  %v263 = vpop.f32.mrb[0].mxu0
  %v264 = vadd.f32 0.0, %v263
  %265 = vmatprep.mubr.bf16.mxu0 0
  %266 = vmatmul.mubr.bf16.gmra.mrb[0].mxu0 %v110
  %v267 = vpop.f32.mrb[0].mxu0
  %v268 = vadd.f32 0.0, %v267
  %v269 = vpop.f32.mrb[0].mxu0
  %v270 = vadd.f32 0.0, %v269
  %v271 = vpop.f32.mrb[0].mxu0
  %v272 = vadd.f32 0.0, %v271
  %v273 = vpop.f32.mrb[0].mxu0
  %v274 = vadd.f32 0.0, %v273
  %275 = vmatprep.mubr.bf16.mxu0 0
  %276 = vmatmul.mubr.bf16.gmra.mrb[0].mxu0 %v113
  %v277 = vpop.f32.mrb[0].mxu0
  %v278 = vadd.f32 0.0, %v277
  %v279 = vpop.f32.mrb[0].mxu0
  %v280 = vadd.f32 0.0, %v279
  %v281 = vpop.f32.mrb[0].mxu0
  %v282 = vadd.f32 0.0, %v281
  %v283 = vpop.f32.mrb[0].mxu0
  %v284 = vadd.f32 0.0, %v283
  %285 = vdwg.mxu0
  %286 = vmatprep.subr.bf16.mxu0 %v132
  %287 = vmatpush1.bf16.msra.mxu0 %v129
  %288 = vmatprep.subr.bf16.mxu0 0
  %289 = vmatpush1.bf16.msra.mxu0 0
  %290 = vmatprep.subr.bf16.mxu0 0
  %291 = vmatpush1.bf16.msra.mxu0 0
  %292 = vmatprep.subr.bf16.mxu0 0
  %293 = vmatpush1.bf16.msra.mxu0 0
  %294 = vmatprep.subr.bf16.mxu0 0
  %295 = vmatpush1.bf16.msra.mxu0 0
  %296 = vmatprep.subr.bf16.mxu0 0
  %297 = vmatpush1.bf16.msra.mxu0 0
  %298 = vmatprep.subr.bf16.mxu0 0
  %299 = vmatpush1.bf16.msra.mxu0 0
  %300 = vmatprep.subr.bf16.mxu0 0
  %301 = vmatpush1.bf16.msra.mxu0 0
  %302 = vmatprep.subr.bf16.mxu0 0
  %303 = vmatpush1.bf16.msra.mxu0 0
  %304 = vmatprep.subr.bf16.mxu0 0
  %305 = vmatpush1.bf16.msra.mxu0 0
  %306 = vmatprep.subr.bf16.mxu0 0
  %307 = vmatpush1.bf16.msra.mxu0 0
  %308 = vmatprep.subr.bf16.mxu0 0
  %309 = vmatpush1.bf16.msra.mxu0 0
  %310 = vmatprep.subr.bf16.mxu0 0
  %311 = vmatpush1.bf16.msra.mxu0 0
  %312 = vmatprep.subr.bf16.mxu0 0
  %313 = vmatpush1.bf16.msra.mxu0 0
  %314 = vmatprep.subr.bf16.mxu0 0
  %315 = vmatpush1.bf16.msra.mxu0 0
  %316 = vmatprep.subr.bf16.mxu0 0
  %317 = vmatpush1.bf16.msra.mxu0 0
  %318 = vmatprep.mubr.bf16.mxu0 0
  %319 = vmatmul.mubr.bf16.gmra.mrb[0].mxu0 %v104
  %v320 = vpop.f32.mrb[0].mxu0
  %v321 = vadd.f32 0.0, %v320
  %v322 = vpop.f32.mrb[0].mxu0
  %v323 = vadd.f32 0.0, %v322
  %v324 = vpop.f32.mrb[0].mxu0
  %v325 = vadd.f32 0.0, %v324
  %v326 = vpop.f32.mrb[0].mxu0
  %v327 = vadd.f32 0.0, %v326
  %328 = vmatprep.mubr.bf16.mxu0 0
  %329 = vmatmul.mubr.bf16.gmra.mrb[0].mxu0 %v107
  %v330 = vpop.f32.mrb[0].mxu0
  %v331 = vadd.f32 0.0, %v330
  %v332 = vpop.f32.mrb[0].mxu0
  %v333 = vadd.f32 0.0, %v332
  %v334 = vpop.f32.mrb[0].mxu0
  %v335 = vadd.f32 0.0, %v334
  %v336 = vpop.f32.mrb[0].mxu0
  %v337 = vadd.f32 0.0, %v336
  %338 = vmatprep.mubr.bf16.mxu0 0
  %339 = vmatmul.mubr.bf16.gmra.mrb[0].mxu0 %v110
  %v340 = vpop.f32.mrb[0].mxu0
  %v341 = vadd.f32 0.0, %v340
  %v342 = vpop.f32.mrb[0].mxu0
  %v343 = vadd.f32 0.0, %v342
  %v344 = vpop.f32.mrb[0].mxu0
  %v345 = vadd.f32 0.0, %v344
  %v346 = vpop.f32.mrb[0].mxu0
  %v347 = vadd.f32 0.0, %v346
  %348 = vmatprep.mubr.bf16.mxu0 0
  %349 = vmatmul.mubr.bf16.gmra.mrb[0].mxu0 %v113
  %v350 = vpop.f32.mrb[0].mxu0
  %v351 = vadd.f32 0.0, %v350
  %v352 = vpop.f32.mrb[0].mxu0
  %v353 = vadd.f32 0.0, %v352
  %v354 = vpop.f32.mrb[0].mxu0
  %v355 = vadd.f32 0.0, %v354
  %v356 = vpop.f32.mrb[0].mxu0
  %v357 = vadd.f32 0.0, %v356
  %358 = vdwg.mxu0
  %359 = vmatprep.subr.bf16.mxu0 %v138
  %360 = vmatpush1.bf16.msra.mxu0 %v135
  %361 = vmatprep.subr.bf16.mxu0 0
  %362 = vmatpush1.bf16.msra.mxu0 0
  %363 = vmatprep.subr.bf16.mxu0 0
  %364 = vmatpush1.bf16.msra.mxu0 0
  %365 = vmatprep.subr.bf16.mxu0 0
  %366 = vmatpush1.bf16.msra.mxu0 0
  %367 = vmatprep.subr.bf16.mxu0 0
  %368 = vmatpush1.bf16.msra.mxu0 0
  %369 = vmatprep.subr.bf16.mxu0 0
  %370 = vmatpush1.bf16.msra.mxu0 0
  %371 = vmatprep.subr.bf16.mxu0 0
  %372 = vmatpush1.bf16.msra.mxu0 0
  %373 = vmatprep.subr.bf16.mxu0 0
  %374 = vmatpush1.bf16.msra.mxu0 0
  %375 = vmatprep.subr.bf16.mxu0 0
  %376 = vmatpush1.bf16.msra.mxu0 0
  %377 = vmatprep.subr.bf16.mxu0 0
  %378 = vmatpush1.bf16.msra.mxu0 0
  %379 = vmatprep.subr.bf16.mxu0 0
  %380 = vmatpush1.bf16.msra.mxu0 0
  %381 = vmatprep.subr.bf16.mxu0 0
  %382 = vmatpush1.bf16.msra.mxu0 0
  %383 = vmatprep.subr.bf16.mxu0 0
  %384 = vmatpush1.bf16.msra.mxu0 0
  %385 = vmatprep.subr.bf16.mxu0 0
  %386 = vmatpush1.bf16.msra.mxu0 0
  %387 = vmatprep.subr.bf16.mxu0 0
  %388 = vmatpush1.bf16.msra.mxu0 0
  %389 = vmatprep.subr.bf16.mxu0 0
  %390 = vmatpush1.bf16.msra.mxu0 0
  %391 = vmatprep.mubr.bf16.mxu0 0
  %392 = vmatmul.mubr.bf16.gmra.mrb[0].mxu0 %v104
  %v393 = vpop.f32.mrb[0].mxu0
  %v394 = vadd.f32 0.0, %v393
  %v395 = vpop.f32.mrb[0].mxu0
  %v396 = vadd.f32 0.0, %v395
  %v397 = vpop.f32.mrb[0].mxu0
  %v398 = vadd.f32 0.0, %v397
  %v399 = vpop.f32.mrb[0].mxu0
  %v400 = vadd.f32 0.0, %v399
  %401 = vmatprep.mubr.bf16.mxu0 0
  %402 = vmatmul.mubr.bf16.gmra.mrb[0].mxu0 %v107
  %v403 = vpop.f32.mrb[0].mxu0
  %v404 = vadd.f32 0.0, %v403
  %v405 = vpop.f32.mrb[0].mxu0
  %v406 = vadd.f32 0.0, %v405
  %v407 = vpop.f32.mrb[0].mxu0
  %v408 = vadd.f32 0.0, %v407
  %v409 = vpop.f32.mrb[0].mxu0
  %v410 = vadd.f32 0.0, %v409
  %411 = vmatprep.mubr.bf16.mxu0 0
  %412 = vmatmul.mubr.bf16.gmra.mrb[0].mxu0 %v110
  %v413 = vpop.f32.mrb[0].mxu0
  %v414 = vadd.f32 0.0, %v413
  %v415 = vpop.f32.mrb[0].mxu0
  %v416 = vadd.f32 0.0, %v415
  %v417 = vpop.f32.mrb[0].mxu0
  %v418 = vadd.f32 0.0, %v417
  %v419 = vpop.f32.mrb[0].mxu0
  %v420 = vadd.f32 0.0, %v419
  %421 = vmatprep.mubr.bf16.mxu0 0
  %422 = vmatmul.mubr.bf16.gmra.mrb[0].mxu0 %v113
  %v423 = vpop.f32.mrb[0].mxu0
  %v424 = vadd.f32 0.0, %v423
  %v425 = vpop.f32.mrb[0].mxu0
  %v426 = vadd.f32 0.0, %v425
  %v427 = vpop.f32.mrb[0].mxu0
  %v428 = vadd.f32 0.0, %v427
  %v429 = vpop.f32.mrb[0].mxu0
  %v430 = vadd.f32 0.0, %v429
  %431 = vdwg.mxu0
  %v444 = vunpack.c.l.b16 %v66
  %v445 = vunpack.c.h.b16 %v66
  %v446 = vunpack.c.l.b16 %v67
  %v447 = vunpack.c.h.b16 %v67
  %v448 = vunpack.c.l.b16 %v68
  %v449 = vunpack.c.h.b16 %v68
  %v450 = vunpack.c.l.b16 %v69
  %v451 = vunpack.c.h.b16 %v69
  %v452 = vunpack.c.l.b16 %v70
  %v453 = vunpack.c.h.b16 %v70
  %v454 = vunpack.c.l.b16 %v71
  %v455 = vunpack.c.h.b16 %v71
  %v456 = vunpack.c.l.b16 %v72
  %v457 = vunpack.c.h.b16 %v72
  %v458 = vunpack.c.l.b16 %v73
  %v459 = vunpack.c.h.b16 %v73
  %v460 = vunpack.c.l.b16 %v74
  %v461 = vunpack.c.h.b16 %v74
  %v462 = vunpack.c.l.b16 %v75
  %v463 = vunpack.c.h.b16 %v75
  %v464 = vunpack.c.l.b16 %v76
  %v465 = vunpack.c.h.b16 %v76
  %v466 = vunpack.c.l.b16 %v77
  %v467 = vunpack.c.h.b16 %v77
  %v468 = vpack.c.b16 %v452, %v444
  %v469 = vpack.c.b16 %v453, %v445
  %v470 = vpack.c.b16 %v454, %v446
  %v471 = vpack.c.b16 %v455, %v447
  %v472 = vpack.c.b16 %v456, %v448
  %v473 = vpack.c.b16 %v457, %v449
  %v474 = vpack.c.b16 %v458, %v450
  %v475 = vpack.c.b16 %v459, %v451
  %v476 = vpack.c.b16 %v460, %v460
  %v477 = vpack.c.b16 %v461, %v461
  %v478 = vpack.c.b16 %v462, %v462
  %v479 = vpack.c.b16 %v463, %v463
  %v480 = vpack.c.b16 %v464, %v464
  %v481 = vpack.c.b16 %v465, %v465
  %v482 = vpack.c.b16 %v466, %v466
  %v483 = vpack.c.b16 %v467, %v467
  %vm492 = vcmask 138240
  %v494 = vsel %vm492, %v50, 0
  %v497 = vsel %vm492, %v51, 0
  %v500 = vsel %vm492, %v52, 0
  %v503 = vsel %vm492, %v53, 0
  %vm505 = vcmask 1040384
  %v506 = vsel 0, 4294967295, 65535
  %v507 = vsel %vm505, %v506, 0
  %v509 = vand.u32 %v476, %v507
  %v512 = vand.u32 %v477, %v507
  %v515 = vand.u32 %v478, %v507
  %v518 = vand.u32 %v479, %v507
  %v521 = vand.u32 %v480, %v507
  %v524 = vand.u32 %v481, %v507
  %v527 = vand.u32 %v482, %v507
  %v530 = vand.u32 %v483, %v507
  %532 = vmatprep.subr.bf16.mxu0 %v469
  %533 = vmatpush1.bf16.msra.mxu0 %v468
  %534 = vmatprep.subr.bf16.mxu0 %v512
  %535 = vmatpush1.bf16.msra.mxu0 %v509
  %536 = vmatprep.subr.bf16.mxu0 0
  %537 = vmatpush1.bf16.msra.mxu0 0
  %538 = vmatprep.subr.bf16.mxu0 0
  %539 = vmatpush1.bf16.msra.mxu0 0
  %540 = vmatprep.subr.bf16.mxu0 0
  %541 = vmatpush1.bf16.msra.mxu0 0
  %542 = vmatprep.subr.bf16.mxu0 0
  %543 = vmatpush1.bf16.msra.mxu0 0
  %544 = vmatprep.subr.bf16.mxu0 0
  %545 = vmatpush1.bf16.msra.mxu0 0
  %546 = vmatprep.subr.bf16.mxu0 0
  %547 = vmatpush1.bf16.msra.mxu0 0
  %548 = vmatprep.subr.bf16.mxu0 0
  %549 = vmatpush1.bf16.msra.mxu0 0
  %550 = vmatprep.subr.bf16.mxu0 0
  %551 = vmatpush1.bf16.msra.mxu0 0
  %552 = vmatprep.subr.bf16.mxu0 0
  %553 = vmatpush1.bf16.msra.mxu0 0
  %554 = vmatprep.subr.bf16.mxu0 0
  %555 = vmatpush1.bf16.msra.mxu0 0
  %556 = vmatprep.subr.bf16.mxu0 0
  %557 = vmatpush1.bf16.msra.mxu0 0
  %558 = vmatprep.subr.bf16.mxu0 0
  %559 = vmatpush1.bf16.msra.mxu0 0
  %560 = vmatprep.subr.bf16.mxu0 0
  %561 = vmatpush1.bf16.msra.mxu0 0
  %562 = vmatprep.subr.bf16.mxu0 0
  %563 = vmatpush1.bf16.msra.mxu0 0
  %564 = vmatprep.mubr.bf16.mxu0 0
  %565 = vmatmul.mubr.bf16.gmra.mrb[0].mxu0 %v494
  %v566 = vpop.f32.mrb[0].mxu0
  %v567 = vadd.f32 %v175, %v566
  %v568 = vpop.f32.mrb[0].mxu0
  %v569 = vadd.f32 %v177, %v568
  %v570 = vpop.f32.mrb[0].mxu0
  %v571 = vadd.f32 %v179, %v570
  %v572 = vpop.f32.mrb[0].mxu0
  %v573 = vadd.f32 %v181, %v572
  %574 = vmatprep.mubr.bf16.mxu0 0
  %575 = vmatmul.mubr.bf16.gmra.mrb[0].mxu0 %v497
  %v576 = vpop.f32.mrb[0].mxu0
  %v577 = vadd.f32 %v185, %v576
  %v578 = vpop.f32.mrb[0].mxu0
  %v579 = vadd.f32 %v187, %v578
  %v580 = vpop.f32.mrb[0].mxu0
  %v581 = vadd.f32 %v189, %v580
  %v582 = vpop.f32.mrb[0].mxu0
  %v583 = vadd.f32 %v191, %v582
  %584 = vmatprep.mubr.bf16.mxu0 0
  %585 = vmatmul.mubr.bf16.gmra.mrb[0].mxu0 %v500
  %v586 = vpop.f32.mrb[0].mxu0
  %v587 = vadd.f32 %v195, %v586
  %v588 = vpop.f32.mrb[0].mxu0
  %v589 = vadd.f32 %v197, %v588
  %v590 = vpop.f32.mrb[0].mxu0
  %v591 = vadd.f32 %v199, %v590
  %v592 = vpop.f32.mrb[0].mxu0
  %v593 = vadd.f32 %v201, %v592
  %594 = vmatprep.mubr.bf16.mxu0 0
  %595 = vmatmul.mubr.bf16.gmra.mrb[0].mxu0 %v503
  %v596 = vpop.f32.mrb[0].mxu0
  %v597 = vadd.f32 %v205, %v596
  %v598 = vpop.f32.mrb[0].mxu0
  %v599 = vadd.f32 %v207, %v598
  %v600 = vpop.f32.mrb[0].mxu0
  %v601 = vadd.f32 %v209, %v600
  %v602 = vpop.f32.mrb[0].mxu0
  %v603 = vadd.f32 %v211, %v602
  %604 = vdwg.mxu0
  %605 = vmatprep.subr.bf16.mxu0 %v471
  %606 = vmatpush1.bf16.msra.mxu0 %v470
  %607 = vmatprep.subr.bf16.mxu0 %v518
  %608 = vmatpush1.bf16.msra.mxu0 %v515
  %609 = vmatprep.subr.bf16.mxu0 0
  %610 = vmatpush1.bf16.msra.mxu0 0
  %611 = vmatprep.subr.bf16.mxu0 0
  %612 = vmatpush1.bf16.msra.mxu0 0
  %613 = vmatprep.subr.bf16.mxu0 0
  %614 = vmatpush1.bf16.msra.mxu0 0
  %615 = vmatprep.subr.bf16.mxu0 0
  %616 = vmatpush1.bf16.msra.mxu0 0
  %617 = vmatprep.subr.bf16.mxu0 0
  %618 = vmatpush1.bf16.msra.mxu0 0
  %619 = vmatprep.subr.bf16.mxu0 0
  %620 = vmatpush1.bf16.msra.mxu0 0
  %621 = vmatprep.subr.bf16.mxu0 0
  %622 = vmatpush1.bf16.msra.mxu0 0
  %623 = vmatprep.subr.bf16.mxu0 0
  %624 = vmatpush1.bf16.msra.mxu0 0
  %625 = vmatprep.subr.bf16.mxu0 0
  %626 = vmatpush1.bf16.msra.mxu0 0
  %627 = vmatprep.subr.bf16.mxu0 0
  %628 = vmatpush1.bf16.msra.mxu0 0
  %629 = vmatprep.subr.bf16.mxu0 0
  %630 = vmatpush1.bf16.msra.mxu0 0
  %631 = vmatprep.subr.bf16.mxu0 0
  %632 = vmatpush1.bf16.msra.mxu0 0
  %633 = vmatprep.subr.bf16.mxu0 0
  %634 = vmatpush1.bf16.msra.mxu0 0
  %635 = vmatprep.subr.bf16.mxu0 0
  %636 = vmatpush1.bf16.msra.mxu0 0
  %637 = vmatprep.mubr.bf16.mxu0 0
  %638 = vmatmul.mubr.bf16.gmra.mrb[0].mxu0 %v494
  %v639 = vpop.f32.mrb[0].mxu0
  %v640 = vadd.f32 %v248, %v639
  %v641 = vpop.f32.mrb[0].mxu0
  %v642 = vadd.f32 %v250, %v641
  %v643 = vpop.f32.mrb[0].mxu0
  %v644 = vadd.f32 %v252, %v643
  %v645 = vpop.f32.mrb[0].mxu0
  %v646 = vadd.f32 %v254, %v645
  %647 = vmatprep.mubr.bf16.mxu0 0
  %648 = vmatmul.mubr.bf16.gmra.mrb[0].mxu0 %v497
  %v649 = vpop.f32.mrb[0].mxu0
  %v650 = vadd.f32 %v258, %v649
  %v651 = vpop.f32.mrb[0].mxu0
  %v652 = vadd.f32 %v260, %v651
  %v653 = vpop.f32.mrb[0].mxu0
  %v654 = vadd.f32 %v262, %v653
  %v655 = vpop.f32.mrb[0].mxu0
  %v656 = vadd.f32 %v264, %v655
  %657 = vmatprep.mubr.bf16.mxu0 0
  %658 = vmatmul.mubr.bf16.gmra.mrb[0].mxu0 %v500
  %v659 = vpop.f32.mrb[0].mxu0
  %v660 = vadd.f32 %v268, %v659
  %v661 = vpop.f32.mrb[0].mxu0
  %v662 = vadd.f32 %v270, %v661
  %v663 = vpop.f32.mrb[0].mxu0
  %v664 = vadd.f32 %v272, %v663
  %v665 = vpop.f32.mrb[0].mxu0
  %v666 = vadd.f32 %v274, %v665
  %667 = vmatprep.mubr.bf16.mxu0 0
  %668 = vmatmul.mubr.bf16.gmra.mrb[0].mxu0 %v503
  %v669 = vpop.f32.mrb[0].mxu0
  %v670 = vadd.f32 %v278, %v669
  %v671 = vpop.f32.mrb[0].mxu0
  %v672 = vadd.f32 %v280, %v671
  %v673 = vpop.f32.mrb[0].mxu0
  %v674 = vadd.f32 %v282, %v673
  %v675 = vpop.f32.mrb[0].mxu0
  %v676 = vadd.f32 %v284, %v675
  %677 = vdwg.mxu0
  %678 = vmatprep.subr.bf16.mxu0 %v473
  %679 = vmatpush1.bf16.msra.mxu0 %v472
  %680 = vmatprep.subr.bf16.mxu0 %v524
  %681 = vmatpush1.bf16.msra.mxu0 %v521
  %682 = vmatprep.subr.bf16.mxu0 0
  %683 = vmatpush1.bf16.msra.mxu0 0
  %684 = vmatprep.subr.bf16.mxu0 0
  %685 = vmatpush1.bf16.msra.mxu0 0
  %686 = vmatprep.subr.bf16.mxu0 0
  %687 = vmatpush1.bf16.msra.mxu0 0
  %688 = vmatprep.subr.bf16.mxu0 0
  %689 = vmatpush1.bf16.msra.mxu0 0
  %690 = vmatprep.subr.bf16.mxu0 0
  %691 = vmatpush1.bf16.msra.mxu0 0
  %692 = vmatprep.subr.bf16.mxu0 0
  %693 = vmatpush1.bf16.msra.mxu0 0
  %694 = vmatprep.subr.bf16.mxu0 0
  %695 = vmatpush1.bf16.msra.mxu0 0
  %696 = vmatprep.subr.bf16.mxu0 0
  %697 = vmatpush1.bf16.msra.mxu0 0
  %698 = vmatprep.subr.bf16.mxu0 0
  %699 = vmatpush1.bf16.msra.mxu0 0
  %700 = vmatprep.subr.bf16.mxu0 0
  %701 = vmatpush1.bf16.msra.mxu0 0
  %702 = vmatprep.subr.bf16.mxu0 0
  %703 = vmatpush1.bf16.msra.mxu0 0
  %704 = vmatprep.subr.bf16.mxu0 0
  %705 = vmatpush1.bf16.msra.mxu0 0
  %706 = vmatprep.subr.bf16.mxu0 0
  %707 = vmatpush1.bf16.msra.mxu0 0
  %708 = vmatprep.subr.bf16.mxu0 0
  %709 = vmatpush1.bf16.msra.mxu0 0
  %710 = vmatprep.mubr.bf16.mxu0 0
  %711 = vmatmul.mubr.bf16.gmra.mrb[0].mxu0 %v494
  %v712 = vpop.f32.mrb[0].mxu0
  %v713 = vadd.f32 %v321, %v712
  %v714 = vpop.f32.mrb[0].mxu0
  %v715 = vadd.f32 %v323, %v714
  %v716 = vpop.f32.mrb[0].mxu0
  %v717 = vadd.f32 %v325, %v716
  %v718 = vpop.f32.mrb[0].mxu0
  %v719 = vadd.f32 %v327, %v718
  %720 = vmatprep.mubr.bf16.mxu0 0
  %721 = vmatmul.mubr.bf16.gmra.mrb[0].mxu0 %v497
  %v722 = vpop.f32.mrb[0].mxu0
  %v723 = vadd.f32 %v331, %v722
  %v724 = vpop.f32.mrb[0].mxu0
  %v725 = vadd.f32 %v333, %v724
  %v726 = vpop.f32.mrb[0].mxu0
  %v727 = vadd.f32 %v335, %v726
  %v728 = vpop.f32.mrb[0].mxu0
  %v729 = vadd.f32 %v337, %v728
  %730 = vmatprep.mubr.bf16.mxu0 0
  %731 = vmatmul.mubr.bf16.gmra.mrb[0].mxu0 %v500
  %v732 = vpop.f32.mrb[0].mxu0
  %v733 = vadd.f32 %v341, %v732
  %v734 = vpop.f32.mrb[0].mxu0
  %v735 = vadd.f32 %v343, %v734
  %v736 = vpop.f32.mrb[0].mxu0
  %v737 = vadd.f32 %v345, %v736
  %v738 = vpop.f32.mrb[0].mxu0
  %v739 = vadd.f32 %v347, %v738
  %740 = vmatprep.mubr.bf16.mxu0 0
  %741 = vmatmul.mubr.bf16.gmra.mrb[0].mxu0 %v503
  %v742 = vpop.f32.mrb[0].mxu0
  %v743 = vadd.f32 %v351, %v742
  %v744 = vpop.f32.mrb[0].mxu0
  %v745 = vadd.f32 %v353, %v744
  %v746 = vpop.f32.mrb[0].mxu0
  %v747 = vadd.f32 %v355, %v746
  %v748 = vpop.f32.mrb[0].mxu0
  %v749 = vadd.f32 %v357, %v748
  %750 = vdwg.mxu0
  %751 = vmatprep.subr.bf16.mxu0 %v475
  %752 = vmatpush1.bf16.msra.mxu0 %v474
  %753 = vmatprep.subr.bf16.mxu0 %v530
  %754 = vmatpush1.bf16.msra.mxu0 %v527
  %755 = vmatprep.subr.bf16.mxu0 0
  %756 = vmatpush1.bf16.msra.mxu0 0
  %757 = vmatprep.subr.bf16.mxu0 0
  %758 = vmatpush1.bf16.msra.mxu0 0
  %759 = vmatprep.subr.bf16.mxu0 0
  %760 = vmatpush1.bf16.msra.mxu0 0
  %761 = vmatprep.subr.bf16.mxu0 0
  %762 = vmatpush1.bf16.msra.mxu0 0
  %763 = vmatprep.subr.bf16.mxu0 0
  %764 = vmatpush1.bf16.msra.mxu0 0
  %765 = vmatprep.subr.bf16.mxu0 0
  %766 = vmatpush1.bf16.msra.mxu0 0
  %767 = vmatprep.subr.bf16.mxu0 0
  %768 = vmatpush1.bf16.msra.mxu0 0
  %769 = vmatprep.subr.bf16.mxu0 0
  %770 = vmatpush1.bf16.msra.mxu0 0
  %771 = vmatprep.subr.bf16.mxu0 0
  %772 = vmatpush1.bf16.msra.mxu0 0
  %773 = vmatprep.subr.bf16.mxu0 0
  %774 = vmatpush1.bf16.msra.mxu0 0
  %775 = vmatprep.subr.bf16.mxu0 0
  %776 = vmatpush1.bf16.msra.mxu0 0
  %777 = vmatprep.subr.bf16.mxu0 0
  %778 = vmatpush1.bf16.msra.mxu0 0
  %779 = vmatprep.subr.bf16.mxu0 0
  %780 = vmatpush1.bf16.msra.mxu0 0
  %781 = vmatprep.subr.bf16.mxu0 0
  %782 = vmatpush1.bf16.msra.mxu0 0
  %783 = vmatprep.mubr.bf16.mxu0 0
  %784 = vmatmul.mubr.bf16.gmra.mrb[0].mxu0 %v494
  %v785 = vpop.f32.mrb[0].mxu0
  %v786 = vadd.f32 %v394, %v785
  %v787 = vpop.f32.mrb[0].mxu0
  %v788 = vadd.f32 %v396, %v787
  %v789 = vpop.f32.mrb[0].mxu0
  %v790 = vadd.f32 %v398, %v789
  %v791 = vpop.f32.mrb[0].mxu0
  %v792 = vadd.f32 %v400, %v791
  %793 = vmatprep.mubr.bf16.mxu0 0
  %794 = vmatmul.mubr.bf16.gmra.mrb[0].mxu0 %v497
  %v795 = vpop.f32.mrb[0].mxu0
  %v796 = vadd.f32 %v404, %v795
  %v797 = vpop.f32.mrb[0].mxu0
  %v798 = vadd.f32 %v406, %v797
  %v799 = vpop.f32.mrb[0].mxu0
  %v800 = vadd.f32 %v408, %v799
  %v801 = vpop.f32.mrb[0].mxu0
  %v802 = vadd.f32 %v410, %v801
  %803 = vmatprep.mubr.bf16.mxu0 0
  %804 = vmatmul.mubr.bf16.gmra.mrb[0].mxu0 %v500
  %v805 = vpop.f32.mrb[0].mxu0
  %v806 = vadd.f32 %v414, %v805
  %v807 = vpop.f32.mrb[0].mxu0
  %v808 = vadd.f32 %v416, %v807
  %v809 = vpop.f32.mrb[0].mxu0
  %v810 = vadd.f32 %v418, %v809
  %v811 = vpop.f32.mrb[0].mxu0
  %v812 = vadd.f32 %v420, %v811
  %813 = vmatprep.mubr.bf16.mxu0 0
  %814 = vmatmul.mubr.bf16.gmra.mrb[0].mxu0 %v503
  %v815 = vpop.f32.mrb[0].mxu0
  %v816 = vadd.f32 %v424, %v815
  %v817 = vpop.f32.mrb[0].mxu0
  %v818 = vadd.f32 %v426, %v817
  %v819 = vpop.f32.mrb[0].mxu0
  %v820 = vadd.f32 %v428, %v819
  %v821 = vpop.f32.mrb[0].mxu0
  %v822 = vadd.f32 %v430, %v821
  %823 = vdwg.mxu0
  %v824 = vpack.c.bf16 %v571, %v567
  %v825 = vpack.c.bf16 %v573, %v569
  %v826 = vpack.c.bf16 %v644, %v640
  %v827 = vpack.c.bf16 %v646, %v642
  %v828 = vpack.c.bf16 %v717, %v713
  %v829 = vpack.c.bf16 %v719, %v715
  %v830 = vpack.c.bf16 %v790, %v786
  %v831 = vpack.c.bf16 %v792, %v788
  %v832 = vpack.c.bf16 %v581, %v577
  %v833 = vpack.c.bf16 %v583, %v579
  %v834 = vpack.c.bf16 %v654, %v650
  %v835 = vpack.c.bf16 %v656, %v652
  %v836 = vpack.c.bf16 %v727, %v723
  %v837 = vpack.c.bf16 %v729, %v725
  %v838 = vpack.c.bf16 %v800, %v796
  %v839 = vpack.c.bf16 %v802, %v798
  %v840 = vpack.c.bf16 %v591, %v587
  %v841 = vpack.c.bf16 %v593, %v589
  %v842 = vpack.c.bf16 %v664, %v660
  %v843 = vpack.c.bf16 %v666, %v662
  %v844 = vpack.c.bf16 %v737, %v733
  %v845 = vpack.c.bf16 %v739, %v735
  %v846 = vpack.c.bf16 %v810, %v806
  %v847 = vpack.c.bf16 %v812, %v808
  %v848 = vpack.c.bf16 %v601, %v597
  %v849 = vpack.c.bf16 %v603, %v599
  %v850 = vpack.c.bf16 %v674, %v670
  %v851 = vpack.c.bf16 %v676, %v672
  %v852 = vpack.c.bf16 %v747, %v743
  %v853 = vpack.c.bf16 %v749, %v745
  %v854 = vpack.c.bf16 %v820, %v816
  %v855 = vpack.c.bf16 %v822, %v818
  %v856 = vld [vmem:[%s4] sm:$0xff]
  %v858 = vcombine.high %v856, %v856
  %v860 = vunpack.c.l.s4 1966171168
  %v861 = vunpack.c.0.s8 %v860
  %v862 = vlaneseq
  %v863 = vshrl.u32 %v862, 7
  %v864 = vsub.s32 %v861, %v863
  %v865 = vrot.slane %v856, %v864
  %v867 = vunpack.c.l.s4 1966171168
  %v868 = vunpack.c.0.s8 %v867
  %v869 = vlaneseq
  %v870 = vshrl.u32 %v869, 7
  %v871 = vsub.s32 %v868, %v870
  %v872 = vrot.slane %v858, %v871
  %v873 = vcombine.high %v865, %v865
  %v874 = vcombine.high %v872, %v872
  %v876 = vunpack.c.l.s4 1966171168
  %v877 = vunpack.c.0.s8 %v876
  %v878 = vlaneseq
  %v879 = vshrl.u32 %v878, 7
  %v880 = vsub.s32 %v877, %v879
  %v881 = vrot.slane %v865, %v880
  %v883 = vunpack.c.l.s4 1966171168
  %v884 = vunpack.c.0.s8 %v883
  %v885 = vlaneseq
  %v886 = vshrl.u32 %v885, 7
  %v887 = vsub.s32 %v884, %v886
  %v888 = vrot.slane %v872, %v887
  %v890 = vunpack.c.l.s4 1966171168
  %v891 = vunpack.c.0.s8 %v890
  %v892 = vlaneseq
  %v893 = vshrl.u32 %v892, 7
  %v894 = vsub.s32 %v891, %v893
  %v895 = vrot.slane %v873, %v894
  %v897 = vunpack.c.l.s4 1966171168
  %v898 = vunpack.c.0.s8 %v897
  %v899 = vlaneseq
  %v900 = vshrl.u32 %v899, 7
  %v901 = vsub.s32 %v898, %v900
  %v902 = vrot.slane %v874, %v901
  %v903 = vcombine.high %v881, %v881
  %v904 = vcombine.high %v888, %v888
  %v905 = vcombine.high %v895, %v895
  %v906 = vcombine.high %v902, %v902
  %v908 = vpack.i.b16 %v881, %v881
  %v910 = vlaneseq
  %v911 = vshrl.u32 %v910, 7
  %v912 = vsub.s32 0, %v911
  %v913 = vrot.slane %v908, %v912
  %v915 = vpack.i.b16 %v895, %v895
  %v917 = vlaneseq
  %v918 = vshrl.u32 %v917, 7
  %v919 = vsub.s32 0, %v918
  %v920 = vrot.slane %v915, %v919
  %v922 = vpack.i.b16 %v903, %v903
  %v924 = vlaneseq
  %v925 = vshrl.u32 %v924, 7
  %v926 = vsub.s32 0, %v925
  %v927 = vrot.slane %v922, %v926
  %v929 = vpack.i.b16 %v905, %v905
  %v931 = vlaneseq
  %v932 = vshrl.u32 %v931, 7
  %v933 = vsub.s32 0, %v932
  %v934 = vrot.slane %v929, %v933
  %v936 = vpack.i.b16 %v888, %v888
  %v938 = vlaneseq
  %v939 = vshrl.u32 %v938, 7
  %v940 = vsub.s32 0, %v939
  %v941 = vrot.slane %v936, %v940
  %v943 = vpack.i.b16 %v902, %v902
  %v945 = vlaneseq
  %v946 = vshrl.u32 %v945, 7
  %v947 = vsub.s32 0, %v946
  %v948 = vrot.slane %v943, %v947
  %v950 = vpack.i.b16 %v904, %v904
  %v952 = vlaneseq
  %v953 = vshrl.u32 %v952, 7
  %v954 = vsub.s32 0, %v953
  %v955 = vrot.slane %v950, %v954
  %v957 = vpack.i.b16 %v906, %v906
  %v959 = vlaneseq
  %v960 = vshrl.u32 %v959, 7
  %v961 = vsub.s32 0, %v960
  %v962 = vrot.slane %v957, %v961
  %v963 = vadd.bf16 %v824, %v913
  %v964 = vadd.bf16 %v825, %v920
  %v965 = vadd.bf16 %v826, %v927
  %v966 = vadd.bf16 %v827, %v934
  %v967 = vadd.bf16 %v828, %v941
  %v968 = vadd.bf16 %v829, %v948
  %v969 = vadd.bf16 %v830, %v955
  %v970 = vadd.bf16 %v831, %v962
  %v971 = vadd.bf16 %v832, %v913
  %v972 = vadd.bf16 %v833, %v920
  %v973 = vadd.bf16 %v834, %v927
  %v974 = vadd.bf16 %v835, %v934
  %v975 = vadd.bf16 %v836, %v941
  %v976 = vadd.bf16 %v837, %v948
  %v977 = vadd.bf16 %v838, %v955
  %v978 = vadd.bf16 %v839, %v962
  %v979 = vadd.bf16 %v840, %v913
  %v980 = vadd.bf16 %v841, %v920
  %v981 = vadd.bf16 %v842, %v927
  %v982 = vadd.bf16 %v843, %v934
  %v983 = vadd.bf16 %v844, %v941
  %v984 = vadd.bf16 %v845, %v948
  %v985 = vadd.bf16 %v846, %v955
  %v986 = vadd.bf16 %v847, %v962
  %v987 = vadd.bf16 %v848, %v913
  %v988 = vadd.bf16 %v849, %v920
  %v989 = vadd.bf16 %v850, %v927
  %v990 = vadd.bf16 %v851, %v934
  %v991 = vadd.bf16 %v852, %v941
  %v992 = vadd.bf16 %v853, %v948
  %v993 = vadd.bf16 %v854, %v955
  %v994 = vadd.bf16 %v855, %v962
  %v995 = vtanh.bf16.pop %v963
  %v996 = vtanh.bf16.pop %v964
  %v997 = vtanh.bf16.pop %v965
  %v998 = vtanh.bf16.pop %v966
  %v999 = vtanh.bf16.pop %v967
  %v1000 = vtanh.bf16.pop %v968
  %v1001 = vtanh.bf16.pop %v969
  %v1002 = vtanh.bf16.pop %v970
  %v1003 = vtanh.bf16.pop %v971
  %v1004 = vtanh.bf16.pop %v972
  %v1005 = vtanh.bf16.pop %v973
  %v1006 = vtanh.bf16.pop %v974
  %v1007 = vtanh.bf16.pop %v975
  %v1008 = vtanh.bf16.pop %v976
  %v1009 = vtanh.bf16.pop %v977
  %v1010 = vtanh.bf16.pop %v978
  %v1011 = vtanh.bf16.pop %v979
  %v1012 = vtanh.bf16.pop %v980
  %v1013 = vtanh.bf16.pop %v981
  %v1014 = vtanh.bf16.pop %v982
  %v1015 = vtanh.bf16.pop %v983
  %v1016 = vtanh.bf16.pop %v984
  %v1017 = vtanh.bf16.pop %v985
  %v1018 = vtanh.bf16.pop %v986
  %v1019 = vtanh.bf16.pop %v987
  %v1020 = vtanh.bf16.pop %v988
  %v1021 = vtanh.bf16.pop %v989
  %v1022 = vtanh.bf16.pop %v990
  %v1023 = vtanh.bf16.pop %v991
  %v1024 = vtanh.bf16.pop %v992
  %v1025 = vtanh.bf16.pop %v993
  %v1026 = vtanh.bf16.pop %v994
  %v1027 = vld [vmem:[%s5] sm:$0xff]
  %v1028 = vld [vmem:[%s5 + $0x8] sm:$0xff]
  %v1029 = vld [vmem:[%s5 + $0x10] sm:$0xff]
  %v1030 = vld [vmem:[%s5 + $0x18] sm:$0xff]
  %v1031 = vld [vmem:[%s5 + $0x20] sm:$0xff]
  %v1032 = vld [vmem:[%s5 + $0x28] sm:$0xff]
  %v1033 = vld [vmem:[%s5 + $0x30] sm:$0xff]
  %v1034 = vld [vmem:[%s5 + $0x38] sm:$0xff]
  %v1035 = vld [vmem:[%s5 + $0x40] sm:$0xff]
  %v1036 = vld [vmem:[%s5 + $0x48] sm:$0xff]
  %v1037 = vld [vmem:[%s5 + $0x50] sm:$0xff]
  %v1038 = vld [vmem:[%s5 + $0x58] sm:$0xff]
  %v1039 = vld [vmem:[%s5 + $0x60] sm:$0xff]
  %v1040 = vld [vmem:[%s5 + $0x68] sm:$0xff]
  %v1041 = vld [vmem:[%s5 + $0x70] sm:$0xff]
  %v1042 = vld [vmem:[%s5 + $0x78] sm:$0xff]
  %v1043 = vld [vmem:[%s5 + $0x80] sm:$0xff]
  %v1044 = vld [vmem:[%s5 + $0x88] sm:$0xff]
  %v1045 = vld [vmem:[%s5 + $0x90] sm:$0xff]
  %v1046 = vld [vmem:[%s5 + $0x98] sm:$0xff]
  %v1047 = vld [vmem:[%s5 + $0xa0] sm:$0xff]
  %v1048 = vld [vmem:[%s5 + $0xa8] sm:$0xff]
  %v1049 = vld [vmem:[%s5 + $0xb0] sm:$0xff]
  %v1050 = vld [vmem:[%s5 + $0xb8] sm:$0xff]
  %v1051 = vld [vmem:[%s5 + $0xc0] sm:$0xff]
  %v1052 = vld [vmem:[%s5 + $0xc8] sm:$0xff]
  %v1053 = vld [vmem:[%s5 + $0xd0] sm:$0xff]
  %v1054 = vld [vmem:[%s5 + $0xd8] sm:$0xff]
  %v1055 = vld [vmem:[%s5 + $0xe0] sm:$0xff]
  %v1056 = vld [vmem:[%s5 + $0xe8] sm:$0xff]
  %v1057 = vld [vmem:[%s5 + $0xf0] sm:$0xff]
  %v1058 = vld [vmem:[%s5 + $0xf8] sm:$0xff]
  %v1059 = vld [vmem:[%s5 + $0x100] sm:$0xff]
  %v1060 = vld [vmem:[%s5 + $0x108] sm:$0xff]
  %v1061 = vld [vmem:[%s5 + $0x110] sm:$0xff]
  %v1062 = vld [vmem:[%s5 + $0x118] sm:$0xff]
  %v1063 = vld [vmem:[%s5 + $0x120] sm:$0xff]
  %v1064 = vld [vmem:[%s5 + $0x128] sm:$0xff]
  %v1065 = vld [vmem:[%s5 + $0x130] sm:$0xff]
  %v1066 = vld [vmem:[%s5 + $0x138] sm:$0xff]
  %v1067 = vld [vmem:[%s5 + $0x140] sm:$0xff]
  %v1068 = vld [vmem:[%s5 + $0x148] sm:$0xff]
  %v1069 = vld [vmem:[%s5 + $0x150] sm:$0xff]
  %v1070 = vld [vmem:[%s5 + $0x158] sm:$0xff]
  %v1071 = vld [vmem:[%s5 + $0x160] sm:$0xff]
  %v1072 = vld [vmem:[%s5 + $0x168] sm:$0xff]
  %v1073 = vld [vmem:[%s5 + $0x170] sm:$0xff]
  %v1074 = vld [vmem:[%s5 + $0x178] sm:$0xff]
  %v1075 = vld [vmem:[%s5 + $0x180] sm:$0xff]
  %v1076 = vld [vmem:[%s5 + $0x188] sm:$0xff]
  %v1077 = vld [vmem:[%s5 + $0x190] sm:$0xff]
  %v1078 = vld [vmem:[%s5 + $0x198] sm:$0xff]
  %v1079 = vld [vmem:[%s5 + $0x1a0] sm:$0xff]
  %v1080 = vld [vmem:[%s5 + $0x1a8] sm:$0xff]
  %v1081 = vld [vmem:[%s5 + $0x1b0] sm:$0xff]
  %v1082 = vld [vmem:[%s5 + $0x1b8] sm:$0xff]
  %v1083 = vld [vmem:[%s5 + $0x1c0] sm:$0xff]
  %v1084 = vld [vmem:[%s5 + $0x1c8] sm:$0xff]
  %v1085 = vld [vmem:[%s5 + $0x1d0] sm:$0xff]
  %v1086 = vld [vmem:[%s5 + $0x1d8] sm:$0xff]
  %v1087 = vld [vmem:[%s5 + $0x1e0] sm:$0xff]
  %v1088 = vld [vmem:[%s5 + $0x1e8] sm:$0xff]
  %v1089 = vld [vmem:[%s5 + $0x1f0] sm:$0xff]
  %v1090 = vld [vmem:[%s5 + $0x1f8] sm:$0xff]
  %v1091 = vld [vmem:[%s5 + $0x200] sm:$0xff]
  %v1092 = vld [vmem:[%s5 + $0x208] sm:$0xff]
  %v1093 = vld [vmem:[%s5 + $0x210] sm:$0xff]
  %v1094 = vld [vmem:[%s5 + $0x218] sm:$0xff]
  %v1095 = vld [vmem:[%s5 + $0x220] sm:$0xff]
  %v1096 = vld [vmem:[%s5 + $0x228] sm:$0xff]
  %v1097 = vld [vmem:[%s5 + $0x230] sm:$0xff]
  %v1098 = vld [vmem:[%s5 + $0x238] sm:$0xff]
  %v1099 = vld [vmem:[%s5 + $0x240] sm:$0xff]
  %v1100 = vld [vmem:[%s5 + $0x248] sm:$0xff]
  %v1101 = vld [vmem:[%s5 + $0x250] sm:$0xff]
  %v1102 = vld [vmem:[%s5 + $0x258] sm:$0xff]
  %v1103 = vld [vmem:[%s5 + $0x260] sm:$0xff]
  %v1104 = vld [vmem:[%s5 + $0x268] sm:$0xff]
  %v1105 = vld [vmem:[%s5 + $0x270] sm:$0xff]
  %v1106 = vld [vmem:[%s5 + $0x278] sm:$0xff]
  %v1107 = vld [vmem:[%s5 + $0x280] sm:$0xff]
  %v1108 = vld [vmem:[%s5 + $0x288] sm:$0xff]
  %v1109 = vld [vmem:[%s5 + $0x290] sm:$0xff]
  %v1110 = vld [vmem:[%s5 + $0x298] sm:$0xff]
  %v1111 = vld [vmem:[%s5 + $0x2a0] sm:$0xff]
  %v1112 = vld [vmem:[%s5 + $0x2a8] sm:$0xff]
  %v1113 = vld [vmem:[%s5 + $0x2b0] sm:$0xff]
  %v1114 = vld [vmem:[%s5 + $0x2b8] sm:$0xff]
  %v1115 = vld [vmem:[%s5 + $0x2c0] sm:$0xff]
  %v1116 = vld [vmem:[%s5 + $0x2c8] sm:$0xff]
  %v1117 = vld [vmem:[%s5 + $0x2d0] sm:$0xff]
  %v1118 = vld [vmem:[%s5 + $0x2d8] sm:$0xff]
  %v1119 = vld [vmem:[%s5 + $0x2e0] sm:$0xff]
  %v1120 = vld [vmem:[%s5 + $0x2e8] sm:$0xff]
  %v1121 = vld [vmem:[%s5 + $0x2f0] sm:$0xff]
  %v1122 = vld [vmem:[%s5 + $0x2f8] sm:$0xff]
  %v1123 = vld [vmem:[%s5 + $0x300] sm:$0xff]
  %v1124 = vld [vmem:[%s5 + $0x308] sm:$0xff]
  %v1125 = vld [vmem:[%s5 + $0x310] sm:$0xff]
  %v1126 = vld [vmem:[%s5 + $0x318] sm:$0xff]
  %v1227 = vunpack.c.l.b16 %v1027
  %v1228 = vunpack.c.h.b16 %v1027
  %v1229 = vunpack.c.l.b16 %v1028
  %v1230 = vunpack.c.h.b16 %v1028
  %v1231 = vunpack.c.l.b16 %v1029
  %v1232 = vunpack.c.h.b16 %v1029
  %v1233 = vunpack.c.l.b16 %v1030
  %v1234 = vunpack.c.h.b16 %v1030
  %v1235 = vunpack.c.l.b16 %v1031
  %v1236 = vunpack.c.h.b16 %v1031
  %v1237 = vunpack.c.l.b16 %v1032
  %v1238 = vunpack.c.h.b16 %v1032
  %v1239 = vunpack.c.l.b16 %v1033
  %v1240 = vunpack.c.h.b16 %v1033
  %v1241 = vunpack.c.l.b16 %v1034
  %v1242 = vunpack.c.h.b16 %v1034
  %v1243 = vunpack.c.l.b16 %v1035
  %v1244 = vunpack.c.h.b16 %v1035
  %v1245 = vunpack.c.l.b16 %v1036
  %v1246 = vunpack.c.h.b16 %v1036
  %v1247 = vunpack.c.l.b16 %v1037
  %v1248 = vunpack.c.h.b16 %v1037
  %v1249 = vunpack.c.l.b16 %v1038
  %v1250 = vunpack.c.h.b16 %v1038
  %v1251 = vunpack.c.l.b16 %v1039
  %v1252 = vunpack.c.h.b16 %v1039
  %v1253 = vunpack.c.l.b16 %v1040
  %v1254 = vunpack.c.h.b16 %v1040
  %v1255 = vunpack.c.l.b16 %v1041
  %v1256 = vunpack.c.h.b16 %v1041
  %v1257 = vunpack.c.l.b16 %v1042
  %v1258 = vunpack.c.h.b16 %v1042
  %v1259 = vunpack.c.l.b16 %v1043
  %v1260 = vunpack.c.h.b16 %v1043
  %v1261 = vunpack.c.l.b16 %v1044
  %v1262 = vunpack.c.h.b16 %v1044
  %v1263 = vunpack.c.l.b16 %v1045
  %v1264 = vunpack.c.h.b16 %v1045
  %v1265 = vunpack.c.l.b16 %v1046
  %v1266 = vunpack.c.h.b16 %v1046
  %v1267 = vunpack.c.l.b16 %v1047
  %v1268 = vunpack.c.h.b16 %v1047
  %v1269 = vunpack.c.l.b16 %v1048
  %v1270 = vunpack.c.h.b16 %v1048
  %v1271 = vunpack.c.l.b16 %v1049
  %v1272 = vunpack.c.h.b16 %v1049
  %v1273 = vunpack.c.l.b16 %v1050
  %v1274 = vunpack.c.h.b16 %v1050
  %v1275 = vunpack.c.l.b16 %v1051
  %v1276 = vunpack.c.h.b16 %v1051
  %v1277 = vunpack.c.l.b16 %v1052
  %v1278 = vunpack.c.h.b16 %v1052
  %v1279 = vunpack.c.l.b16 %v1053
  %v1280 = vunpack.c.h.b16 %v1053
  %v1281 = vunpack.c.l.b16 %v1054
  %v1282 = vunpack.c.h.b16 %v1054
  %v1283 = vunpack.c.l.b16 %v1055
  %v1284 = vunpack.c.h.b16 %v1055
  %v1285 = vunpack.c.l.b16 %v1056
  %v1286 = vunpack.c.h.b16 %v1056
  %v1287 = vunpack.c.l.b16 %v1057
  %v1288 = vunpack.c.h.b16 %v1057
  %v1289 = vunpack.c.l.b16 %v1058
  %v1290 = vunpack.c.h.b16 %v1058
  %v1291 = vunpack.c.l.b16 %v1059
  %v1292 = vunpack.c.h.b16 %v1059
  %v1293 = vunpack.c.l.b16 %v1060
  %v1294 = vunpack.c.h.b16 %v1060
  %v1295 = vunpack.c.l.b16 %v1061
  %v1296 = vunpack.c.h.b16 %v1061
  %v1297 = vunpack.c.l.b16 %v1062
  %v1298 = vunpack.c.h.b16 %v1062
  %v1299 = vunpack.c.l.b16 %v1063
  %v1300 = vunpack.c.h.b16 %v1063
  %v1301 = vunpack.c.l.b16 %v1064
  %v1302 = vunpack.c.h.b16 %v1064
  %v1303 = vunpack.c.l.b16 %v1065
  %v1304 = vunpack.c.h.b16 %v1065
  %v1305 = vunpack.c.l.b16 %v1066
  %v1306 = vunpack.c.h.b16 %v1066
  %v1307 = vunpack.c.l.b16 %v1067
  %v1308 = vunpack.c.h.b16 %v1067
  %v1309 = vunpack.c.l.b16 %v1068
  %v1310 = vunpack.c.h.b16 %v1068
  %v1311 = vunpack.c.l.b16 %v1069
  %v1312 = vunpack.c.h.b16 %v1069
  %v1313 = vunpack.c.l.b16 %v1070
  %v1314 = vunpack.c.h.b16 %v1070
  %v1315 = vunpack.c.l.b16 %v1071
  %v1316 = vunpack.c.h.b16 %v1071
  %v1317 = vunpack.c.l.b16 %v1072
  %v1318 = vunpack.c.h.b16 %v1072
  %v1319 = vunpack.c.l.b16 %v1073
  %v1320 = vunpack.c.h.b16 %v1073
  %v1321 = vunpack.c.l.b16 %v1074
  %v1322 = vunpack.c.h.b16 %v1074
  %v1323 = vunpack.c.l.b16 %v1075
  %v1324 = vunpack.c.h.b16 %v1075
  %v1325 = vunpack.c.l.b16 %v1076
  %v1326 = vunpack.c.h.b16 %v1076
  %v1327 = vunpack.c.l.b16 %v1077
  %v1328 = vunpack.c.h.b16 %v1077
  %v1329 = vunpack.c.l.b16 %v1078
  %v1330 = vunpack.c.h.b16 %v1078
  %v1331 = vunpack.c.l.b16 %v1079
  %v1332 = vunpack.c.h.b16 %v1079
  %v1333 = vunpack.c.l.b16 %v1080
  %v1334 = vunpack.c.h.b16 %v1080
  %v1335 = vunpack.c.l.b16 %v1081
  %v1336 = vunpack.c.h.b16 %v1081
  %v1337 = vunpack.c.l.b16 %v1082
  %v1338 = vunpack.c.h.b16 %v1082
  %v1339 = vunpack.c.l.b16 %v1083
  %v1340 = vunpack.c.h.b16 %v1083
  %v1341 = vunpack.c.l.b16 %v1084
  %v1342 = vunpack.c.h.b16 %v1084
  %v1343 = vunpack.c.l.b16 %v1085
  %v1344 = vunpack.c.h.b16 %v1085
  %v1345 = vunpack.c.l.b16 %v1086
  %v1346 = vunpack.c.h.b16 %v1086
  %v1347 = vunpack.c.l.b16 %v1087
  %v1348 = vunpack.c.h.b16 %v1087
  %v1349 = vunpack.c.l.b16 %v1088
  %v1350 = vunpack.c.h.b16 %v1088
  %v1351 = vunpack.c.l.b16 %v1089
  %v1352 = vunpack.c.h.b16 %v1089
  %v1353 = vunpack.c.l.b16 %v1090
  %v1354 = vunpack.c.h.b16 %v1090
  %v1355 = vunpack.c.l.b16 %v1091
  %v1356 = vunpack.c.h.b16 %v1091
  %v1357 = vunpack.c.l.b16 %v1092
  %v1358 = vunpack.c.h.b16 %v1092
  %v1359 = vunpack.c.l.b16 %v1093
  %v1360 = vunpack.c.h.b16 %v1093
  %v1361 = vunpack.c.l.b16 %v1094
  %v1362 = vunpack.c.h.b16 %v1094
  %v1363 = vunpack.c.l.b16 %v1095
  %v1364 = vunpack.c.h.b16 %v1095
  %v1365 = vunpack.c.l.b16 %v1096
  %v1366 = vunpack.c.h.b16 %v1096
  %v1367 = vunpack.c.l.b16 %v1097
  %v1368 = vunpack.c.h.b16 %v1097
  %v1369 = vunpack.c.l.b16 %v1098
  %v1370 = vunpack.c.h.b16 %v1098
  %v1371 = vunpack.c.l.b16 %v1099
  %v1372 = vunpack.c.h.b16 %v1099
  %v1373 = vunpack.c.l.b16 %v1100
  %v1374 = vunpack.c.h.b16 %v1100
  %v1375 = vunpack.c.l.b16 %v1101
  %v1376 = vunpack.c.h.b16 %v1101
  %v1377 = vunpack.c.l.b16 %v1102
  %v1378 = vunpack.c.h.b16 %v1102
  %v1379 = vunpack.c.l.b16 %v1103
  %v1380 = vunpack.c.h.b16 %v1103
  %v1381 = vunpack.c.l.b16 %v1104
  %v1382 = vunpack.c.h.b16 %v1104
  %v1383 = vunpack.c.l.b16 %v1105
  %v1384 = vunpack.c.h.b16 %v1105
  %v1385 = vunpack.c.l.b16 %v1106
  %v1386 = vunpack.c.h.b16 %v1106
  %v1387 = vunpack.c.l.b16 %v1107
  %v1388 = vunpack.c.h.b16 %v1107
  %v1389 = vunpack.c.l.b16 %v1108
  %v1390 = vunpack.c.h.b16 %v1108
  %v1391 = vunpack.c.l.b16 %v1109
  %v1392 = vunpack.c.h.b16 %v1109
  %v1393 = vunpack.c.l.b16 %v1110
  %v1394 = vunpack.c.h.b16 %v1110
  %v1395 = vunpack.c.l.b16 %v1111
  %v1396 = vunpack.c.h.b16 %v1111
  %v1397 = vunpack.c.l.b16 %v1112
  %v1398 = vunpack.c.h.b16 %v1112
  %v1399 = vunpack.c.l.b16 %v1113
  %v1400 = vunpack.c.h.b16 %v1113
  %v1401 = vunpack.c.l.b16 %v1114
  %v1402 = vunpack.c.h.b16 %v1114
  %v1403 = vunpack.c.l.b16 %v1115
  %v1404 = vunpack.c.h.b16 %v1115
  %v1405 = vunpack.c.l.b16 %v1116
  %v1406 = vunpack.c.h.b16 %v1116
  %v1407 = vunpack.c.l.b16 %v1117
  %v1408 = vunpack.c.h.b16 %v1117
  %v1409 = vunpack.c.l.b16 %v1118
  %v1410 = vunpack.c.h.b16 %v1118
  %v1411 = vunpack.c.l.b16 %v1119
  %v1412 = vunpack.c.h.b16 %v1119
  %v1413 = vunpack.c.l.b16 %v1120
  %v1414 = vunpack.c.h.b16 %v1120
  %v1415 = vunpack.c.l.b16 %v1121
  %v1416 = vunpack.c.h.b16 %v1121
  %v1417 = vunpack.c.l.b16 %v1122
  %v1418 = vunpack.c.h.b16 %v1122
  %v1419 = vunpack.c.l.b16 %v1123
  %v1420 = vunpack.c.h.b16 %v1123
  %v1421 = vunpack.c.l.b16 %v1124
  %v1422 = vunpack.c.h.b16 %v1124
  %v1423 = vunpack.c.l.b16 %v1125
  %v1424 = vunpack.c.h.b16 %v1125
  %v1425 = vunpack.c.l.b16 %v1126
  %v1426 = vunpack.c.h.b16 %v1126
  %v1427 = vpack.c.b16 %v1231, %v1227
  %v1428 = vpack.c.b16 %v1232, %v1228
  %v1429 = vpack.c.b16 %v1233, %v1229
  %v1430 = vpack.c.b16 %v1234, %v1230
  %v1431 = vpack.c.b16 %v1239, %v1235
  %v1432 = vpack.c.b16 %v1240, %v1236
  %v1433 = vpack.c.b16 %v1241, %v1237
  %v1434 = vpack.c.b16 %v1242, %v1238
  %v1435 = vpack.c.b16 %v1247, %v1243
  %v1436 = vpack.c.b16 %v1248, %v1244
  %v1437 = vpack.c.b16 %v1249, %v1245
  %v1438 = vpack.c.b16 %v1250, %v1246
  %v1439 = vpack.c.b16 %v1255, %v1251
  %v1440 = vpack.c.b16 %v1256, %v1252
  %v1441 = vpack.c.b16 %v1257, %v1253
  %v1442 = vpack.c.b16 %v1258, %v1254
  %v1443 = vpack.c.b16 %v1263, %v1259
  %v1444 = vpack.c.b16 %v1264, %v1260
  %v1445 = vpack.c.b16 %v1265, %v1261
  %v1446 = vpack.c.b16 %v1266, %v1262
  %v1447 = vpack.c.b16 %v1271, %v1267
  %v1448 = vpack.c.b16 %v1272, %v1268
  %v1449 = vpack.c.b16 %v1273, %v1269
  %v1450 = vpack.c.b16 %v1274, %v1270
  %v1451 = vpack.c.b16 %v1279, %v1275
  %v1452 = vpack.c.b16 %v1280, %v1276
  %v1453 = vpack.c.b16 %v1281, %v1277
  %v1454 = vpack.c.b16 %v1282, %v1278
  %v1455 = vpack.c.b16 %v1287, %v1283
  %v1456 = vpack.c.b16 %v1288, %v1284
  %v1457 = vpack.c.b16 %v1289, %v1285
  %v1458 = vpack.c.b16 %v1290, %v1286
  %v1459 = vpack.c.b16 %v1295, %v1291
  %v1460 = vpack.c.b16 %v1296, %v1292
  %v1461 = vpack.c.b16 %v1297, %v1293
  %v1462 = vpack.c.b16 %v1298, %v1294
  %v1463 = vpack.c.b16 %v1303, %v1299
  %v1464 = vpack.c.b16 %v1304, %v1300
  %v1465 = vpack.c.b16 %v1305, %v1301
  %v1466 = vpack.c.b16 %v1306, %v1302
  %v1467 = vpack.c.b16 %v1311, %v1307
  %v1468 = vpack.c.b16 %v1312, %v1308
  %v1469 = vpack.c.b16 %v1313, %v1309
  %v1470 = vpack.c.b16 %v1314, %v1310
  %v1471 = vpack.c.b16 %v1319, %v1315
  %v1472 = vpack.c.b16 %v1320, %v1316
  %v1473 = vpack.c.b16 %v1321, %v1317
  %v1474 = vpack.c.b16 %v1322, %v1318
  %v1475 = vpack.c.b16 %v1327, %v1323
  %v1476 = vpack.c.b16 %v1328, %v1324
  %v1477 = vpack.c.b16 %v1329, %v1325
  %v1478 = vpack.c.b16 %v1330, %v1326
  %v1479 = vpack.c.b16 %v1335, %v1331
  %v1480 = vpack.c.b16 %v1336, %v1332
  %v1481 = vpack.c.b16 %v1337, %v1333
  %v1482 = vpack.c.b16 %v1338, %v1334
  %v1483 = vpack.c.b16 %v1343, %v1339
  %v1484 = vpack.c.b16 %v1344, %v1340
  %v1485 = vpack.c.b16 %v1345, %v1341
  %v1486 = vpack.c.b16 %v1346, %v1342
  %v1487 = vpack.c.b16 %v1351, %v1347
  %v1488 = vpack.c.b16 %v1352, %v1348
  %v1489 = vpack.c.b16 %v1353, %v1349
  %v1490 = vpack.c.b16 %v1354, %v1350
  %v1491 = vpack.c.b16 %v1359, %v1355
  %v1492 = vpack.c.b16 %v1360, %v1356
  %v1493 = vpack.c.b16 %v1361, %v1357
  %v1494 = vpack.c.b16 %v1362, %v1358
  %v1495 = vpack.c.b16 %v1367, %v1363
  %v1496 = vpack.c.b16 %v1368, %v1364
  %v1497 = vpack.c.b16 %v1369, %v1365
  %v1498 = vpack.c.b16 %v1370, %v1366
  %v1499 = vpack.c.b16 %v1375, %v1371
  %v1500 = vpack.c.b16 %v1376, %v1372
  %v1501 = vpack.c.b16 %v1377, %v1373
  %v1502 = vpack.c.b16 %v1378, %v1374
  %v1503 = vpack.c.b16 %v1383, %v1379
  %v1504 = vpack.c.b16 %v1384, %v1380
  %v1505 = vpack.c.b16 %v1385, %v1381
  %v1506 = vpack.c.b16 %v1386, %v1382
  %v1507 = vpack.c.b16 %v1391, %v1387
  %v1508 = vpack.c.b16 %v1392, %v1388
  %v1509 = vpack.c.b16 %v1393, %v1389
  %v1510 = vpack.c.b16 %v1394, %v1390
  %v1511 = vpack.c.b16 %v1399, %v1395
  %v1512 = vpack.c.b16 %v1400, %v1396
  %v1513 = vpack.c.b16 %v1401, %v1397
  %v1514 = vpack.c.b16 %v1402, %v1398
  %v1515 = vpack.c.b16 %v1407, %v1403
  %v1516 = vpack.c.b16 %v1408, %v1404
  %v1517 = vpack.c.b16 %v1409, %v1405
  %v1518 = vpack.c.b16 %v1410, %v1406
  %v1519 = vpack.c.b16 %v1415, %v1411
  %v1520 = vpack.c.b16 %v1416, %v1412
  %v1521 = vpack.c.b16 %v1417, %v1413
  %v1522 = vpack.c.b16 %v1418, %v1414
  %v1523 = vpack.c.b16 %v1423, %v1419
  %v1524 = vpack.c.b16 %v1424, %v1420
  %v1525 = vpack.c.b16 %v1425, %v1421
  %v1526 = vpack.c.b16 %v1426, %v1422
  %vm1627 = vcmask 130048
  %v1629 = vsel %vm1627, %v998, 0
  %v1632 = vsel %vm1627, %v1006, 0
  %v1635 = vsel %vm1627, %v1014, 0
  %v1638 = vsel %vm1627, %v1022, 0
  %1640 = vmatprep.subr.bf16.mxu0 %v1428
  %1641 = vmatpush1.bf16.msra.mxu0 %v1427
  %1642 = vmatprep.subr.bf16.mxu0 %v1432
  %1643 = vmatpush1.bf16.msra.mxu0 %v1431
  %1644 = vmatprep.subr.bf16.mxu0 %v1436
  %1645 = vmatpush1.bf16.msra.mxu0 %v1435
  %1646 = vmatprep.subr.bf16.mxu0 %v1440
  %1647 = vmatpush1.bf16.msra.mxu0 %v1439
  %1648 = vmatprep.subr.bf16.mxu0 %v1444
  %1649 = vmatpush1.bf16.msra.mxu0 %v1443
  %1650 = vmatprep.subr.bf16.mxu0 %v1448
  %1651 = vmatpush1.bf16.msra.mxu0 %v1447
  %1652 = vmatprep.subr.bf16.mxu0 %v1452
  %1653 = vmatpush1.bf16.msra.mxu0 %v1451
  %1654 = vmatprep.subr.bf16.mxu0 %v1456
  %1655 = vmatpush1.bf16.msra.mxu0 %v1455
  %1656 = vmatprep.subr.bf16.mxu0 %v1460
  %1657 = vmatpush1.bf16.msra.mxu0 %v1459
  %1658 = vmatprep.subr.bf16.mxu0 %v1464
  %1659 = vmatpush1.bf16.msra.mxu0 %v1463
  %1660 = vmatprep.subr.bf16.mxu0 %v1468
  %1661 = vmatpush1.bf16.msra.mxu0 %v1467
  %1662 = vmatprep.subr.bf16.mxu0 %v1472
  %1663 = vmatpush1.bf16.msra.mxu0 %v1471
  %1664 = vmatprep.subr.bf16.mxu0 %v1476
  %1665 = vmatpush1.bf16.msra.mxu0 %v1475
  %1666 = vmatprep.subr.bf16.mxu0 %v1480
  %1667 = vmatpush1.bf16.msra.mxu0 %v1479
  %1668 = vmatprep.subr.bf16.mxu0 %v1484
  %1669 = vmatpush1.bf16.msra.mxu0 %v1483
  %1670 = vmatprep.subr.bf16.mxu0 %v1488
  %1671 = vmatpush1.bf16.msra.mxu0 %v1487
  %1672 = vmatprep.mubr.bf16.mxu0 %v996
  %1673 = vmatmul.mubr.bf16.gmra.mrb[0].mxu0 %v995
  %v1674 = vpop.f32.mrb[0].mxu0
  %v1675 = vadd.f32 0.0, %v1674
  %v1676 = vpop.f32.mrb[0].mxu0
  %v1677 = vadd.f32 0.0, %v1676
  %v1678 = vpop.f32.mrb[0].mxu0
  %v1679 = vadd.f32 0.0, %v1678
  %v1680 = vpop.f32.mrb[0].mxu0
  %v1681 = vadd.f32 0.0, %v1680
  %1682 = vmatprep.mubr.bf16.mxu0 %v1004
  %1683 = vmatmul.mubr.bf16.gmra.mrb[0].mxu0 %v1003
  %v1684 = vpop.f32.mrb[0].mxu0
  %v1685 = vadd.f32 0.0, %v1684
  %v1686 = vpop.f32.mrb[0].mxu0
  %v1687 = vadd.f32 0.0, %v1686
  %v1688 = vpop.f32.mrb[0].mxu0
  %v1689 = vadd.f32 0.0, %v1688
  %v1690 = vpop.f32.mrb[0].mxu0
  %v1691 = vadd.f32 0.0, %v1690
  %1692 = vmatprep.mubr.bf16.mxu0 %v1012
  %1693 = vmatmul.mubr.bf16.gmra.mrb[0].mxu0 %v1011
  %v1694 = vpop.f32.mrb[0].mxu0
  %v1695 = vadd.f32 0.0, %v1694
  %v1696 = vpop.f32.mrb[0].mxu0
  %v1697 = vadd.f32 0.0, %v1696
  %v1698 = vpop.f32.mrb[0].mxu0
  %v1699 = vadd.f32 0.0, %v1698
  %v1700 = vpop.f32.mrb[0].mxu0
  %v1701 = vadd.f32 0.0, %v1700
  %1702 = vmatprep.mubr.bf16.mxu0 %v1020
  %1703 = vmatmul.mubr.bf16.gmra.mrb[0].mxu0 %v1019
  %v1704 = vpop.f32.mrb[0].mxu0
  %v1705 = vadd.f32 0.0, %v1704
  %v1706 = vpop.f32.mrb[0].mxu0
  %v1707 = vadd.f32 0.0, %v1706
  %v1708 = vpop.f32.mrb[0].mxu0
  %v1709 = vadd.f32 0.0, %v1708
  %v1710 = vpop.f32.mrb[0].mxu0
  %v1711 = vadd.f32 0.0, %v1710
  %1712 = vdwg.mxu0
  %1713 = vmatprep.subr.bf16.mxu0 %v1492
  %1714 = vmatpush1.bf16.msra.mxu0 %v1491
  %1715 = vmatprep.subr.bf16.mxu0 %v1496
  %1716 = vmatpush1.bf16.msra.mxu0 %v1495
  %1717 = vmatprep.subr.bf16.mxu0 %v1500
  %1718 = vmatpush1.bf16.msra.mxu0 %v1499
  %1719 = vmatprep.subr.bf16.mxu0 %v1504
  %1720 = vmatpush1.bf16.msra.mxu0 %v1503
  %1721 = vmatprep.subr.bf16.mxu0 %v1508
  %1722 = vmatpush1.bf16.msra.mxu0 %v1507
  %1723 = vmatprep.subr.bf16.mxu0 %v1512
  %1724 = vmatpush1.bf16.msra.mxu0 %v1511
  %1725 = vmatprep.subr.bf16.mxu0 %v1516
  %1726 = vmatpush1.bf16.msra.mxu0 %v1515
  %1727 = vmatprep.subr.bf16.mxu0 %v1520
  %1728 = vmatpush1.bf16.msra.mxu0 %v1519
  %1729 = vmatprep.subr.bf16.mxu0 %v1524
  %1730 = vmatpush1.bf16.msra.mxu0 %v1523
  %1731 = vmatprep.subr.bf16.mxu0 0
  %1732 = vmatpush1.bf16.msra.mxu0 0
  %1733 = vmatprep.subr.bf16.mxu0 0
  %1734 = vmatpush1.bf16.msra.mxu0 0
  %1735 = vmatprep.subr.bf16.mxu0 0
  %1736 = vmatpush1.bf16.msra.mxu0 0
  %1737 = vmatprep.subr.bf16.mxu0 0
  %1738 = vmatpush1.bf16.msra.mxu0 0
  %1739 = vmatprep.subr.bf16.mxu0 0
  %1740 = vmatpush1.bf16.msra.mxu0 0
  %1741 = vmatprep.subr.bf16.mxu0 0
  %1742 = vmatpush1.bf16.msra.mxu0 0
  %1743 = vmatprep.subr.bf16.mxu0 0
  %1744 = vmatpush1.bf16.msra.mxu0 0
  %1745 = vmatprep.mubr.bf16.mxu0 %v1629
  %1746 = vmatmul.mubr.bf16.gmra.mrb[0].mxu0 %v997
  %v1747 = vpop.f32.mrb[0].mxu0
  %v1748 = vadd.f32 %v1675, %v1747
  %v1749 = vpop.f32.mrb[0].mxu0
  %v1750 = vadd.f32 %v1677, %v1749
  %v1751 = vpop.f32.mrb[0].mxu0
  %v1752 = vadd.f32 %v1679, %v1751
  %v1753 = vpop.f32.mrb[0].mxu0
  %v1754 = vadd.f32 %v1681, %v1753
  %1755 = vmatprep.mubr.bf16.mxu0 %v1632
  %1756 = vmatmul.mubr.bf16.gmra.mrb[0].mxu0 %v1005
  %v1757 = vpop.f32.mrb[0].mxu0
  %v1758 = vadd.f32 %v1685, %v1757
  %v1759 = vpop.f32.mrb[0].mxu0
  %v1760 = vadd.f32 %v1687, %v1759
  %v1761 = vpop.f32.mrb[0].mxu0
  %v1762 = vadd.f32 %v1689, %v1761
  %v1763 = vpop.f32.mrb[0].mxu0
  %v1764 = vadd.f32 %v1691, %v1763
  %1765 = vmatprep.mubr.bf16.mxu0 %v1635
  %1766 = vmatmul.mubr.bf16.gmra.mrb[0].mxu0 %v1013
  %v1767 = vpop.f32.mrb[0].mxu0
  %v1768 = vadd.f32 %v1695, %v1767
  %v1769 = vpop.f32.mrb[0].mxu0
  %v1770 = vadd.f32 %v1697, %v1769
  %v1771 = vpop.f32.mrb[0].mxu0
  %v1772 = vadd.f32 %v1699, %v1771
  %v1773 = vpop.f32.mrb[0].mxu0
  %v1774 = vadd.f32 %v1701, %v1773
  %1775 = vmatprep.mubr.bf16.mxu0 %v1638
  %1776 = vmatmul.mubr.bf16.gmra.mrb[0].mxu0 %v1021
  %v1777 = vpop.f32.mrb[0].mxu0
  %v1778 = vadd.f32 %v1705, %v1777
  %v1779 = vpop.f32.mrb[0].mxu0
  %v1780 = vadd.f32 %v1707, %v1779
  %v1781 = vpop.f32.mrb[0].mxu0
  %v1782 = vadd.f32 %v1709, %v1781
  %v1783 = vpop.f32.mrb[0].mxu0
  %v1784 = vadd.f32 %v1711, %v1783
  %1785 = vdwg.mxu0
  %1786 = vmatprep.subr.bf16.mxu0 %v1430
  %1787 = vmatpush1.bf16.msra.mxu0 %v1429
  %1788 = vmatprep.subr.bf16.mxu0 %v1434
  %1789 = vmatpush1.bf16.msra.mxu0 %v1433
  %1790 = vmatprep.subr.bf16.mxu0 %v1438
  %1791 = vmatpush1.bf16.msra.mxu0 %v1437
  %1792 = vmatprep.subr.bf16.mxu0 %v1442
  %1793 = vmatpush1.bf16.msra.mxu0 %v1441
  %1794 = vmatprep.subr.bf16.mxu0 %v1446
  %1795 = vmatpush1.bf16.msra.mxu0 %v1445
  %1796 = vmatprep.subr.bf16.mxu0 %v1450
  %1797 = vmatpush1.bf16.msra.mxu0 %v1449
  %1798 = vmatprep.subr.bf16.mxu0 %v1454
  %1799 = vmatpush1.bf16.msra.mxu0 %v1453
  %1800 = vmatprep.subr.bf16.mxu0 %v1458
  %1801 = vmatpush1.bf16.msra.mxu0 %v1457
  %1802 = vmatprep.subr.bf16.mxu0 %v1462
  %1803 = vmatpush1.bf16.msra.mxu0 %v1461
  %1804 = vmatprep.subr.bf16.mxu0 %v1466
  %1805 = vmatpush1.bf16.msra.mxu0 %v1465
  %1806 = vmatprep.subr.bf16.mxu0 %v1470
  %1807 = vmatpush1.bf16.msra.mxu0 %v1469
  %1808 = vmatprep.subr.bf16.mxu0 %v1474
  %1809 = vmatpush1.bf16.msra.mxu0 %v1473
  %1810 = vmatprep.subr.bf16.mxu0 %v1478
  %1811 = vmatpush1.bf16.msra.mxu0 %v1477
  %1812 = vmatprep.subr.bf16.mxu0 %v1482
  %1813 = vmatpush1.bf16.msra.mxu0 %v1481
  %1814 = vmatprep.subr.bf16.mxu0 %v1486
  %1815 = vmatpush1.bf16.msra.mxu0 %v1485
  %1816 = vmatprep.subr.bf16.mxu0 %v1490
  %1817 = vmatpush1.bf16.msra.mxu0 %v1489
  %1818 = vmatprep.mubr.bf16.mxu0 %v996
  %1819 = vmatmul.mubr.bf16.gmra.mrb[0].mxu0 %v995
  %v1820 = vpop.f32.mrb[0].mxu0
  %v1821 = vadd.f32 0.0, %v1820
  %v1822 = vpop.f32.mrb[0].mxu0
  %v1823 = vadd.f32 0.0, %v1822
  %v1824 = vpop.f32.mrb[0].mxu0
  %v1825 = vadd.f32 0.0, %v1824
  %v1826 = vpop.f32.mrb[0].mxu0
  %v1827 = vadd.f32 0.0, %v1826
  %1828 = vmatprep.mubr.bf16.mxu0 %v1004
  %1829 = vmatmul.mubr.bf16.gmra.mrb[0].mxu0 %v1003
  %v1830 = vpop.f32.mrb[0].mxu0
  %v1831 = vadd.f32 0.0, %v1830
  %v1832 = vpop.f32.mrb[0].mxu0
  %v1833 = vadd.f32 0.0, %v1832
  %v1834 = vpop.f32.mrb[0].mxu0
  %v1835 = vadd.f32 0.0, %v1834
  %v1836 = vpop.f32.mrb[0].mxu0
  %v1837 = vadd.f32 0.0, %v1836
  %1838 = vmatprep.mubr.bf16.mxu0 %v1012
  %1839 = vmatmul.mubr.bf16.gmra.mrb[0].mxu0 %v1011
  %v1840 = vpop.f32.mrb[0].mxu0
  %v1841 = vadd.f32 0.0, %v1840
  %v1842 = vpop.f32.mrb[0].mxu0
  %v1843 = vadd.f32 0.0, %v1842
  %v1844 = vpop.f32.mrb[0].mxu0
  %v1845 = vadd.f32 0.0, %v1844
  %v1846 = vpop.f32.mrb[0].mxu0
  %v1847 = vadd.f32 0.0, %v1846
  %1848 = vmatprep.mubr.bf16.mxu0 %v1020
  %1849 = vmatmul.mubr.bf16.gmra.mrb[0].mxu0 %v1019
  %v1850 = vpop.f32.mrb[0].mxu0
  %v1851 = vadd.f32 0.0, %v1850
  %v1852 = vpop.f32.mrb[0].mxu0
  %v1853 = vadd.f32 0.0, %v1852
  %v1854 = vpop.f32.mrb[0].mxu0
  %v1855 = vadd.f32 0.0, %v1854
  %v1856 = vpop.f32.mrb[0].mxu0
  %v1857 = vadd.f32 0.0, %v1856
  %1858 = vdwg.mxu0
  %1859 = vmatprep.subr.bf16.mxu0 %v1494
  %1860 = vmatpush1.bf16.msra.mxu0 %v1493
  %1861 = vmatprep.subr.bf16.mxu0 %v1498
  %1862 = vmatpush1.bf16.msra.mxu0 %v1497
  %1863 = vmatprep.subr.bf16.mxu0 %v1502
  %1864 = vmatpush1.bf16.msra.mxu0 %v1501
  %1865 = vmatprep.subr.bf16.mxu0 %v1506
  %1866 = vmatpush1.bf16.msra.mxu0 %v1505
  %1867 = vmatprep.subr.bf16.mxu0 %v1510
  %1868 = vmatpush1.bf16.msra.mxu0 %v1509
  %1869 = vmatprep.subr.bf16.mxu0 %v1514
  %1870 = vmatpush1.bf16.msra.mxu0 %v1513
  %1871 = vmatprep.subr.bf16.mxu0 %v1518
  %1872 = vmatpush1.bf16.msra.mxu0 %v1517
  %1873 = vmatprep.subr.bf16.mxu0 %v1522
  %1874 = vmatpush1.bf16.msra.mxu0 %v1521
  %1875 = vmatprep.subr.bf16.mxu0 %v1526
  %1876 = vmatpush1.bf16.msra.mxu0 %v1525
  %1877 = vmatprep.subr.bf16.mxu0 0
  %1878 = vmatpush1.bf16.msra.mxu0 0
  %1879 = vmatprep.subr.bf16.mxu0 0
  %1880 = vmatpush1.bf16.msra.mxu0 0
  %1881 = vmatprep.subr.bf16.mxu0 0
  %1882 = vmatpush1.bf16.msra.mxu0 0
  %1883 = vmatprep.subr.bf16.mxu0 0
  %1884 = vmatpush1.bf16.msra.mxu0 0
  %1885 = vmatprep.subr.bf16.mxu0 0
  %1886 = vmatpush1.bf16.msra.mxu0 0
  %1887 = vmatprep.subr.bf16.mxu0 0
  %1888 = vmatpush1.bf16.msra.mxu0 0
  %1889 = vmatprep.subr.bf16.mxu0 0
  %1890 = vmatpush1.bf16.msra.mxu0 0
  %1891 = vmatprep.mubr.bf16.mxu0 %v1629
  %1892 = vmatmul.mubr.bf16.gmra.mrb[0].mxu0 %v997
  %v1893 = vpop.f32.mrb[0].mxu0
  %v1894 = vadd.f32 %v1821, %v1893
  %v1895 = vpop.f32.mrb[0].mxu0
  %v1896 = vadd.f32 %v1823, %v1895
  %v1897 = vpop.f32.mrb[0].mxu0
  %v1898 = vadd.f32 %v1825, %v1897
  %v1899 = vpop.f32.mrb[0].mxu0
  %v1900 = vadd.f32 %v1827, %v1899
  %1901 = vmatprep.mubr.bf16.mxu0 %v1632
  %1902 = vmatmul.mubr.bf16.gmra.mrb[0].mxu0 %v1005
  %v1903 = vpop.f32.mrb[0].mxu0
  %v1904 = vadd.f32 %v1831, %v1903
  %v1905 = vpop.f32.mrb[0].mxu0
  %v1906 = vadd.f32 %v1833, %v1905
  %v1907 = vpop.f32.mrb[0].mxu0
  %v1908 = vadd.f32 %v1835, %v1907
  %v1909 = vpop.f32.mrb[0].mxu0
  %v1910 = vadd.f32 %v1837, %v1909
  %1911 = vmatprep.mubr.bf16.mxu0 %v1635
  %1912 = vmatmul.mubr.bf16.gmra.mrb[0].mxu0 %v1013
  %v1913 = vpop.f32.mrb[0].mxu0
  %v1914 = vadd.f32 %v1841, %v1913
  %v1915 = vpop.f32.mrb[0].mxu0
  %v1916 = vadd.f32 %v1843, %v1915
  %v1917 = vpop.f32.mrb[0].mxu0
  %v1918 = vadd.f32 %v1845, %v1917
  %v1919 = vpop.f32.mrb[0].mxu0
  %v1920 = vadd.f32 %v1847, %v1919
  %1921 = vmatprep.mubr.bf16.mxu0 %v1638
  %1922 = vmatmul.mubr.bf16.gmra.mrb[0].mxu0 %v1021
  %v1923 = vpop.f32.mrb[0].mxu0
  %v1924 = vadd.f32 %v1851, %v1923
  %v1925 = vpop.f32.mrb[0].mxu0
  %v1926 = vadd.f32 %v1853, %v1925
  %v1927 = vpop.f32.mrb[0].mxu0
  %v1928 = vadd.f32 %v1855, %v1927
  %v1929 = vpop.f32.mrb[0].mxu0
  %v1930 = vadd.f32 %v1857, %v1929
  %1931 = vdwg.mxu0
  %v1932 = vpack.c.bf16 %v1752, %v1748
  %v1933 = vpack.c.bf16 %v1754, %v1750
  %v1934 = vpack.c.bf16 %v1898, %v1894
  %v1935 = vpack.c.bf16 %v1900, %v1896
  %v1936 = vpack.c.bf16 %v1762, %v1758
  %v1937 = vpack.c.bf16 %v1764, %v1760
  %v1938 = vpack.c.bf16 %v1908, %v1904
  %v1939 = vpack.c.bf16 %v1910, %v1906
  %v1940 = vpack.c.bf16 %v1772, %v1768
  %v1941 = vpack.c.bf16 %v1774, %v1770
  %v1942 = vpack.c.bf16 %v1918, %v1914
  %v1943 = vpack.c.bf16 %v1920, %v1916
  %v1944 = vpack.c.bf16 %v1782, %v1778
  %v1945 = vpack.c.bf16 %v1784, %v1780
  %v1946 = vpack.c.bf16 %v1928, %v1924
  %v1947 = vpack.c.bf16 %v1930, %v1926
  %v1948 = vld [vmem:[%s6] sm:$0xf]
  %v1951 = vunpack.c.l.s4 1966171168
  %v1952 = vunpack.c.0.s8 %v1951
  %v1953 = vlaneseq
  %v1954 = vshrl.u32 %v1953, 7
  %v1955 = vsub.s32 %v1952, %v1954
  %v1956 = vrot.slane %v1948, %v1955
  %v1957 = vcombine.high %v1956, %v1956
  %v1959 = vunpack.c.l.s4 1966171168
  %v1960 = vunpack.c.0.s8 %v1959
  %v1961 = vlaneseq
  %v1962 = vshrl.u32 %v1961, 7
  %v1963 = vsub.s32 %v1960, %v1962
  %v1964 = vrot.slane %v1956, %v1963
  %v1966 = vunpack.c.l.s4 1966171168
  %v1967 = vunpack.c.0.s8 %v1966
  %v1968 = vlaneseq
  %v1969 = vshrl.u32 %v1968, 7
  %v1970 = vsub.s32 %v1967, %v1969
  %v1971 = vrot.slane %v1957, %v1970
  %v1972 = vcombine.high %v1964, %v1964
  %v1973 = vcombine.high %v1971, %v1971
  %v1975 = vpack.i.b16 %v1964, %v1964
  %v1977 = vlaneseq
  %v1978 = vshrl.u32 %v1977, 7
  %v1979 = vsub.s32 0, %v1978
  %v1980 = vrot.slane %v1975, %v1979
  %v1982 = vpack.i.b16 %v1971, %v1971
  %v1984 = vlaneseq
  %v1985 = vshrl.u32 %v1984, 7
  %v1986 = vsub.s32 0, %v1985
  %v1987 = vrot.slane %v1982, %v1986
  %v1989 = vpack.i.b16 %v1972, %v1972
  %v1991 = vlaneseq
  %v1992 = vshrl.u32 %v1991, 7
  %v1993 = vsub.s32 0, %v1992
  %v1994 = vrot.slane %v1989, %v1993
  %v1996 = vpack.i.b16 %v1973, %v1973
  %v1998 = vlaneseq
  %v1999 = vshrl.u32 %v1998, 7
  %v2000 = vsub.s32 0, %v1999
  %v2001 = vrot.slane %v1996, %v2000
  %v2002 = vadd.bf16 %v1932, %v1980
  %v2003 = vadd.bf16 %v1933, %v1987
  %v2004 = vadd.bf16 %v1934, %v1994
  %v2005 = vadd.bf16 %v1935, %v2001
  %v2006 = vadd.bf16 %v1936, %v1980
  %v2007 = vadd.bf16 %v1937, %v1987
  %v2008 = vadd.bf16 %v1938, %v1994
  %v2009 = vadd.bf16 %v1939, %v2001
  %v2010 = vadd.bf16 %v1940, %v1980
  %v2011 = vadd.bf16 %v1941, %v1987
  %v2012 = vadd.bf16 %v1942, %v1994
  %v2013 = vadd.bf16 %v1943, %v2001
  %v2014 = vadd.bf16 %v1944, %v1980
  %v2015 = vadd.bf16 %v1945, %v1987
  %v2016 = vadd.bf16 %v1946, %v1994
  %v2017 = vadd.bf16 %v1947, %v2001
  %v2018 = vtanh.bf16.pop %v2002
  %v2019 = vtanh.bf16.pop %v2003
  %v2020 = vtanh.bf16.pop %v2004
  %v2021 = vtanh.bf16.pop %v2005
  %v2022 = vtanh.bf16.pop %v2006
  %v2023 = vtanh.bf16.pop %v2007
  %v2024 = vtanh.bf16.pop %v2008
  %v2025 = vtanh.bf16.pop %v2009
  %v2026 = vtanh.bf16.pop %v2010
  %v2027 = vtanh.bf16.pop %v2011
  %v2028 = vtanh.bf16.pop %v2012
  %v2029 = vtanh.bf16.pop %v2013
  %v2030 = vtanh.bf16.pop %v2014
  %v2031 = vtanh.bf16.pop %v2015
  %v2032 = vtanh.bf16.pop %v2016
  %v2033 = vtanh.bf16.pop %v2017
  %v2034 = vld [vmem:[%s7] sm:$0xff]
  %v2035 = vld [vmem:[%s7 + $0x8] sm:$0xff]
  %v2036 = vld [vmem:[%s7 + $0x10] sm:$0xff]
  %v2037 = vld [vmem:[%s7 + $0x18] sm:$0xff]
  %v2038 = vld [vmem:[%s7 + $0x20] sm:$0xff]
  %v2039 = vld [vmem:[%s7 + $0x28] sm:$0xff]
  %v2040 = vld [vmem:[%s7 + $0x30] sm:$0xff]
  %v2041 = vld [vmem:[%s7 + $0x38] sm:$0xff]
  %v2042 = vld [vmem:[%s7 + $0x40] sm:$0xff]
  %v2043 = vld [vmem:[%s7 + $0x48] sm:$0xff]
  %v2044 = vld [vmem:[%s7 + $0x50] sm:$0xff]
  %v2045 = vld [vmem:[%s7 + $0x58] sm:$0xff]
  %v2046 = vld [vmem:[%s7 + $0x60] sm:$0xff]
  %v2047 = vld [vmem:[%s7 + $0x68] sm:$0xff]
  %v2048 = vld [vmem:[%s7 + $0x70] sm:$0xff]
  %v2049 = vld [vmem:[%s7 + $0x78] sm:$0xff]
  %v2050 = vld [vmem:[%s7 + $0x80] sm:$0xff]
  %v2051 = vld [vmem:[%s7 + $0x88] sm:$0xff]
  %v2052 = vld [vmem:[%s7 + $0x90] sm:$0xff]
  %v2053 = vld [vmem:[%s7 + $0x98] sm:$0xff]
  %v2054 = vld [vmem:[%s7 + $0xa0] sm:$0xff]
  %v2055 = vld [vmem:[%s7 + $0xa8] sm:$0xff]
  %v2056 = vld [vmem:[%s7 + $0xb0] sm:$0xff]
  %v2057 = vld [vmem:[%s7 + $0xb8] sm:$0xff]
  %v2058 = vld [vmem:[%s7 + $0xc0] sm:$0xff]
  %v2059 = vld [vmem:[%s7 + $0xc8] sm:$0xff]
  %v2060 = vld [vmem:[%s7 + $0xd0] sm:$0xff]
  %v2061 = vld [vmem:[%s7 + $0xd8] sm:$0xff]
  %v2062 = vld [vmem:[%s7 + $0xe0] sm:$0xff]
  %v2063 = vld [vmem:[%s7 + $0xe8] sm:$0xff]
  %v2064 = vld [vmem:[%s7 + $0xf0] sm:$0xff]
  %v2065 = vld [vmem:[%s7 + $0xf8] sm:$0xff]
  %v2066 = vld [vmem:[%s7 + $0x100] sm:$0xff]
  %v2067 = vld [vmem:[%s7 + $0x108] sm:$0xff]
  %v2068 = vld [vmem:[%s7 + $0x110] sm:$0xff]
  %v2069 = vld [vmem:[%s7 + $0x118] sm:$0xff]
  %v2070 = vld [vmem:[%s7 + $0x120] sm:$0xff]
  %v2071 = vld [vmem:[%s7 + $0x128] sm:$0xff]
  %v2072 = vld [vmem:[%s7 + $0x130] sm:$0xff]
  %v2073 = vld [vmem:[%s7 + $0x138] sm:$0xff]
  %v2074 = vld [vmem:[%s7 + $0x140] sm:$0xff]
  %v2075 = vld [vmem:[%s7 + $0x148] sm:$0xff]
  %v2076 = vld [vmem:[%s7 + $0x150] sm:$0xff]
  %v2077 = vld [vmem:[%s7 + $0x158] sm:$0xff]
  %v2078 = vld [vmem:[%s7 + $0x160] sm:$0xff]
  %v2079 = vld [vmem:[%s7 + $0x168] sm:$0xff]
  %v2080 = vld [vmem:[%s7 + $0x170] sm:$0xff]
  %v2081 = vld [vmem:[%s7 + $0x178] sm:$0xff]
  %v2082 = vld [vmem:[%s7 + $0x180] sm:$0xff]
  %v2083 = vld [vmem:[%s7 + $0x188] sm:$0xff]
  %v2084 = vld [vmem:[%s7 + $0x190] sm:$0xff]
  %v2085 = vld [vmem:[%s7 + $0x198] sm:$0xff]
  %v2086 = vld [vmem:[%s7 + $0x1a0] sm:$0xff]
  %v2087 = vld [vmem:[%s7 + $0x1a8] sm:$0xff]
  %v2088 = vld [vmem:[%s7 + $0x1b0] sm:$0xff]
  %v2089 = vld [vmem:[%s7 + $0x1b8] sm:$0xff]
  %v2090 = vld [vmem:[%s7 + $0x1c0] sm:$0xff]
  %v2091 = vld [vmem:[%s7 + $0x1c8] sm:$0xff]
  %v2092 = vld [vmem:[%s7 + $0x1d0] sm:$0xff]
  %v2093 = vld [vmem:[%s7 + $0x1d8] sm:$0xff]
  %v2094 = vld [vmem:[%s7 + $0x1e0] sm:$0xff]
  %v2095 = vld [vmem:[%s7 + $0x1e8] sm:$0xff]
  %v2096 = vld [vmem:[%s7 + $0x1f0] sm:$0xff]
  %v2097 = vld [vmem:[%s7 + $0x1f8] sm:$0xff]
  %v2098 = vld [vmem:[%s7 + $0x200] sm:$0xff]
  %v2099 = vld [vmem:[%s7 + $0x208] sm:$0xff]
  %v2100 = vld [vmem:[%s7 + $0x210] sm:$0xff]
  %v2101 = vld [vmem:[%s7 + $0x218] sm:$0xff]
  %v2102 = vld [vmem:[%s7 + $0x220] sm:$0xff]
  %v2103 = vld [vmem:[%s7 + $0x228] sm:$0xff]
  %v2104 = vld [vmem:[%s7 + $0x230] sm:$0xff]
  %v2105 = vld [vmem:[%s7 + $0x238] sm:$0xff]
  %v2106 = vld [vmem:[%s7 + $0x240] sm:$0xff]
  %v2107 = vld [vmem:[%s7 + $0x248] sm:$0xff]
  %v2108 = vld [vmem:[%s7 + $0x250] sm:$0xff]
  %v2109 = vld [vmem:[%s7 + $0x258] sm:$0xff]
  %v2110 = vld [vmem:[%s7 + $0x260] sm:$0xff]
  %v2111 = vld [vmem:[%s7 + $0x268] sm:$0xff]
  %v2112 = vld [vmem:[%s7 + $0x270] sm:$0xff]
  %v2113 = vld [vmem:[%s7 + $0x278] sm:$0xff]
  %v2114 = vld [vmem:[%s7 + $0x280] sm:$0xff]
  %v2115 = vld [vmem:[%s7 + $0x288] sm:$0xff]
  %v2116 = vld [vmem:[%s7 + $0x290] sm:$0xff]
  %v2117 = vld [vmem:[%s7 + $0x298] sm:$0xff]
  %v2118 = vld [vmem:[%s7 + $0x2a0] sm:$0xff]
  %v2119 = vld [vmem:[%s7 + $0x2a8] sm:$0xff]
  %v2120 = vld [vmem:[%s7 + $0x2b0] sm:$0xff]
  %v2121 = vld [vmem:[%s7 + $0x2b8] sm:$0xff]
  %v2122 = vld [vmem:[%s7 + $0x2c0] sm:$0xff]
  %v2123 = vld [vmem:[%s7 + $0x2c8] sm:$0xff]
  %v2124 = vld [vmem:[%s7 + $0x2d0] sm:$0xff]
  %v2125 = vld [vmem:[%s7 + $0x2d8] sm:$0xff]
  %v2126 = vld [vmem:[%s7 + $0x2e0] sm:$0xff]
  %v2127 = vld [vmem:[%s7 + $0x2e8] sm:$0xff]
  %v2128 = vld [vmem:[%s7 + $0x2f0] sm:$0xff]
  %v2129 = vld [vmem:[%s7 + $0x2f8] sm:$0xff]
  %v2130 = vld [vmem:[%s7 + $0x300] sm:$0xff]
  %v2131 = vld [vmem:[%s7 + $0x308] sm:$0xff]
  %v2132 = vld [vmem:[%s7 + $0x310] sm:$0xff]
  %v2133 = vld [vmem:[%s7 + $0x318] sm:$0xff]
  %v2234 = vunpack.c.l.b16 %v2034
  %v2235 = vunpack.c.h.b16 %v2034
  %v2236 = vunpack.c.l.b16 %v2035
  %v2237 = vunpack.c.h.b16 %v2035
  %v2238 = vunpack.c.l.b16 %v2036
  %v2239 = vunpack.c.h.b16 %v2036
  %v2240 = vunpack.c.l.b16 %v2037
  %v2241 = vunpack.c.h.b16 %v2037
  %v2242 = vunpack.c.l.b16 %v2038
  %v2243 = vunpack.c.h.b16 %v2038
  %v2244 = vunpack.c.l.b16 %v2039
  %v2245 = vunpack.c.h.b16 %v2039
  %v2246 = vunpack.c.l.b16 %v2040
  %v2247 = vunpack.c.h.b16 %v2040
  %v2248 = vunpack.c.l.b16 %v2041
  %v2249 = vunpack.c.h.b16 %v2041
  %v2250 = vunpack.c.l.b16 %v2042
  %v2251 = vunpack.c.h.b16 %v2042
  %v2252 = vunpack.c.l.b16 %v2043
  %v2253 = vunpack.c.h.b16 %v2043
  %v2254 = vunpack.c.l.b16 %v2044
  %v2255 = vunpack.c.h.b16 %v2044
  %v2256 = vunpack.c.l.b16 %v2045
  %v2257 = vunpack.c.h.b16 %v2045
  %v2258 = vunpack.c.l.b16 %v2046
  %v2259 = vunpack.c.h.b16 %v2046
  %v2260 = vunpack.c.l.b16 %v2047
  %v2261 = vunpack.c.h.b16 %v2047
  %v2262 = vunpack.c.l.b16 %v2048
  %v2263 = vunpack.c.h.b16 %v2048
  %v2264 = vunpack.c.l.b16 %v2049
  %v2265 = vunpack.c.h.b16 %v2049
  %v2266 = vunpack.c.l.b16 %v2050
  %v2267 = vunpack.c.h.b16 %v2050
  %v2268 = vunpack.c.l.b16 %v2051
  %v2269 = vunpack.c.h.b16 %v2051
  %v2270 = vunpack.c.l.b16 %v2052
  %v2271 = vunpack.c.h.b16 %v2052
  %v2272 = vunpack.c.l.b16 %v2053
  %v2273 = vunpack.c.h.b16 %v2053
  %v2274 = vunpack.c.l.b16 %v2054
  %v2275 = vunpack.c.h.b16 %v2054
  %v2276 = vunpack.c.l.b16 %v2055
  %v2277 = vunpack.c.h.b16 %v2055
  %v2278 = vunpack.c.l.b16 %v2056
  %v2279 = vunpack.c.h.b16 %v2056
  %v2280 = vunpack.c.l.b16 %v2057
  %v2281 = vunpack.c.h.b16 %v2057
  %v2282 = vunpack.c.l.b16 %v2058
  %v2283 = vunpack.c.h.b16 %v2058
  %v2284 = vunpack.c.l.b16 %v2059
  %v2285 = vunpack.c.h.b16 %v2059
  %v2286 = vunpack.c.l.b16 %v2060
  %v2287 = vunpack.c.h.b16 %v2060
  %v2288 = vunpack.c.l.b16 %v2061
  %v2289 = vunpack.c.h.b16 %v2061
  %v2290 = vunpack.c.l.b16 %v2062
  %v2291 = vunpack.c.h.b16 %v2062
  %v2292 = vunpack.c.l.b16 %v2063
  %v2293 = vunpack.c.h.b16 %v2063
  %v2294 = vunpack.c.l.b16 %v2064
  %v2295 = vunpack.c.h.b16 %v2064
  %v2296 = vunpack.c.l.b16 %v2065
  %v2297 = vunpack.c.h.b16 %v2065
  %v2298 = vunpack.c.l.b16 %v2066
  %v2299 = vunpack.c.h.b16 %v2066
  %v2300 = vunpack.c.l.b16 %v2067
  %v2301 = vunpack.c.h.b16 %v2067
  %v2302 = vunpack.c.l.b16 %v2068
  %v2303 = vunpack.c.h.b16 %v2068
  %v2304 = vunpack.c.l.b16 %v2069
  %v2305 = vunpack.c.h.b16 %v2069
  %v2306 = vunpack.c.l.b16 %v2070
  %v2307 = vunpack.c.h.b16 %v2070
  %v2308 = vunpack.c.l.b16 %v2071
  %v2309 = vunpack.c.h.b16 %v2071
  %v2310 = vunpack.c.l.b16 %v2072
  %v2311 = vunpack.c.h.b16 %v2072
  %v2312 = vunpack.c.l.b16 %v2073
  %v2313 = vunpack.c.h.b16 %v2073
  %v2314 = vunpack.c.l.b16 %v2074
  %v2315 = vunpack.c.h.b16 %v2074
  %v2316 = vunpack.c.l.b16 %v2075
  %v2317 = vunpack.c.h.b16 %v2075
  %v2318 = vunpack.c.l.b16 %v2076
  %v2319 = vunpack.c.h.b16 %v2076
  %v2320 = vunpack.c.l.b16 %v2077
  %v2321 = vunpack.c.h.b16 %v2077
  %v2322 = vunpack.c.l.b16 %v2078
  %v2323 = vunpack.c.h.b16 %v2078
  %v2324 = vunpack.c.l.b16 %v2079
  %v2325 = vunpack.c.h.b16 %v2079
  %v2326 = vunpack.c.l.b16 %v2080
  %v2327 = vunpack.c.h.b16 %v2080
  %v2328 = vunpack.c.l.b16 %v2081
  %v2329 = vunpack.c.h.b16 %v2081
  %v2330 = vunpack.c.l.b16 %v2082
  %v2331 = vunpack.c.h.b16 %v2082
  %v2332 = vunpack.c.l.b16 %v2083
  %v2333 = vunpack.c.h.b16 %v2083
  %v2334 = vunpack.c.l.b16 %v2084
  %v2335 = vunpack.c.h.b16 %v2084
  %v2336 = vunpack.c.l.b16 %v2085
  %v2337 = vunpack.c.h.b16 %v2085
  %v2338 = vunpack.c.l.b16 %v2086
  %v2339 = vunpack.c.h.b16 %v2086
  %v2340 = vunpack.c.l.b16 %v2087
  %v2341 = vunpack.c.h.b16 %v2087
  %v2342 = vunpack.c.l.b16 %v2088
  %v2343 = vunpack.c.h.b16 %v2088
  %v2344 = vunpack.c.l.b16 %v2089
  %v2345 = vunpack.c.h.b16 %v2089
  %v2346 = vunpack.c.l.b16 %v2090
  %v2347 = vunpack.c.h.b16 %v2090
  %v2348 = vunpack.c.l.b16 %v2091
  %v2349 = vunpack.c.h.b16 %v2091
  %v2350 = vunpack.c.l.b16 %v2092
  %v2351 = vunpack.c.h.b16 %v2092
  %v2352 = vunpack.c.l.b16 %v2093
  %v2353 = vunpack.c.h.b16 %v2093
  %v2354 = vunpack.c.l.b16 %v2094
  %v2355 = vunpack.c.h.b16 %v2094
  %v2356 = vunpack.c.l.b16 %v2095
  %v2357 = vunpack.c.h.b16 %v2095
  %v2358 = vunpack.c.l.b16 %v2096
  %v2359 = vunpack.c.h.b16 %v2096
  %v2360 = vunpack.c.l.b16 %v2097
  %v2361 = vunpack.c.h.b16 %v2097
  %v2362 = vunpack.c.l.b16 %v2098
  %v2363 = vunpack.c.h.b16 %v2098
  %v2364 = vunpack.c.l.b16 %v2099
  %v2365 = vunpack.c.h.b16 %v2099
  %v2366 = vunpack.c.l.b16 %v2100
  %v2367 = vunpack.c.h.b16 %v2100
  %v2368 = vunpack.c.l.b16 %v2101
  %v2369 = vunpack.c.h.b16 %v2101
  %v2370 = vunpack.c.l.b16 %v2102
  %v2371 = vunpack.c.h.b16 %v2102
  %v2372 = vunpack.c.l.b16 %v2103
  %v2373 = vunpack.c.h.b16 %v2103
  %v2374 = vunpack.c.l.b16 %v2104
  %v2375 = vunpack.c.h.b16 %v2104
  %v2376 = vunpack.c.l.b16 %v2105
  %v2377 = vunpack.c.h.b16 %v2105
  %v2378 = vunpack.c.l.b16 %v2106
  %v2379 = vunpack.c.h.b16 %v2106
  %v2380 = vunpack.c.l.b16 %v2107
  %v2381 = vunpack.c.h.b16 %v2107
  %v2382 = vunpack.c.l.b16 %v2108
  %v2383 = vunpack.c.h.b16 %v2108
  %v2384 = vunpack.c.l.b16 %v2109
  %v2385 = vunpack.c.h.b16 %v2109
  %v2386 = vunpack.c.l.b16 %v2110
  %v2387 = vunpack.c.h.b16 %v2110
  %v2388 = vunpack.c.l.b16 %v2111
  %v2389 = vunpack.c.h.b16 %v2111
  %v2390 = vunpack.c.l.b16 %v2112
  %v2391 = vunpack.c.h.b16 %v2112
  %v2392 = vunpack.c.l.b16 %v2113
  %v2393 = vunpack.c.h.b16 %v2113
  %v2394 = vunpack.c.l.b16 %v2114
  %v2395 = vunpack.c.h.b16 %v2114
  %v2396 = vunpack.c.l.b16 %v2115
  %v2397 = vunpack.c.h.b16 %v2115
  %v2398 = vunpack.c.l.b16 %v2116
  %v2399 = vunpack.c.h.b16 %v2116
  %v2400 = vunpack.c.l.b16 %v2117
  %v2401 = vunpack.c.h.b16 %v2117
  %v2402 = vunpack.c.l.b16 %v2118
  %v2403 = vunpack.c.h.b16 %v2118
  %v2404 = vunpack.c.l.b16 %v2119
  %v2405 = vunpack.c.h.b16 %v2119
  %v2406 = vunpack.c.l.b16 %v2120
  %v2407 = vunpack.c.h.b16 %v2120
  %v2408 = vunpack.c.l.b16 %v2121
  %v2409 = vunpack.c.h.b16 %v2121
  %v2410 = vunpack.c.l.b16 %v2122
  %v2411 = vunpack.c.h.b16 %v2122
  %v2412 = vunpack.c.l.b16 %v2123
  %v2413 = vunpack.c.h.b16 %v2123
  %v2414 = vunpack.c.l.b16 %v2124
  %v2415 = vunpack.c.h.b16 %v2124
  %v2416 = vunpack.c.l.b16 %v2125
  %v2417 = vunpack.c.h.b16 %v2125
  %v2418 = vunpack.c.l.b16 %v2126
  %v2419 = vunpack.c.h.b16 %v2126
  %v2420 = vunpack.c.l.b16 %v2127
  %v2421 = vunpack.c.h.b16 %v2127
  %v2422 = vunpack.c.l.b16 %v2128
  %v2423 = vunpack.c.h.b16 %v2128
  %v2424 = vunpack.c.l.b16 %v2129
  %v2425 = vunpack.c.h.b16 %v2129
  %v2426 = vunpack.c.l.b16 %v2130
  %v2427 = vunpack.c.h.b16 %v2130
  %v2428 = vunpack.c.l.b16 %v2131
  %v2429 = vunpack.c.h.b16 %v2131
  %v2430 = vunpack.c.l.b16 %v2132
  %v2431 = vunpack.c.h.b16 %v2132
  %v2432 = vunpack.c.l.b16 %v2133
  %v2433 = vunpack.c.h.b16 %v2133
  %v2434 = vpack.c.b16 %v2238, %v2234
  %v2435 = vpack.c.b16 %v2239, %v2235
  %v2436 = vpack.c.b16 %v2240, %v2236
  %v2437 = vpack.c.b16 %v2241, %v2237
  %v2438 = vpack.c.b16 %v2246, %v2242
  %v2439 = vpack.c.b16 %v2247, %v2243
  %v2440 = vpack.c.b16 %v2248, %v2244
  %v2441 = vpack.c.b16 %v2249, %v2245
  %v2442 = vpack.c.b16 %v2254, %v2250
  %v2443 = vpack.c.b16 %v2255, %v2251
  %v2444 = vpack.c.b16 %v2256, %v2252
  %v2445 = vpack.c.b16 %v2257, %v2253
  %v2446 = vpack.c.b16 %v2262, %v2258
  %v2447 = vpack.c.b16 %v2263, %v2259
  %v2448 = vpack.c.b16 %v2264, %v2260
  %v2449 = vpack.c.b16 %v2265, %v2261
  %v2450 = vpack.c.b16 %v2270, %v2266
  %v2451 = vpack.c.b16 %v2271, %v2267
  %v2452 = vpack.c.b16 %v2272, %v2268
  %v2453 = vpack.c.b16 %v2273, %v2269
  %v2454 = vpack.c.b16 %v2278, %v2274
  %v2455 = vpack.c.b16 %v2279, %v2275
  %v2456 = vpack.c.b16 %v2280, %v2276
  %v2457 = vpack.c.b16 %v2281, %v2277
  %v2458 = vpack.c.b16 %v2286, %v2282
  %v2459 = vpack.c.b16 %v2287, %v2283
  %v2460 = vpack.c.b16 %v2288, %v2284
  %v2461 = vpack.c.b16 %v2289, %v2285
  %v2462 = vpack.c.b16 %v2294, %v2290
  %v2463 = vpack.c.b16 %v2295, %v2291
  %v2464 = vpack.c.b16 %v2296, %v2292
  %v2465 = vpack.c.b16 %v2297, %v2293
  %v2466 = vpack.c.b16 %v2302, %v2298
  %v2467 = vpack.c.b16 %v2303, %v2299
  %v2468 = vpack.c.b16 %v2304, %v2300
  %v2469 = vpack.c.b16 %v2305, %v2301
  %v2470 = vpack.c.b16 %v2310, %v2306
  %v2471 = vpack.c.b16 %v2311, %v2307
  %v2472 = vpack.c.b16 %v2312, %v2308
  %v2473 = vpack.c.b16 %v2313, %v2309
  %v2474 = vpack.c.b16 %v2318, %v2314
  %v2475 = vpack.c.b16 %v2319, %v2315
  %v2476 = vpack.c.b16 %v2320, %v2316
  %v2477 = vpack.c.b16 %v2321, %v2317
  %v2478 = vpack.c.b16 %v2326, %v2322
  %v2479 = vpack.c.b16 %v2327, %v2323
  %v2480 = vpack.c.b16 %v2328, %v2324
  %v2481 = vpack.c.b16 %v2329, %v2325
  %v2482 = vpack.c.b16 %v2334, %v2330
  %v2483 = vpack.c.b16 %v2335, %v2331
  %v2484 = vpack.c.b16 %v2336, %v2332
  %v2485 = vpack.c.b16 %v2337, %v2333
  %v2486 = vpack.c.b16 %v2342, %v2338
  %v2487 = vpack.c.b16 %v2343, %v2339
  %v2488 = vpack.c.b16 %v2344, %v2340
  %v2489 = vpack.c.b16 %v2345, %v2341
  %v2490 = vpack.c.b16 %v2350, %v2346
  %v2491 = vpack.c.b16 %v2351, %v2347
  %v2492 = vpack.c.b16 %v2352, %v2348
  %v2493 = vpack.c.b16 %v2353, %v2349
  %v2494 = vpack.c.b16 %v2358, %v2354
  %v2495 = vpack.c.b16 %v2359, %v2355
  %v2496 = vpack.c.b16 %v2360, %v2356
  %v2497 = vpack.c.b16 %v2361, %v2357
  %v2498 = vpack.c.b16 %v2366, %v2362
  %v2499 = vpack.c.b16 %v2367, %v2363
  %v2500 = vpack.c.b16 %v2368, %v2364
  %v2501 = vpack.c.b16 %v2369, %v2365
  %v2502 = vpack.c.b16 %v2374, %v2370
  %v2503 = vpack.c.b16 %v2375, %v2371
  %v2504 = vpack.c.b16 %v2376, %v2372
  %v2505 = vpack.c.b16 %v2377, %v2373
  %v2506 = vpack.c.b16 %v2382, %v2378
  %v2507 = vpack.c.b16 %v2383, %v2379
  %v2508 = vpack.c.b16 %v2384, %v2380
  %v2509 = vpack.c.b16 %v2385, %v2381
  %v2510 = vpack.c.b16 %v2390, %v2386
  %v2511 = vpack.c.b16 %v2391, %v2387
  %v2512 = vpack.c.b16 %v2392, %v2388
  %v2513 = vpack.c.b16 %v2393, %v2389
  %v2514 = vpack.c.b16 %v2398, %v2394
  %v2515 = vpack.c.b16 %v2399, %v2395
  %v2516 = vpack.c.b16 %v2400, %v2396
  %v2517 = vpack.c.b16 %v2401, %v2397
  %v2518 = vpack.c.b16 %v2406, %v2402
  %v2519 = vpack.c.b16 %v2407, %v2403
  %v2520 = vpack.c.b16 %v2408, %v2404
  %v2521 = vpack.c.b16 %v2409, %v2405
  %v2522 = vpack.c.b16 %v2414, %v2410
  %v2523 = vpack.c.b16 %v2415, %v2411
  %v2524 = vpack.c.b16 %v2416, %v2412
  %v2525 = vpack.c.b16 %v2417, %v2413
  %v2526 = vpack.c.b16 %v2422, %v2418
  %v2527 = vpack.c.b16 %v2423, %v2419
  %v2528 = vpack.c.b16 %v2424, %v2420
  %v2529 = vpack.c.b16 %v2425, %v2421
  %v2530 = vpack.c.b16 %v2430, %v2426
  %v2531 = vpack.c.b16 %v2431, %v2427
  %v2532 = vpack.c.b16 %v2432, %v2428
  %v2533 = vpack.c.b16 %v2433, %v2429
  %v2635 = vsel %vm1627, %v1002, 0
  %v2638 = vsel %vm1627, %v1010, 0
  %v2641 = vsel %vm1627, %v1018, 0
  %v2644 = vsel %vm1627, %v1026, 0
  %2646 = vmatprep.subr.bf16.mxu0 %v2435
  %2647 = vmatpush1.bf16.msra.mxu0 %v2434
  %2648 = vmatprep.subr.bf16.mxu0 %v2439
  %2649 = vmatpush1.bf16.msra.mxu0 %v2438
  %2650 = vmatprep.subr.bf16.mxu0 %v2443
  %2651 = vmatpush1.bf16.msra.mxu0 %v2442
  %2652 = vmatprep.subr.bf16.mxu0 %v2447
  %2653 = vmatpush1.bf16.msra.mxu0 %v2446
  %2654 = vmatprep.subr.bf16.mxu0 %v2451
  %2655 = vmatpush1.bf16.msra.mxu0 %v2450
  %2656 = vmatprep.subr.bf16.mxu0 %v2455
  %2657 = vmatpush1.bf16.msra.mxu0 %v2454
  %2658 = vmatprep.subr.bf16.mxu0 %v2459
  %2659 = vmatpush1.bf16.msra.mxu0 %v2458
  %2660 = vmatprep.subr.bf16.mxu0 %v2463
  %2661 = vmatpush1.bf16.msra.mxu0 %v2462
  %2662 = vmatprep.subr.bf16.mxu0 %v2467
  %2663 = vmatpush1.bf16.msra.mxu0 %v2466
  %2664 = vmatprep.subr.bf16.mxu0 %v2471
  %2665 = vmatpush1.bf16.msra.mxu0 %v2470
  %2666 = vmatprep.subr.bf16.mxu0 %v2475
  %2667 = vmatpush1.bf16.msra.mxu0 %v2474
  %2668 = vmatprep.subr.bf16.mxu0 %v2479
  %2669 = vmatpush1.bf16.msra.mxu0 %v2478
  %2670 = vmatprep.subr.bf16.mxu0 %v2483
  %2671 = vmatpush1.bf16.msra.mxu0 %v2482
  %2672 = vmatprep.subr.bf16.mxu0 %v2487
  %2673 = vmatpush1.bf16.msra.mxu0 %v2486
  %2674 = vmatprep.subr.bf16.mxu0 %v2491
  %2675 = vmatpush1.bf16.msra.mxu0 %v2490
  %2676 = vmatprep.subr.bf16.mxu0 %v2495
  %2677 = vmatpush1.bf16.msra.mxu0 %v2494
  %2678 = vmatprep.mubr.bf16.mxu0 %v1000
  %2679 = vmatmul.mubr.bf16.gmra.mrb[0].mxu0 %v999
  %v2680 = vpop.f32.mrb[0].mxu0
  %v2681 = vadd.f32 0.0, %v2680
  %v2682 = vpop.f32.mrb[0].mxu0
  %v2683 = vadd.f32 0.0, %v2682
  %v2684 = vpop.f32.mrb[0].mxu0
  %v2685 = vadd.f32 0.0, %v2684
  %v2686 = vpop.f32.mrb[0].mxu0
  %v2687 = vadd.f32 0.0, %v2686
  %2688 = vmatprep.mubr.bf16.mxu0 %v1008
  %2689 = vmatmul.mubr.bf16.gmra.mrb[0].mxu0 %v1007
  %v2690 = vpop.f32.mrb[0].mxu0
  %v2691 = vadd.f32 0.0, %v2690
  %v2692 = vpop.f32.mrb[0].mxu0
  %v2693 = vadd.f32 0.0, %v2692
  %v2694 = vpop.f32.mrb[0].mxu0
  %v2695 = vadd.f32 0.0, %v2694
  %v2696 = vpop.f32.mrb[0].mxu0
  %v2697 = vadd.f32 0.0, %v2696
  %2698 = vmatprep.mubr.bf16.mxu0 %v1016
  %2699 = vmatmul.mubr.bf16.gmra.mrb[0].mxu0 %v1015
  %v2700 = vpop.f32.mrb[0].mxu0
  %v2701 = vadd.f32 0.0, %v2700
  %v2702 = vpop.f32.mrb[0].mxu0
  %v2703 = vadd.f32 0.0, %v2702
  %v2704 = vpop.f32.mrb[0].mxu0
  %v2705 = vadd.f32 0.0, %v2704
  %v2706 = vpop.f32.mrb[0].mxu0
  %v2707 = vadd.f32 0.0, %v2706
  %2708 = vmatprep.mubr.bf16.mxu0 %v1024
  %2709 = vmatmul.mubr.bf16.gmra.mrb[0].mxu0 %v1023
  %v2710 = vpop.f32.mrb[0].mxu0
  %v2711 = vadd.f32 0.0, %v2710
  %v2712 = vpop.f32.mrb[0].mxu0
  %v2713 = vadd.f32 0.0, %v2712
  %v2714 = vpop.f32.mrb[0].mxu0
  %v2715 = vadd.f32 0.0, %v2714
  %v2716 = vpop.f32.mrb[0].mxu0
  %v2717 = vadd.f32 0.0, %v2716
  %2718 = vdwg.mxu0
  %2719 = vmatprep.subr.bf16.mxu0 %v2499
  %2720 = vmatpush1.bf16.msra.mxu0 %v2498
  %2721 = vmatprep.subr.bf16.mxu0 %v2503
  %2722 = vmatpush1.bf16.msra.mxu0 %v2502
  %2723 = vmatprep.subr.bf16.mxu0 %v2507
  %2724 = vmatpush1.bf16.msra.mxu0 %v2506
  %2725 = vmatprep.subr.bf16.mxu0 %v2511
  %2726 = vmatpush1.bf16.msra.mxu0 %v2510
  %2727 = vmatprep.subr.bf16.mxu0 %v2515
  %2728 = vmatpush1.bf16.msra.mxu0 %v2514
  %2729 = vmatprep.subr.bf16.mxu0 %v2519
  %2730 = vmatpush1.bf16.msra.mxu0 %v2518
  %2731 = vmatprep.subr.bf16.mxu0 %v2523
  %2732 = vmatpush1.bf16.msra.mxu0 %v2522
  %2733 = vmatprep.subr.bf16.mxu0 %v2527
  %2734 = vmatpush1.bf16.msra.mxu0 %v2526
  %2735 = vmatprep.subr.bf16.mxu0 %v2531
  %2736 = vmatpush1.bf16.msra.mxu0 %v2530
  %2737 = vmatprep.subr.bf16.mxu0 0
  %2738 = vmatpush1.bf16.msra.mxu0 0
  %2739 = vmatprep.subr.bf16.mxu0 0
  %2740 = vmatpush1.bf16.msra.mxu0 0
  %2741 = vmatprep.subr.bf16.mxu0 0
  %2742 = vmatpush1.bf16.msra.mxu0 0
  %2743 = vmatprep.subr.bf16.mxu0 0
  %2744 = vmatpush1.bf16.msra.mxu0 0
  %2745 = vmatprep.subr.bf16.mxu0 0
  %2746 = vmatpush1.bf16.msra.mxu0 0
  %2747 = vmatprep.subr.bf16.mxu0 0
  %2748 = vmatpush1.bf16.msra.mxu0 0
  %2749 = vmatprep.subr.bf16.mxu0 0
  %2750 = vmatpush1.bf16.msra.mxu0 0
  %2751 = vmatprep.mubr.bf16.mxu0 %v2635
  %2752 = vmatmul.mubr.bf16.gmra.mrb[0].mxu0 %v1001
  %v2753 = vpop.f32.mrb[0].mxu0
  %v2754 = vadd.f32 %v2681, %v2753
  %v2755 = vpop.f32.mrb[0].mxu0
  %v2756 = vadd.f32 %v2683, %v2755
  %v2757 = vpop.f32.mrb[0].mxu0
  %v2758 = vadd.f32 %v2685, %v2757
  %v2759 = vpop.f32.mrb[0].mxu0
  %v2760 = vadd.f32 %v2687, %v2759
  %2761 = vmatprep.mubr.bf16.mxu0 %v2638
  %2762 = vmatmul.mubr.bf16.gmra.mrb[0].mxu0 %v1009
  %v2763 = vpop.f32.mrb[0].mxu0
  %v2764 = vadd.f32 %v2691, %v2763
  %v2765 = vpop.f32.mrb[0].mxu0
  %v2766 = vadd.f32 %v2693, %v2765
  %v2767 = vpop.f32.mrb[0].mxu0
  %v2768 = vadd.f32 %v2695, %v2767
  %v2769 = vpop.f32.mrb[0].mxu0
  %v2770 = vadd.f32 %v2697, %v2769
  %2771 = vmatprep.mubr.bf16.mxu0 %v2641
  %2772 = vmatmul.mubr.bf16.gmra.mrb[0].mxu0 %v1017
  %v2773 = vpop.f32.mrb[0].mxu0
  %v2774 = vadd.f32 %v2701, %v2773
  %v2775 = vpop.f32.mrb[0].mxu0
  %v2776 = vadd.f32 %v2703, %v2775
  %v2777 = vpop.f32.mrb[0].mxu0
  %v2778 = vadd.f32 %v2705, %v2777
  %v2779 = vpop.f32.mrb[0].mxu0
  %v2780 = vadd.f32 %v2707, %v2779
  %2781 = vmatprep.mubr.bf16.mxu0 %v2644
  %2782 = vmatmul.mubr.bf16.gmra.mrb[0].mxu0 %v1025
  %v2783 = vpop.f32.mrb[0].mxu0
  %v2784 = vadd.f32 %v2711, %v2783
  %v2785 = vpop.f32.mrb[0].mxu0
  %v2786 = vadd.f32 %v2713, %v2785
  %v2787 = vpop.f32.mrb[0].mxu0
  %v2788 = vadd.f32 %v2715, %v2787
  %v2789 = vpop.f32.mrb[0].mxu0
  %v2790 = vadd.f32 %v2717, %v2789
  %2791 = vdwg.mxu0
  %2792 = vmatprep.subr.bf16.mxu0 %v2437
  %2793 = vmatpush1.bf16.msra.mxu0 %v2436
  %2794 = vmatprep.subr.bf16.mxu0 %v2441
  %2795 = vmatpush1.bf16.msra.mxu0 %v2440
  %2796 = vmatprep.subr.bf16.mxu0 %v2445
  %2797 = vmatpush1.bf16.msra.mxu0 %v2444
  %2798 = vmatprep.subr.bf16.mxu0 %v2449
  %2799 = vmatpush1.bf16.msra.mxu0 %v2448
  %2800 = vmatprep.subr.bf16.mxu0 %v2453
  %2801 = vmatpush1.bf16.msra.mxu0 %v2452
  %2802 = vmatprep.subr.bf16.mxu0 %v2457
  %2803 = vmatpush1.bf16.msra.mxu0 %v2456
  %2804 = vmatprep.subr.bf16.mxu0 %v2461
  %2805 = vmatpush1.bf16.msra.mxu0 %v2460
  %2806 = vmatprep.subr.bf16.mxu0 %v2465
  %2807 = vmatpush1.bf16.msra.mxu0 %v2464
  %2808 = vmatprep.subr.bf16.mxu0 %v2469
  %2809 = vmatpush1.bf16.msra.mxu0 %v2468
  %2810 = vmatprep.subr.bf16.mxu0 %v2473
  %2811 = vmatpush1.bf16.msra.mxu0 %v2472
  %2812 = vmatprep.subr.bf16.mxu0 %v2477
  %2813 = vmatpush1.bf16.msra.mxu0 %v2476
  %2814 = vmatprep.subr.bf16.mxu0 %v2481
  %2815 = vmatpush1.bf16.msra.mxu0 %v2480
  %2816 = vmatprep.subr.bf16.mxu0 %v2485
  %2817 = vmatpush1.bf16.msra.mxu0 %v2484
  %2818 = vmatprep.subr.bf16.mxu0 %v2489
  %2819 = vmatpush1.bf16.msra.mxu0 %v2488
  %2820 = vmatprep.subr.bf16.mxu0 %v2493
  %2821 = vmatpush1.bf16.msra.mxu0 %v2492
  %2822 = vmatprep.subr.bf16.mxu0 %v2497
  %2823 = vmatpush1.bf16.msra.mxu0 %v2496
  %2824 = vmatprep.mubr.bf16.mxu0 %v1000
  %2825 = vmatmul.mubr.bf16.gmra.mrb[0].mxu0 %v999
  %v2826 = vpop.f32.mrb[0].mxu0
  %v2827 = vadd.f32 0.0, %v2826
  %v2828 = vpop.f32.mrb[0].mxu0
  %v2829 = vadd.f32 0.0, %v2828
  %v2830 = vpop.f32.mrb[0].mxu0
  %v2831 = vadd.f32 0.0, %v2830
  %v2832 = vpop.f32.mrb[0].mxu0
  %v2833 = vadd.f32 0.0, %v2832
  %2834 = vmatprep.mubr.bf16.mxu0 %v1008
  %2835 = vmatmul.mubr.bf16.gmra.mrb[0].mxu0 %v1007
  %v2836 = vpop.f32.mrb[0].mxu0
  %v2837 = vadd.f32 0.0, %v2836
  %v2838 = vpop.f32.mrb[0].mxu0
  %v2839 = vadd.f32 0.0, %v2838
  %v2840 = vpop.f32.mrb[0].mxu0
  %v2841 = vadd.f32 0.0, %v2840
  %v2842 = vpop.f32.mrb[0].mxu0
  %v2843 = vadd.f32 0.0, %v2842
  %2844 = vmatprep.mubr.bf16.mxu0 %v1016
  %2845 = vmatmul.mubr.bf16.gmra.mrb[0].mxu0 %v1015
  %v2846 = vpop.f32.mrb[0].mxu0
  %v2847 = vadd.f32 0.0, %v2846
  %v2848 = vpop.f32.mrb[0].mxu0
  %v2849 = vadd.f32 0.0, %v2848
  %v2850 = vpop.f32.mrb[0].mxu0
  %v2851 = vadd.f32 0.0, %v2850
  %v2852 = vpop.f32.mrb[0].mxu0
  %v2853 = vadd.f32 0.0, %v2852
  %2854 = vmatprep.mubr.bf16.mxu0 %v1024
  %2855 = vmatmul.mubr.bf16.gmra.mrb[0].mxu0 %v1023
  %v2856 = vpop.f32.mrb[0].mxu0
  %v2857 = vadd.f32 0.0, %v2856
  %v2858 = vpop.f32.mrb[0].mxu0
  %v2859 = vadd.f32 0.0, %v2858
  %v2860 = vpop.f32.mrb[0].mxu0
  %v2861 = vadd.f32 0.0, %v2860
  %v2862 = vpop.f32.mrb[0].mxu0
  %v2863 = vadd.f32 0.0, %v2862
  %2864 = vdwg.mxu0
  %2865 = vmatprep.subr.bf16.mxu0 %v2501
  %2866 = vmatpush1.bf16.msra.mxu0 %v2500
  %2867 = vmatprep.subr.bf16.mxu0 %v2505
  %2868 = vmatpush1.bf16.msra.mxu0 %v2504
  %2869 = vmatprep.subr.bf16.mxu0 %v2509
  %2870 = vmatpush1.bf16.msra.mxu0 %v2508
  %2871 = vmatprep.subr.bf16.mxu0 %v2513
  %2872 = vmatpush1.bf16.msra.mxu0 %v2512
  %2873 = vmatprep.subr.bf16.mxu0 %v2517
  %2874 = vmatpush1.bf16.msra.mxu0 %v2516
  %2875 = vmatprep.subr.bf16.mxu0 %v2521
  %2876 = vmatpush1.bf16.msra.mxu0 %v2520
  %2877 = vmatprep.subr.bf16.mxu0 %v2525
  %2878 = vmatpush1.bf16.msra.mxu0 %v2524
  %2879 = vmatprep.subr.bf16.mxu0 %v2529
  %2880 = vmatpush1.bf16.msra.mxu0 %v2528
  %2881 = vmatprep.subr.bf16.mxu0 %v2533
  %2882 = vmatpush1.bf16.msra.mxu0 %v2532
  %2883 = vmatprep.subr.bf16.mxu0 0
  %2884 = vmatpush1.bf16.msra.mxu0 0
  %2885 = vmatprep.subr.bf16.mxu0 0
  %2886 = vmatpush1.bf16.msra.mxu0 0
  %2887 = vmatprep.subr.bf16.mxu0 0
  %2888 = vmatpush1.bf16.msra.mxu0 0
  %2889 = vmatprep.subr.bf16.mxu0 0
  %2890 = vmatpush1.bf16.msra.mxu0 0
  %2891 = vmatprep.subr.bf16.mxu0 0
  %2892 = vmatpush1.bf16.msra.mxu0 0
  %2893 = vmatprep.subr.bf16.mxu0 0
  %2894 = vmatpush1.bf16.msra.mxu0 0
  %2895 = vmatprep.subr.bf16.mxu0 0
  %2896 = vmatpush1.bf16.msra.mxu0 0
  %2897 = vmatprep.mubr.bf16.mxu0 %v2635
  %2898 = vmatmul.mubr.bf16.gmra.mrb[0].mxu0 %v1001
  %v2899 = vpop.f32.mrb[0].mxu0
  %v2900 = vadd.f32 %v2827, %v2899
  %v2901 = vpop.f32.mrb[0].mxu0
  %v2902 = vadd.f32 %v2829, %v2901
  %v2903 = vpop.f32.mrb[0].mxu0
  %v2904 = vadd.f32 %v2831, %v2903
  %v2905 = vpop.f32.mrb[0].mxu0
  %v2906 = vadd.f32 %v2833, %v2905
  %2907 = vmatprep.mubr.bf16.mxu0 %v2638
  %2908 = vmatmul.mubr.bf16.gmra.mrb[0].mxu0 %v1009
  %v2909 = vpop.f32.mrb[0].mxu0
  %v2910 = vadd.f32 %v2837, %v2909
  %v2911 = vpop.f32.mrb[0].mxu0
  %v2912 = vadd.f32 %v2839, %v2911
  %v2913 = vpop.f32.mrb[0].mxu0
  %v2914 = vadd.f32 %v2841, %v2913
  %v2915 = vpop.f32.mrb[0].mxu0
  %v2916 = vadd.f32 %v2843, %v2915
  %2917 = vmatprep.mubr.bf16.mxu0 %v2641
  %2918 = vmatmul.mubr.bf16.gmra.mrb[0].mxu0 %v1017
  %v2919 = vpop.f32.mrb[0].mxu0
  %v2920 = vadd.f32 %v2847, %v2919
  %v2921 = vpop.f32.mrb[0].mxu0
  %v2922 = vadd.f32 %v2849, %v2921
  %v2923 = vpop.f32.mrb[0].mxu0
  %v2924 = vadd.f32 %v2851, %v2923
  %v2925 = vpop.f32.mrb[0].mxu0
  %v2926 = vadd.f32 %v2853, %v2925
  %2927 = vmatprep.mubr.bf16.mxu0 %v2644
  %2928 = vmatmul.mubr.bf16.gmra.mrb[0].mxu0 %v1025
  %v2929 = vpop.f32.mrb[0].mxu0
  %v2930 = vadd.f32 %v2857, %v2929
  %v2931 = vpop.f32.mrb[0].mxu0
  %v2932 = vadd.f32 %v2859, %v2931
  %v2933 = vpop.f32.mrb[0].mxu0
  %v2934 = vadd.f32 %v2861, %v2933
  %v2935 = vpop.f32.mrb[0].mxu0
  %v2936 = vadd.f32 %v2863, %v2935
  %2937 = vdwg.mxu0
  %v2938 = vpack.c.bf16 %v2758, %v2754
  %v2939 = vpack.c.bf16 %v2760, %v2756
  %v2940 = vpack.c.bf16 %v2904, %v2900
  %v2941 = vpack.c.bf16 %v2906, %v2902
  %v2942 = vpack.c.bf16 %v2768, %v2764
  %v2943 = vpack.c.bf16 %v2770, %v2766
  %v2944 = vpack.c.bf16 %v2914, %v2910
  %v2945 = vpack.c.bf16 %v2916, %v2912
  %v2946 = vpack.c.bf16 %v2778, %v2774
  %v2947 = vpack.c.bf16 %v2780, %v2776
  %v2948 = vpack.c.bf16 %v2924, %v2920
  %v2949 = vpack.c.bf16 %v2926, %v2922
  %v2950 = vpack.c.bf16 %v2788, %v2784
  %v2951 = vpack.c.bf16 %v2790, %v2786
  %v2952 = vpack.c.bf16 %v2934, %v2930
  %v2953 = vpack.c.bf16 %v2936, %v2932
  %v2954 = vld [vmem:[%s8] sm:$0xf]
  %v2957 = vunpack.c.l.s4 1966171168
  %v2958 = vunpack.c.0.s8 %v2957
  %v2959 = vlaneseq
  %v2960 = vshrl.u32 %v2959, 7
  %v2961 = vsub.s32 %v2958, %v2960
  %v2962 = vrot.slane %v2954, %v2961
  %v2963 = vcombine.high %v2962, %v2962
  %v2965 = vunpack.c.l.s4 1966171168
  %v2966 = vunpack.c.0.s8 %v2965
  %v2967 = vlaneseq
  %v2968 = vshrl.u32 %v2967, 7
  %v2969 = vsub.s32 %v2966, %v2968
  %v2970 = vrot.slane %v2962, %v2969
  %v2972 = vunpack.c.l.s4 1966171168
  %v2973 = vunpack.c.0.s8 %v2972
  %v2974 = vlaneseq
  %v2975 = vshrl.u32 %v2974, 7
  %v2976 = vsub.s32 %v2973, %v2975
  %v2977 = vrot.slane %v2963, %v2976
  %v2978 = vcombine.high %v2970, %v2970
  %v2979 = vcombine.high %v2977, %v2977
  %v2981 = vpack.i.b16 %v2970, %v2970
  %v2983 = vlaneseq
  %v2984 = vshrl.u32 %v2983, 7
  %v2985 = vsub.s32 0, %v2984
  %v2986 = vrot.slane %v2981, %v2985
  %v2988 = vpack.i.b16 %v2977, %v2977
  %v2990 = vlaneseq
  %v2991 = vshrl.u32 %v2990, 7
  %v2992 = vsub.s32 0, %v2991
  %v2993 = vrot.slane %v2988, %v2992
  %v2995 = vpack.i.b16 %v2978, %v2978
  %v2997 = vlaneseq
  %v2998 = vshrl.u32 %v2997, 7
  %v2999 = vsub.s32 0, %v2998
  %v3000 = vrot.slane %v2995, %v2999
  %v3002 = vpack.i.b16 %v2979, %v2979
  %v3004 = vlaneseq
  %v3005 = vshrl.u32 %v3004, 7
  %v3006 = vsub.s32 0, %v3005
  %v3007 = vrot.slane %v3002, %v3006
  %v3008 = vadd.bf16 %v2938, %v2986
  %v3009 = vadd.bf16 %v2939, %v2993
  %v3010 = vadd.bf16 %v2940, %v3000
  %v3011 = vadd.bf16 %v2941, %v3007
  %v3012 = vadd.bf16 %v2942, %v2986
  %v3013 = vadd.bf16 %v2943, %v2993
  %v3014 = vadd.bf16 %v2944, %v3000
  %v3015 = vadd.bf16 %v2945, %v3007
  %v3016 = vadd.bf16 %v2946, %v2986
  %v3017 = vadd.bf16 %v2947, %v2993
  %v3018 = vadd.bf16 %v2948, %v3000
  %v3019 = vadd.bf16 %v2949, %v3007
  %v3020 = vadd.bf16 %v2950, %v2986
  %v3021 = vadd.bf16 %v2951, %v2993
  %v3022 = vadd.bf16 %v2952, %v3000
  %v3023 = vadd.bf16 %v2953, %v3007
  %v3024 = vtanh.bf16.pop %v3008
  %v3025 = vtanh.bf16.pop %v3009
  %v3026 = vtanh.bf16.pop %v3010
  %v3027 = vtanh.bf16.pop %v3011
  %v3028 = vtanh.bf16.pop %v3012
  %v3029 = vtanh.bf16.pop %v3013
  %v3030 = vtanh.bf16.pop %v3014
  %v3031 = vtanh.bf16.pop %v3015
  %v3032 = vtanh.bf16.pop %v3016
  %v3033 = vtanh.bf16.pop %v3017
  %v3034 = vtanh.bf16.pop %v3018
  %v3035 = vtanh.bf16.pop %v3019
  %v3036 = vtanh.bf16.pop %v3020
  %v3037 = vtanh.bf16.pop %v3021
  %v3038 = vtanh.bf16.pop %v3022
  %v3039 = vtanh.bf16.pop %v3023
  %v3040 = vld [vmem:[%s9] sm:$0xf]
  %v3041 = vld [vmem:[%s9 + $0x4] sm:$0xf]
  %v3042 = vld [vmem:[%s9 + $0x8] sm:$0xf]
  %v3043 = vld [vmem:[%s9 + $0xc] sm:$0xf]
  %v3044 = vld [vmem:[%s9 + $0x10] sm:$0xf]
  %v3045 = vld [vmem:[%s9 + $0x14] sm:$0xf]
  %v3046 = vld [vmem:[%s9 + $0x18] sm:$0xf]
  %v3047 = vld [vmem:[%s9 + $0x1c] sm:$0xf]
  %v3048 = vld [vmem:[%s9 + $0x20] sm:$0xf]
  %v3049 = vld [vmem:[%s9 + $0x24] sm:$0xf]
  %v3050 = vld [vmem:[%s9 + $0x28] sm:$0xf]
  %v3051 = vld [vmem:[%s9 + $0x2c] sm:$0xf]
  %v3052 = vld [vmem:[%s9 + $0x30] sm:$0xf]
  %v3053 = vld [vmem:[%s9 + $0x34] sm:$0xf]
  %v3054 = vld [vmem:[%s9 + $0x38] sm:$0xf]
  %v3055 = vld [vmem:[%s9 + $0x3c] sm:$0xf]
  %v3056 = vld [vmem:[%s9 + $0x40] sm:$0xf]
  %v3057 = vld [vmem:[%s9 + $0x44] sm:$0xf]
  %v3058 = vld [vmem:[%s9 + $0x48] sm:$0xf]
  %v3059 = vld [vmem:[%s9 + $0x4c] sm:$0xf]
  %v3060 = vld [vmem:[%s9 + $0x50] sm:$0xf]
  %v3061 = vld [vmem:[%s9 + $0x54] sm:$0xf]
  %v3062 = vld [vmem:[%s9 + $0x58] sm:$0xf]
  %v3063 = vld [vmem:[%s9 + $0x5c] sm:$0xf]
  %v3064 = vld [vmem:[%s9 + $0x60] sm:$0xf]
  %v3065 = vld [vmem:[%s9 + $0x64] sm:$0xf]
  %v3066 = vld [vmem:[%s9 + $0x68] sm:$0xf]
  %v3067 = vld [vmem:[%s9 + $0x6c] sm:$0xf]
  %v3068 = vld [vmem:[%s9 + $0x70] sm:$0xf]
  %v3069 = vld [vmem:[%s9 + $0x74] sm:$0xf]
  %v3070 = vld [vmem:[%s9 + $0x78] sm:$0xf]
  %v3071 = vld [vmem:[%s9 + $0x7c] sm:$0xf]
  %v3072 = vld [vmem:[%s9 + $0x80] sm:$0xf]
  %v3073 = vld [vmem:[%s9 + $0x84] sm:$0xf]
  %v3074 = vld [vmem:[%s9 + $0x88] sm:$0xf]
  %v3075 = vld [vmem:[%s9 + $0x8c] sm:$0xf]
  %v3076 = vld [vmem:[%s9 + $0x90] sm:$0xf]
  %v3077 = vld [vmem:[%s9 + $0x94] sm:$0xf]
  %v3078 = vld [vmem:[%s9 + $0x98] sm:$0xf]
  %v3079 = vld [vmem:[%s9 + $0x9c] sm:$0xf]
  %v3080 = vld [vmem:[%s9 + $0xa0] sm:$0xf]
  %v3081 = vld [vmem:[%s9 + $0xa4] sm:$0xf]
  %v3082 = vld [vmem:[%s9 + $0xa8] sm:$0xf]
  %v3083 = vld [vmem:[%s9 + $0xac] sm:$0xf]
  %v3084 = vld [vmem:[%s9 + $0xb0] sm:$0xf]
  %v3085 = vld [vmem:[%s9 + $0xb4] sm:$0xf]
  %v3086 = vld [vmem:[%s9 + $0xb8] sm:$0xf]
  %v3087 = vld [vmem:[%s9 + $0xbc] sm:$0xf]
  %v3088 = vld [vmem:[%s9 + $0xc0] sm:$0xf]
  %v3089 = vld [vmem:[%s9 + $0xc4] sm:$0xf]
  %v3090 = vld [vmem:[%s10] sm:$0xf]
  %v3091 = vld [vmem:[%s10 + $0x4] sm:$0xf]
  %v3092 = vld [vmem:[%s10 + $0x8] sm:$0xf]
  %v3093 = vld [vmem:[%s10 + $0xc] sm:$0xf]
  %v3094 = vld [vmem:[%s10 + $0x10] sm:$0xf]
  %v3095 = vld [vmem:[%s10 + $0x14] sm:$0xf]
  %v3096 = vld [vmem:[%s10 + $0x18] sm:$0xf]
  %v3097 = vld [vmem:[%s10 + $0x1c] sm:$0xf]
  %v3098 = vld [vmem:[%s10 + $0x20] sm:$0xf]
  %v3099 = vld [vmem:[%s10 + $0x24] sm:$0xf]
  %v3100 = vld [vmem:[%s10 + $0x28] sm:$0xf]
  %v3101 = vld [vmem:[%s10 + $0x2c] sm:$0xf]
  %v3102 = vld [vmem:[%s10 + $0x30] sm:$0xf]
  %v3103 = vld [vmem:[%s10 + $0x34] sm:$0xf]
  %v3104 = vld [vmem:[%s10 + $0x38] sm:$0xf]
  %v3105 = vld [vmem:[%s10 + $0x3c] sm:$0xf]
  %v3106 = vld [vmem:[%s10 + $0x40] sm:$0xf]
  %v3107 = vld [vmem:[%s10 + $0x44] sm:$0xf]
  %v3108 = vld [vmem:[%s10 + $0x48] sm:$0xf]
  %v3109 = vld [vmem:[%s10 + $0x4c] sm:$0xf]
  %v3110 = vld [vmem:[%s10 + $0x50] sm:$0xf]
  %v3111 = vld [vmem:[%s10 + $0x54] sm:$0xf]
  %v3112 = vld [vmem:[%s10 + $0x58] sm:$0xf]
  %v3113 = vld [vmem:[%s10 + $0x5c] sm:$0xf]
  %v3114 = vld [vmem:[%s10 + $0x60] sm:$0xf]
  %v3115 = vld [vmem:[%s10 + $0x64] sm:$0xf]
  %v3116 = vld [vmem:[%s10 + $0x68] sm:$0xf]
  %v3117 = vld [vmem:[%s10 + $0x6c] sm:$0xf]
  %v3118 = vld [vmem:[%s10 + $0x70] sm:$0xf]
  %v3119 = vld [vmem:[%s10 + $0x74] sm:$0xf]
  %v3120 = vld [vmem:[%s10 + $0x78] sm:$0xf]
  %v3121 = vld [vmem:[%s10 + $0x7c] sm:$0xf]
  %v3122 = vld [vmem:[%s10 + $0x80] sm:$0xf]
  %v3123 = vld [vmem:[%s10 + $0x84] sm:$0xf]
  %v3124 = vld [vmem:[%s10 + $0x88] sm:$0xf]
  %v3125 = vld [vmem:[%s10 + $0x8c] sm:$0xf]
  %v3126 = vld [vmem:[%s10 + $0x90] sm:$0xf]
  %v3127 = vld [vmem:[%s10 + $0x94] sm:$0xf]
  %v3128 = vld [vmem:[%s10 + $0x98] sm:$0xf]
  %v3129 = vld [vmem:[%s10 + $0x9c] sm:$0xf]
  %v3130 = vld [vmem:[%s10 + $0xa0] sm:$0xf]
  %v3131 = vld [vmem:[%s10 + $0xa4] sm:$0xf]
  %v3132 = vld [vmem:[%s10 + $0xa8] sm:$0xf]
  %v3133 = vld [vmem:[%s10 + $0xac] sm:$0xf]
  %v3134 = vld [vmem:[%s10 + $0xb0] sm:$0xf]
  %v3135 = vld [vmem:[%s10 + $0xb4] sm:$0xf]
  %v3136 = vld [vmem:[%s10 + $0xb8] sm:$0xf]
  %v3137 = vld [vmem:[%s10 + $0xbc] sm:$0xf]
  %v3138 = vld [vmem:[%s10 + $0xc0] sm:$0xf]
  %v3139 = vld [vmem:[%s10 + $0xc4] sm:$0xf]
  %v3190 = vunpack.c.l.b16 %v3090
  %v3191 = vunpack.c.l.b16 %v3091
  %v3192 = vunpack.c.l.b16 %v3092
  %v3193 = vunpack.c.l.b16 %v3093
  %v3194 = vunpack.c.l.b16 %v3094
  %v3195 = vunpack.c.l.b16 %v3095
  %v3196 = vunpack.c.l.b16 %v3096
  %v3197 = vunpack.c.l.b16 %v3097
  %v3198 = vunpack.c.l.b16 %v3098
  %v3199 = vunpack.c.l.b16 %v3099
  %v3200 = vunpack.c.l.b16 %v3100
  %v3201 = vunpack.c.l.b16 %v3101
  %v3202 = vunpack.c.l.b16 %v3102
  %v3203 = vunpack.c.l.b16 %v3103
  %v3204 = vunpack.c.l.b16 %v3104
  %v3205 = vunpack.c.l.b16 %v3105
  %v3206 = vunpack.c.l.b16 %v3106
  %v3207 = vunpack.c.l.b16 %v3107
  %v3208 = vunpack.c.l.b16 %v3108
  %v3209 = vunpack.c.l.b16 %v3109
  %v3210 = vunpack.c.l.b16 %v3110
  %v3211 = vunpack.c.l.b16 %v3111
  %v3212 = vunpack.c.l.b16 %v3112
  %v3213 = vunpack.c.l.b16 %v3113
  %v3214 = vunpack.c.l.b16 %v3114
  %v3215 = vunpack.c.l.b16 %v3115
  %v3216 = vunpack.c.l.b16 %v3116
  %v3217 = vunpack.c.l.b16 %v3117
  %v3218 = vunpack.c.l.b16 %v3118
  %v3219 = vunpack.c.l.b16 %v3119
  %v3220 = vunpack.c.l.b16 %v3120
  %v3221 = vunpack.c.l.b16 %v3121
  %v3222 = vunpack.c.l.b16 %v3122
  %v3223 = vunpack.c.l.b16 %v3123
  %v3224 = vunpack.c.l.b16 %v3124
  %v3225 = vunpack.c.l.b16 %v3125
  %v3226 = vunpack.c.l.b16 %v3126
  %v3227 = vunpack.c.l.b16 %v3127
  %v3228 = vunpack.c.l.b16 %v3128
  %v3229 = vunpack.c.l.b16 %v3129
  %v3230 = vunpack.c.l.b16 %v3130
  %v3231 = vunpack.c.l.b16 %v3131
  %v3232 = vunpack.c.l.b16 %v3132
  %v3233 = vunpack.c.l.b16 %v3133
  %v3234 = vunpack.c.l.b16 %v3134
  %v3235 = vunpack.c.l.b16 %v3135
  %v3236 = vunpack.c.l.b16 %v3136
  %v3237 = vunpack.c.l.b16 %v3137
  %v3238 = vunpack.c.l.b16 %v3138
  %v3239 = vunpack.c.l.b16 %v3139
  %v3240 = vpack.c.b16 %v3191, %v3190
  %v3241 = vpack.c.b16 %v3193, %v3192
  %v3242 = vpack.c.b16 %v3195, %v3194
  %v3243 = vpack.c.b16 %v3197, %v3196
  %v3244 = vpack.c.b16 %v3199, %v3198
  %v3245 = vpack.c.b16 %v3201, %v3200
  %v3246 = vpack.c.b16 %v3203, %v3202
  %v3247 = vpack.c.b16 %v3205, %v3204
  %v3248 = vpack.c.b16 %v3207, %v3206
  %v3249 = vpack.c.b16 %v3209, %v3208
  %v3250 = vpack.c.b16 %v3211, %v3210
  %v3251 = vpack.c.b16 %v3213, %v3212
  %v3252 = vpack.c.b16 %v3215, %v3214
  %v3253 = vpack.c.b16 %v3217, %v3216
  %v3254 = vpack.c.b16 %v3219, %v3218
  %v3255 = vpack.c.b16 %v3221, %v3220
  %v3256 = vpack.c.b16 %v3223, %v3222
  %v3257 = vpack.c.b16 %v3225, %v3224
  %v3258 = vpack.c.b16 %v3227, %v3226
  %v3259 = vpack.c.b16 %v3229, %v3228
  %v3260 = vpack.c.b16 %v3231, %v3230
  %v3261 = vpack.c.b16 %v3233, %v3232
  %v3262 = vpack.c.b16 %v3235, %v3234
  %v3263 = vpack.c.b16 %v3237, %v3236
  %v3264 = vpack.c.b16 %v3239, %v3238
  %v3291 = vsel %vm1627, %v3027, 0
  %v3294 = vsel %vm1627, %v3031, 0
  %v3297 = vsel %vm1627, %v3035, 0
  %v3300 = vsel %vm1627, %v3039, 0
  %3302 = vmatprep.subr.bf16.mxu0 0
  %3303 = vmatpush1.bf16.msra.mxu0 %v3240
  %3304 = vmatprep.subr.bf16.mxu0 0
  %3305 = vmatpush1.bf16.msra.mxu0 %v3241
  %3306 = vmatprep.subr.bf16.mxu0 0
  %3307 = vmatpush1.bf16.msra.mxu0 %v3242
  %3308 = vmatprep.subr.bf16.mxu0 0
  %3309 = vmatpush1.bf16.msra.mxu0 %v3243
  %3310 = vmatprep.subr.bf16.mxu0 0
  %3311 = vmatpush1.bf16.msra.mxu0 %v3244
  %3312 = vmatprep.subr.bf16.mxu0 0
  %3313 = vmatpush1.bf16.msra.mxu0 %v3245
  %3314 = vmatprep.subr.bf16.mxu0 0
  %3315 = vmatpush1.bf16.msra.mxu0 %v3246
  %3316 = vmatprep.subr.bf16.mxu0 0
  %3317 = vmatpush1.bf16.msra.mxu0 %v3247
  %3318 = vmatprep.subr.bf16.mxu0 0
  %3319 = vmatpush1.bf16.msra.mxu0 %v3248
  %3320 = vmatprep.subr.bf16.mxu0 0
  %3321 = vmatpush1.bf16.msra.mxu0 %v3249
  %3322 = vmatprep.subr.bf16.mxu0 0
  %3323 = vmatpush1.bf16.msra.mxu0 %v3250
  %3324 = vmatprep.subr.bf16.mxu0 0
  %3325 = vmatpush1.bf16.msra.mxu0 %v3251
  %3326 = vmatprep.subr.bf16.mxu0 0
  %3327 = vmatpush1.bf16.msra.mxu0 %v3252
  %3328 = vmatprep.subr.bf16.mxu0 0
  %3329 = vmatpush1.bf16.msra.mxu0 %v3253
  %3330 = vmatprep.subr.bf16.mxu0 0
  %3331 = vmatpush1.bf16.msra.mxu0 %v3254
  %3332 = vmatprep.subr.bf16.mxu0 0
  %3333 = vmatpush1.bf16.msra.mxu0 %v3255
  %3334 = vmatprep.mubr.bf16.mxu0 %v3025
  %3335 = vmatmul.mubr.bf16.gmra.mrb[0].mxu0 %v3024
  %v3336 = vpop.f32.mrb[0].mxu0
  %v3337 = vadd.f32 0.0, %v3336
  %v3338 = vpop.f32.mrb[0].mxu0
  %v3339 = vpop.f32.mrb[0].mxu0
  %v3340 = vadd.f32 0.0, %v3339
  %v3341 = vpop.f32.mrb[0].mxu0
  %3342 = vmatprep.mubr.bf16.mxu0 %v3029
  %3343 = vmatmul.mubr.bf16.gmra.mrb[0].mxu0 %v3028
  %v3344 = vpop.f32.mrb[0].mxu0
  %v3345 = vadd.f32 0.0, %v3344
  %v3346 = vpop.f32.mrb[0].mxu0
  %v3347 = vpop.f32.mrb[0].mxu0
  %v3348 = vadd.f32 0.0, %v3347
  %v3349 = vpop.f32.mrb[0].mxu0
  %3350 = vmatprep.mubr.bf16.mxu0 %v3033
  %3351 = vmatmul.mubr.bf16.gmra.mrb[0].mxu0 %v3032
  %v3352 = vpop.f32.mrb[0].mxu0
  %v3353 = vadd.f32 0.0, %v3352
  %v3354 = vpop.f32.mrb[0].mxu0
  %v3355 = vpop.f32.mrb[0].mxu0
  %v3356 = vadd.f32 0.0, %v3355
  %v3357 = vpop.f32.mrb[0].mxu0
  %3358 = vmatprep.mubr.bf16.mxu0 %v3037
  %3359 = vmatmul.mubr.bf16.gmra.mrb[0].mxu0 %v3036
  %v3360 = vpop.f32.mrb[0].mxu0
  %v3361 = vadd.f32 0.0, %v3360
  %v3362 = vpop.f32.mrb[0].mxu0
  %v3363 = vpop.f32.mrb[0].mxu0
  %v3364 = vadd.f32 0.0, %v3363
  %v3365 = vpop.f32.mrb[0].mxu0
  %3366 = vdwg.mxu0
  %3367 = vmatprep.subr.bf16.mxu0 0
  %3368 = vmatpush1.bf16.msra.mxu0 %v3256
  %3369 = vmatprep.subr.bf16.mxu0 0
  %3370 = vmatpush1.bf16.msra.mxu0 %v3257
  %3371 = vmatprep.subr.bf16.mxu0 0
  %3372 = vmatpush1.bf16.msra.mxu0 %v3258
  %3373 = vmatprep.subr.bf16.mxu0 0
  %3374 = vmatpush1.bf16.msra.mxu0 %v3259
  %3375 = vmatprep.subr.bf16.mxu0 0
  %3376 = vmatpush1.bf16.msra.mxu0 %v3260
  %3377 = vmatprep.subr.bf16.mxu0 0
  %3378 = vmatpush1.bf16.msra.mxu0 %v3261
  %3379 = vmatprep.subr.bf16.mxu0 0
  %3380 = vmatpush1.bf16.msra.mxu0 %v3262
  %3381 = vmatprep.subr.bf16.mxu0 0
  %3382 = vmatpush1.bf16.msra.mxu0 %v3263
  %3383 = vmatprep.subr.bf16.mxu0 0
  %3384 = vmatpush1.bf16.msra.mxu0 %v3264
  %3385 = vmatprep.subr.bf16.mxu0 0
  %3386 = vmatpush1.bf16.msra.mxu0 0
  %3387 = vmatprep.subr.bf16.mxu0 0
  %3388 = vmatpush1.bf16.msra.mxu0 0
  %3389 = vmatprep.subr.bf16.mxu0 0
  %3390 = vmatpush1.bf16.msra.mxu0 0
  %3391 = vmatprep.subr.bf16.mxu0 0
  %3392 = vmatpush1.bf16.msra.mxu0 0
  %3393 = vmatprep.subr.bf16.mxu0 0
  %3394 = vmatpush1.bf16.msra.mxu0 0
  %3395 = vmatprep.subr.bf16.mxu0 0
  %3396 = vmatpush1.bf16.msra.mxu0 0
  %3397 = vmatprep.subr.bf16.mxu0 0
  %3398 = vmatpush1.bf16.msra.mxu0 0
  %3399 = vmatprep.mubr.bf16.mxu0 %v3291
  %3400 = vmatmul.mubr.bf16.gmra.mrb[0].mxu0 %v3026
  %v3401 = vpop.f32.mrb[0].mxu0
  %v3402 = vadd.f32 %v3337, %v3401
  %v3403 = vpop.f32.mrb[0].mxu0
  %v3404 = vpop.f32.mrb[0].mxu0
  %v3405 = vadd.f32 %v3340, %v3404
  %v3406 = vpop.f32.mrb[0].mxu0
  %3407 = vmatprep.mubr.bf16.mxu0 %v3294
  %3408 = vmatmul.mubr.bf16.gmra.mrb[0].mxu0 %v3030
  %v3409 = vpop.f32.mrb[0].mxu0
  %v3410 = vadd.f32 %v3345, %v3409
  %v3411 = vpop.f32.mrb[0].mxu0
  %v3412 = vpop.f32.mrb[0].mxu0
  %v3413 = vadd.f32 %v3348, %v3412
  %v3414 = vpop.f32.mrb[0].mxu0
  %3415 = vmatprep.mubr.bf16.mxu0 %v3297
  %3416 = vmatmul.mubr.bf16.gmra.mrb[0].mxu0 %v3034
  %v3417 = vpop.f32.mrb[0].mxu0
  %v3418 = vadd.f32 %v3353, %v3417
  %v3419 = vpop.f32.mrb[0].mxu0
  %v3420 = vpop.f32.mrb[0].mxu0
  %v3421 = vadd.f32 %v3356, %v3420
  %v3422 = vpop.f32.mrb[0].mxu0
  %3423 = vmatprep.mubr.bf16.mxu0 %v3300
  %3424 = vmatmul.mubr.bf16.gmra.mrb[0].mxu0 %v3038
  %v3425 = vpop.f32.mrb[0].mxu0
  %v3426 = vadd.f32 %v3361, %v3425
  %v3427 = vpop.f32.mrb[0].mxu0
  %v3428 = vpop.f32.mrb[0].mxu0
  %v3429 = vadd.f32 %v3364, %v3428
  %v3430 = vpop.f32.mrb[0].mxu0
  %3431 = vdwg.mxu0
  %v3482 = vunpack.c.l.b16 %v3040
  %v3483 = vunpack.c.l.b16 %v3041
  %v3484 = vunpack.c.l.b16 %v3042
  %v3485 = vunpack.c.l.b16 %v3043
  %v3486 = vunpack.c.l.b16 %v3044
  %v3487 = vunpack.c.l.b16 %v3045
  %v3488 = vunpack.c.l.b16 %v3046
  %v3489 = vunpack.c.l.b16 %v3047
  %v3490 = vunpack.c.l.b16 %v3048
  %v3491 = vunpack.c.l.b16 %v3049
  %v3492 = vunpack.c.l.b16 %v3050
  %v3493 = vunpack.c.l.b16 %v3051
  %v3494 = vunpack.c.l.b16 %v3052
  %v3495 = vunpack.c.l.b16 %v3053
  %v3496 = vunpack.c.l.b16 %v3054
  %v3497 = vunpack.c.l.b16 %v3055
  %v3498 = vunpack.c.l.b16 %v3056
  %v3499 = vunpack.c.l.b16 %v3057
  %v3500 = vunpack.c.l.b16 %v3058
  %v3501 = vunpack.c.l.b16 %v3059
  %v3502 = vunpack.c.l.b16 %v3060
  %v3503 = vunpack.c.l.b16 %v3061
  %v3504 = vunpack.c.l.b16 %v3062
  %v3505 = vunpack.c.l.b16 %v3063
  %v3506 = vunpack.c.l.b16 %v3064
  %v3507 = vunpack.c.l.b16 %v3065
  %v3508 = vunpack.c.l.b16 %v3066
  %v3509 = vunpack.c.l.b16 %v3067
  %v3510 = vunpack.c.l.b16 %v3068
  %v3511 = vunpack.c.l.b16 %v3069
  %v3512 = vunpack.c.l.b16 %v3070
  %v3513 = vunpack.c.l.b16 %v3071
  %v3514 = vunpack.c.l.b16 %v3072
  %v3515 = vunpack.c.l.b16 %v3073
  %v3516 = vunpack.c.l.b16 %v3074
  %v3517 = vunpack.c.l.b16 %v3075
  %v3518 = vunpack.c.l.b16 %v3076
  %v3519 = vunpack.c.l.b16 %v3077
  %v3520 = vunpack.c.l.b16 %v3078
  %v3521 = vunpack.c.l.b16 %v3079
  %v3522 = vunpack.c.l.b16 %v3080
  %v3523 = vunpack.c.l.b16 %v3081
  %v3524 = vunpack.c.l.b16 %v3082
  %v3525 = vunpack.c.l.b16 %v3083
  %v3526 = vunpack.c.l.b16 %v3084
  %v3527 = vunpack.c.l.b16 %v3085
  %v3528 = vunpack.c.l.b16 %v3086
  %v3529 = vunpack.c.l.b16 %v3087
  %v3530 = vunpack.c.l.b16 %v3088
  %v3531 = vunpack.c.l.b16 %v3089
  %v3532 = vpack.c.b16 %v3483, %v3482
  %v3533 = vpack.c.b16 %v3485, %v3484
  %v3534 = vpack.c.b16 %v3487, %v3486
  %v3535 = vpack.c.b16 %v3489, %v3488
  %v3536 = vpack.c.b16 %v3491, %v3490
  %v3537 = vpack.c.b16 %v3493, %v3492
  %v3538 = vpack.c.b16 %v3495, %v3494
  %v3539 = vpack.c.b16 %v3497, %v3496
  %v3540 = vpack.c.b16 %v3499, %v3498
  %v3541 = vpack.c.b16 %v3501, %v3500
  %v3542 = vpack.c.b16 %v3503, %v3502
  %v3543 = vpack.c.b16 %v3505, %v3504
  %v3544 = vpack.c.b16 %v3507, %v3506
  %v3545 = vpack.c.b16 %v3509, %v3508
  %v3546 = vpack.c.b16 %v3511, %v3510
  %v3547 = vpack.c.b16 %v3513, %v3512
  %v3548 = vpack.c.b16 %v3515, %v3514
  %v3549 = vpack.c.b16 %v3517, %v3516
  %v3550 = vpack.c.b16 %v3519, %v3518
  %v3551 = vpack.c.b16 %v3521, %v3520
  %v3552 = vpack.c.b16 %v3523, %v3522
  %v3553 = vpack.c.b16 %v3525, %v3524
  %v3554 = vpack.c.b16 %v3527, %v3526
  %v3555 = vpack.c.b16 %v3529, %v3528
  %v3556 = vpack.c.b16 %v3531, %v3530
  %v3583 = vsel %vm1627, %v2021, 0
  %v3586 = vsel %vm1627, %v2025, 0
  %v3589 = vsel %vm1627, %v2029, 0
  %v3592 = vsel %vm1627, %v2033, 0
  %3594 = vmatprep.subr.bf16.mxu0 0
  %3595 = vmatpush1.bf16.msra.mxu0 %v3532
  %3596 = vmatprep.subr.bf16.mxu0 0
  %3597 = vmatpush1.bf16.msra.mxu0 %v3533
  %3598 = vmatprep.subr.bf16.mxu0 0
  %3599 = vmatpush1.bf16.msra.mxu0 %v3534
  %3600 = vmatprep.subr.bf16.mxu0 0
  %3601 = vmatpush1.bf16.msra.mxu0 %v3535
  %3602 = vmatprep.subr.bf16.mxu0 0
  %3603 = vmatpush1.bf16.msra.mxu0 %v3536
  %3604 = vmatprep.subr.bf16.mxu0 0
  %3605 = vmatpush1.bf16.msra.mxu0 %v3537
  %3606 = vmatprep.subr.bf16.mxu0 0
  %3607 = vmatpush1.bf16.msra.mxu0 %v3538
  %3608 = vmatprep.subr.bf16.mxu0 0
  %3609 = vmatpush1.bf16.msra.mxu0 %v3539
  %3610 = vmatprep.subr.bf16.mxu0 0
  %3611 = vmatpush1.bf16.msra.mxu0 %v3540
  %3612 = vmatprep.subr.bf16.mxu0 0
  %3613 = vmatpush1.bf16.msra.mxu0 %v3541
  %3614 = vmatprep.subr.bf16.mxu0 0
  %3615 = vmatpush1.bf16.msra.mxu0 %v3542
  %3616 = vmatprep.subr.bf16.mxu0 0
  %3617 = vmatpush1.bf16.msra.mxu0 %v3543
  %3618 = vmatprep.subr.bf16.mxu0 0
  %3619 = vmatpush1.bf16.msra.mxu0 %v3544
  %3620 = vmatprep.subr.bf16.mxu0 0
  %3621 = vmatpush1.bf16.msra.mxu0 %v3545
  %3622 = vmatprep.subr.bf16.mxu0 0
  %3623 = vmatpush1.bf16.msra.mxu0 %v3546
  %3624 = vmatprep.subr.bf16.mxu0 0
  %3625 = vmatpush1.bf16.msra.mxu0 %v3547
  %3626 = vmatprep.mubr.bf16.mxu0 %v2019
  %3627 = vmatmul.mubr.bf16.gmra.mrb[0].mxu0 %v2018
  %v3628 = vpop.f32.mrb[0].mxu0
  %v3629 = vadd.f32 %v3402, %v3628
  %v3630 = vpop.f32.mrb[0].mxu0
  %v3631 = vpop.f32.mrb[0].mxu0
  %v3632 = vadd.f32 %v3405, %v3631
  %v3633 = vpop.f32.mrb[0].mxu0
  %3634 = vmatprep.mubr.bf16.mxu0 %v2023
  %3635 = vmatmul.mubr.bf16.gmra.mrb[0].mxu0 %v2022
  %v3636 = vpop.f32.mrb[0].mxu0
  %v3637 = vadd.f32 %v3410, %v3636
  %v3638 = vpop.f32.mrb[0].mxu0
  %v3639 = vpop.f32.mrb[0].mxu0
  %v3640 = vadd.f32 %v3413, %v3639
  %v3641 = vpop.f32.mrb[0].mxu0
  %3642 = vmatprep.mubr.bf16.mxu0 %v2027
  %3643 = vmatmul.mubr.bf16.gmra.mrb[0].mxu0 %v2026
  %v3644 = vpop.f32.mrb[0].mxu0
  %v3645 = vadd.f32 %v3418, %v3644
  %v3646 = vpop.f32.mrb[0].mxu0
  %v3647 = vpop.f32.mrb[0].mxu0
  %v3648 = vadd.f32 %v3421, %v3647
  %v3649 = vpop.f32.mrb[0].mxu0
  %3650 = vmatprep.mubr.bf16.mxu0 %v2031
  %3651 = vmatmul.mubr.bf16.gmra.mrb[0].mxu0 %v2030
  %v3652 = vpop.f32.mrb[0].mxu0
  %v3653 = vadd.f32 %v3426, %v3652
  %v3654 = vpop.f32.mrb[0].mxu0
  %v3655 = vpop.f32.mrb[0].mxu0
  %v3656 = vadd.f32 %v3429, %v3655
  %v3657 = vpop.f32.mrb[0].mxu0
  %3658 = vdwg.mxu0
  %3659 = vmatprep.subr.bf16.mxu0 0
  %3660 = vmatpush1.bf16.msra.mxu0 %v3548
  %3661 = vmatprep.subr.bf16.mxu0 0
  %3662 = vmatpush1.bf16.msra.mxu0 %v3549
  %3663 = vmatprep.subr.bf16.mxu0 0
  %3664 = vmatpush1.bf16.msra.mxu0 %v3550
  %3665 = vmatprep.subr.bf16.mxu0 0
  %3666 = vmatpush1.bf16.msra.mxu0 %v3551
  %3667 = vmatprep.subr.bf16.mxu0 0
  %3668 = vmatpush1.bf16.msra.mxu0 %v3552
  %3669 = vmatprep.subr.bf16.mxu0 0
  %3670 = vmatpush1.bf16.msra.mxu0 %v3553
  %3671 = vmatprep.subr.bf16.mxu0 0
  %3672 = vmatpush1.bf16.msra.mxu0 %v3554
  %3673 = vmatprep.subr.bf16.mxu0 0
  %3674 = vmatpush1.bf16.msra.mxu0 %v3555
  %3675 = vmatprep.subr.bf16.mxu0 0
  %3676 = vmatpush1.bf16.msra.mxu0 %v3556
  %3677 = vmatprep.subr.bf16.mxu0 0
  %3678 = vmatpush1.bf16.msra.mxu0 0
  %3679 = vmatprep.subr.bf16.mxu0 0
  %3680 = vmatpush1.bf16.msra.mxu0 0
  %3681 = vmatprep.subr.bf16.mxu0 0
  %3682 = vmatpush1.bf16.msra.mxu0 0
  %3683 = vmatprep.subr.bf16.mxu0 0
  %3684 = vmatpush1.bf16.msra.mxu0 0
  %3685 = vmatprep.subr.bf16.mxu0 0
  %3686 = vmatpush1.bf16.msra.mxu0 0
  %3687 = vmatprep.subr.bf16.mxu0 0
  %3688 = vmatpush1.bf16.msra.mxu0 0
  %3689 = vmatprep.subr.bf16.mxu0 0
  %3690 = vmatpush1.bf16.msra.mxu0 0
  %3691 = vmatprep.mubr.bf16.mxu0 %v3583
  %3692 = vmatmul.mubr.bf16.gmra.mrb[0].mxu0 %v2020
  %v3693 = vpop.f32.mrb[0].mxu0
  %v3694 = vadd.f32 %v3629, %v3693
  %v3695 = vpop.f32.mrb[0].mxu0
  %v3696 = vpop.f32.mrb[0].mxu0
  %v3697 = vadd.f32 %v3632, %v3696
  %v3698 = vpop.f32.mrb[0].mxu0
  %3699 = vmatprep.mubr.bf16.mxu0 %v3586
  %3700 = vmatmul.mubr.bf16.gmra.mrb[0].mxu0 %v2024
  %v3701 = vpop.f32.mrb[0].mxu0
  %v3702 = vadd.f32 %v3637, %v3701
  %v3703 = vpop.f32.mrb[0].mxu0
  %v3704 = vpop.f32.mrb[0].mxu0
  %v3705 = vadd.f32 %v3640, %v3704
  %v3706 = vpop.f32.mrb[0].mxu0
  %3707 = vmatprep.mubr.bf16.mxu0 %v3589
  %3708 = vmatmul.mubr.bf16.gmra.mrb[0].mxu0 %v2028
  %v3709 = vpop.f32.mrb[0].mxu0
  %v3710 = vadd.f32 %v3645, %v3709
  %v3711 = vpop.f32.mrb[0].mxu0
  %v3712 = vpop.f32.mrb[0].mxu0
  %v3713 = vadd.f32 %v3648, %v3712
  %v3714 = vpop.f32.mrb[0].mxu0
  %3715 = vmatprep.mubr.bf16.mxu0 %v3592
  %3716 = vmatmul.mubr.bf16.gmra.mrb[0].mxu0 %v2032
  %v3717 = vpop.f32.mrb[0].mxu0
  %v3718 = vadd.f32 %v3653, %v3717
  %v3719 = vpop.f32.mrb[0].mxu0
  %v3720 = vpop.f32.mrb[0].mxu0
  %v3721 = vadd.f32 %v3656, %v3720
  %v3722 = vpop.f32.mrb[0].mxu0
  %3723 = vdwg.mxu0
  %v3724 = vld [vmem:[%s11] sm:$0x1]
  %v3726 = vlaneseq
  %v3727 = vshrl.u32 %v3726, 7
  %v3728 = vsub.s32 0, %v3727
  %v3729 = vrot.slane %v3724, %v3728
  %v3731 = vadd.f32 %v3694, %v3729
  %v3732 = vadd.f32 %v3697, %v3729
  %v3733 = vadd.f32 %v3702, %v3729
  %v3734 = vadd.f32 %v3705, %v3729
  %v3735 = vadd.f32 %v3710, %v3729
  %v3736 = vadd.f32 %v3713, %v3729
  %v3737 = vadd.f32 %v3718, %v3729
  %v3738 = vadd.f32 %v3721, %v3729
  %v3739 = vpack.c.bf16 %v3732, %v3731
  %v3740 = vpack.c.bf16 %v3734, %v3733
  %v3741 = vpack.c.bf16 %v3736, %v3735
  %v3742 = vpack.c.bf16 %v3738, %v3737
  %v3747 = vunpack.c.l.b16 %v3739
  %v3748 = vunpack.c.h.b16 %v3739
  %v3749 = vunpack.c.l.b16 %v3740
  %v3750 = vunpack.c.h.b16 %v3740
  %v3751 = vunpack.c.l.b16 %v3741
  %v3752 = vunpack.c.h.b16 %v3741
  %v3753 = vunpack.c.l.b16 %v3742
  %v3754 = vunpack.c.h.b16 %v3742
  %v3755 = vpack.c.b16 %v3747, %v3747
  %v3756 = vpack.c.b16 %v3748, %v3748
  %v3757 = vpack.c.b16 %v3749, %v3749
  %v3758 = vpack.c.b16 %v3750, %v3750
  %v3759 = vpack.c.b16 %v3751, %v3751
  %v3760 = vpack.c.b16 %v3752, %v3752
  %v3761 = vpack.c.b16 %v3753, %v3753
  %v3762 = vpack.c.b16 %v3754, %v3754
  %3771 = vst [vmem:[%s12] sm:$0xf] %v3755
  %3772 = vst [vmem:[%s12 + $0x4] sm:$0xf] %v3756
  %3773 = vst [vmem:[%s12 + $0x8] sm:$0xf] %v3757
  %3774 = vst [vmem:[%s12 + $0xc] sm:$0xf] %v3758
  %3775 = vst [vmem:[%s12 + $0x10] sm:$0xf] %v3759
  %3776 = vst [vmem:[%s12 + $0x14] sm:$0xf] %v3760
  %3777 = vst [vmem:[%s12 + $0x18] sm:$0xf] %v3761
  %3778 = vst [vmem:[%s12 + $0x1c] sm:$0xf] %v3762
  // Predicated region
  $region50: #{critic_forward.1} parent=0 // pred_check
    _
  $region51: #{critic_forward.1} parent=0 // pred_check_branch
    %3780 = sbr.rel (0) target = $region53
  $region52: #{critic_forward.1} parent=0 // pred_region
    _
  $region53: #{critic_forward.1} parent=0 // pred_fallthru
    _
  // Predicated region
  $region54: #{critic_forward.1} parent=0 // pred_check
    _
  $region55: #{critic_forward.1} parent=0 // pred_check_branch
    %3782 = sbr.rel (0) target = $region57
  $region56: #{critic_forward.1} parent=0 // pred_region
    _
  $region57: #{critic_forward.1} parent=0 // pred_fallthru
    _

</llo_original>
